<compile_context>
chip_gen: v6e
topology: v6e:2x2x1
jax: 0.10.0
libtpu: 0.0.40
codegen_flags: <defaults>
</compile_context>

<pallas_src>
import functools

import numpy as np

import jax
import jax.numpy as jnp
from jax.experimental import pallas as pl
from jax.experimental.pallas import tpu as pltpu


def _round_up(x, m):
    return ((x + m - 1) // m) * m


def _choose_tiles(N, tm_cap=1024, tk_cap=2048, max_waste_frac=0.15):
    """Pick (tm, tk) as power-of-two multiples of 128; bound padding waste;
    keep >= 2 row tiles when possible (v7x megacore)."""
    n128 = _round_up(max(N, 1), 128)
    tk = 128
    while tk * 2 <= tk_cap and tk * 2 <= n128:
        tk *= 2
    while tk > 128 and (_round_up(n128, tk) - n128) > max_waste_frac * n128:
        tk //= 2
    n_pad = _round_up(n128, tk)
    tm = 128
    while tm * 2 <= tm_cap and tm * 2 <= tk and n_pad // (tm * 2) >= 2:
        tm *= 2
    return tm, tk


# ----------------------------------------------------------------------------
# One-time graph preparation (hoisted out of the jitted forward):
#   * pad N -> n_pad (multiple of tm and tk), cast to bf16
#   * per row-tile, the sorted list of non-empty K-tiles + count
# ----------------------------------------------------------------------------
def prepare_graph(graph, tm=None, tk=None):
    N = graph.shape[0]
    if tm is None or tk is None:
        a_tm, a_tk = _choose_tiles(N)
        tm = tm or a_tm
        tk = tk or a_tk
    n_pad = _round_up(N, max(tm, tk))
    assert n_pad % tm == 0 and n_pad % tk == 0, (n_pad, tm, tk)

    g = np.zeros((n_pad, n_pad), np.float32)
    g[:N, :N] = np.asarray(graph, np.float32)

    nrt, nkt = n_pad // tm, n_pad // tk
    nz = g.reshape(nrt, tm, nkt, tk).any(axis=(1, 3))       # (nrt, nkt) bool
    cnt = nz.sum(axis=1).astype(np.int32)                   # (nrt,)
    max_cnt = max(int(cnt.max()), 1)
    ids = np.zeros((nrt, max_cnt), np.int32)
    for r in range(nrt):
        nzr = np.nonzero(nz[r])[0].astype(np.int32)
        if nzr.size == 0:
            nzr = np.zeros((1,), np.int32)                   # dummy, guarded by cnt
        ids[r, :nzr.size] = nzr
        ids[r, nzr.size:] = nzr[-1]   # repeat last valid id -> pipeline skips re-DMA

    graph_bf16 = jnp.asarray(g, dtype=jnp.bfloat16)          # halves HBM graph read
    return graph_bf16, jnp.asarray(ids), jnp.asarray(cnt), tm, tk


# ----------------------------------------------------------------------------
# Kernel 1: one propagation layer (block-sparse)
#   y = G @ x     (only non-empty graph tiles visited)
#   acc_out = (acc_in + y) * out_scale      (mean folded into last layer)
# Grid = (row_tiles, max_nonempty_ktiles); f32 VMEM accumulator.
# ----------------------------------------------------------------------------
def _prop_kernel(ids_ref, cnt_ref, g_ref, x_ref, accin_ref, *outs,
                 out_scale, emit_next):
    del ids_ref                                   # consumed by the index_maps
    if emit_next:
        y_ref, accout_ref, acc_sc = outs
    else:
        accout_ref, acc_sc = outs

    i = pl.program_id(0)
    s = pl.program_id(1)

    @pl.when(s == 0)
    def _init():
        acc_sc[...] = jnp.zeros_like(acc_sc)

    @pl.when(s < cnt_ref[i])                      # skip padded / empty tiles
    def _accum():
        acc_sc[...] += jnp.dot(g_ref[...], x_ref[...],
                               preferred_element_type=jnp.float32)

    @pl.when(s == pl.num_programs(1) - 1)
    def _finalize():
        y = acc_sc[...]
        if emit_next:
            y_ref[...] = y.astype(y_ref.dtype)    # bf16 input to the next layer
        accout_ref[...] = (accin_ref[...] + y) * jnp.float32(out_scale)


def propagate(graph_bf16, ktile_ids, ktile_cnt, emb_f32, n_layers, tm, tk):
    """Runs n_layers of Graph @ x and returns the layer-mean (n_pad, Dp) f32."""
    if n_layers == 0:
        return emb_f32

    n_pad, Dp = emb_f32.shape
    nrt = n_pad // tm
    max_cnt = ktile_ids.shape[1]
    grid = (nrt, max_cnt)

    cost = pl.CostEstimate(
        flops=2 * n_pad * n_pad * Dp,
        transcendentals=0,
        bytes_accessed=n_pad * n_pad * 2 + n_pad * Dp * (2 * nrt + 10))

    def make_call(out_scale, emit_next):
        acc_spec = pl.BlockSpec((tm, Dp), lambda i, s, ids, cnt: (i, 0))
        if emit_next:
            out_shape = (jax.ShapeDtypeStruct((n_pad, Dp), jnp.bfloat16),
                         jax.ShapeDtypeStruct((n_pad, Dp), jnp.float32))
            out_specs = (pl.BlockSpec((tm, Dp), lambda i, s, ids, cnt: (i, 0)),
                         acc_spec)
        else:
            out_shape = jax.ShapeDtypeStruct((n_pad, Dp), jnp.float32)
            out_specs = acc_spec
        return pl.pallas_call(
            functools.partial(_prop_kernel, out_scale=out_scale,
                              emit_next=emit_next),
            out_shape=out_shape,
            grid_spec=pltpu.PrefetchScalarGridSpec(
                num_scalar_prefetch=2,
                grid=grid,
                in_specs=[
                    # graph tile (i, k) where k is the s-th non-empty K-tile
                    pl.BlockSpec((tm, tk), lambda i, s, ids, cnt: (i, ids[i, s])),
                    # matching activation tile
                    pl.BlockSpec((tk, Dp), lambda i, s, ids, cnt: (ids[i, s], 0)),
                    # running layer-sum (read once per row tile)
                    pl.BlockSpec((tm, Dp), lambda i, s, ids, cnt: (i, 0)),
                ],
                out_specs=out_specs,
                scratch_shapes=[pltpu.VMEM((tm, Dp), jnp.float32)],
            ),
            compiler_params=pltpu.CompilerParams(
                dimension_semantics=("parallel", "arbitrary"),
                vmem_limit_bytes=48 * 1024 * 1024,
            ),
            cost_estimate=cost,
        )

    mid_call = make_call(1.0, True)
    last_call = make_call(1.0 / float(n_layers + 1), False)   # fold layer mean

    cur = emb_f32.astype(jnp.bfloat16)      # bf16 activations into the MXU
    acc = emb_f32                           # f32 running sum starts at layer 0
    for layer in range(n_layers):
        if layer == n_layers - 1:
            acc = last_call(ktile_ids, ktile_cnt, graph_bf16, cur, acc)
        else:
            cur, acc = mid_call(ktile_ids, ktile_cnt, graph_bf16, cur, acc)
    return acc                              # already the mean after last layer


# ----------------------------------------------------------------------------
# Kernel 2: batched fused gather + score (8 pairs per grid step)
#   gamma[b] = sum_d light_out[users[b], d] * light_out[num_users+items[b], d]
# Manual DMA row gathers from HBM into VMEM scratch; lane-dense (8,128) store.
# ----------------------------------------------------------------------------
_PAIRS = 8


def _gather_score_kernel(u_idx_ref, i_idx_ref, light_ref, out_ref,
                         ubuf, ibuf, sems):
    b0 = pl.program_id(0) * _PAIRS
    copies = []
    for j in range(_PAIRS):
        cu = pltpu.make_async_copy(
            light_ref.at[pl.ds(u_idx_ref[b0 + j], 1), :],
            ubuf.at[pl.ds(j, 1), :], sems.at[0, j])
        ci = pltpu.make_async_copy(
            light_ref.at[pl.ds(i_idx_ref[b0 + j], 1), :],
            ibuf.at[pl.ds(j, 1), :], sems.at[1, j])
        cu.start()
        ci.start()
        copies += [cu, ci]
    for c in copies:
        c.wait()
    s = jnp.sum(ubuf[...] * ibuf[...], axis=-1, keepdims=True)   # (_PAIRS, 1)
    out_ref[...] = jnp.broadcast_to(s, out_ref.shape)            # (_PAIRS, 128)


def gather_score(light_out, u_rows, i_rows):
    B = u_rows.shape[0]
    _, Dp = light_out.shape
    B_pad = _round_up(B, _PAIRS)
    u_p = jnp.pad(u_rows, (0, B_pad - B))
    i_p = jnp.pad(i_rows, (0, B_pad - B))

    out = pl.pallas_call(
        _gather_score_kernel,
        out_shape=jax.ShapeDtypeStruct((B_pad, 128), jnp.float32),
        grid_spec=pltpu.PrefetchScalarGridSpec(
            num_scalar_prefetch=2,
            grid=(B_pad // _PAIRS,),
            in_specs=[pl.BlockSpec(memory_space=pl.ANY)],        # light_out in HBM
            out_specs=pl.BlockSpec((_PAIRS, 128), lambda b, u, i: (b, 0)),
            scratch_shapes=[
                pltpu.VMEM((_PAIRS, Dp), jnp.float32),
                pltpu.VMEM((_PAIRS, Dp), jnp.float32),
                pltpu.SemaphoreType.DMA((2, _PAIRS)),
            ],
        ),
        compiler_params=pltpu.CompilerParams(
            dimension_semantics=("arbitrary",),
        ),
    )(u_p, i_p, light_out)
    return out[:B, 0]


# ----------------------------------------------------------------------------
# EGHG forward (padding / glue in JAX, compute in Pallas)
# ----------------------------------------------------------------------------
def eghg_forward(graph_bf16, ktile_ids, ktile_cnt, user_emb, item_emb,
                 users, items, *, n_layers, tm, tk):
    num_users, D = user_emb.shape
    num_items = item_emb.shape[0]
    N = num_users + num_items
    n_pad = graph_bf16.shape[0]
    Dp = _round_up(D, 128)                # lane-dense feature dim

    all_emb = jnp.concatenate([user_emb, item_emb], axis=0)           # (N, D)
    all_emb = jnp.pad(all_emb, ((0, n_pad - N), (0, Dp - D)))         # (n_pad, Dp)

    light_out = propagate(graph_bf16, ktile_ids, ktile_cnt, all_emb,
                          n_layers, tm, tk)                           # (n_pad, Dp)

    u_rows = users.astype(jnp.int32)
    i_rows = (items + num_users).astype(jnp.int32)
    return gather_score(light_out, u_rows, i_rows)                    # (B,)


# ----------------------------------------------------------------------------
# Pure-JAX reference (f32) for correctness checks
# ----------------------------------------------------------------------------
def eghg_reference(graph, user_emb, item_emb, users, items, n_layers):
    all_emb = jnp.concatenate([user_emb, item_emb], axis=0)
    embs = [all_emb]
    cur = all_emb
    for _ in range(n_layers):
        cur = graph @ cur
        embs.append(cur)
    light_out = jnp.mean(jnp.stack(embs, axis=1), axis=1)
    nu = user_emb.shape[0]
    ue = light_out[:nu][users]
    ie = light_out[nu:][items]
    return jnp.sum(ue * ie, axis=1)


# ----------------------------------------------------------------------------
# Deterministic parameter / graph construction (synthetic, no checkpoint load)
# ----------------------------------------------------------------------------
def xavier_uniform(key, shape):
    fan_in, fan_out = shape
    bound = jnp.sqrt(6.0 / (fan_in + fan_out))
    return jax.random.uniform(key, shape, jnp.float32, -bound, bound)


def build_graph(key, num_users, num_items, k, item_limit=None, density=0.3):
    # Synthetic bipartite interaction matrix R, symmetric-normalized adjacency,
    # then the Laplace-k blend of __init_weight: (1-k)*I + k*A_norm.
    # item_limit restricts interactions to items < item_limit, which creates
    # fully-zero graph tiles (exercises the tile-skip path).
    N = num_users + num_items
    R = (jax.random.uniform(key, (num_users, num_items)) < density).astype(jnp.float32)
    if item_limit is not None:
        R = R * (jnp.arange(num_items) < item_limit).astype(jnp.float32)[None, :]
    A = jnp.zeros((N, N), jnp.float32)
    A = A.at[:num_users, num_users:].set(R)
    A = A.at[num_users:, :num_users].set(R.T)
    deg = jnp.sum(A, axis=1)
    d_inv_sqrt = jnp.where(deg > 0, 1.0 / jnp.sqrt(jnp.maximum(deg, 1e-12)), 0.0)
    A_norm = d_inv_sqrt[:, None] * A * d_inv_sqrt[None, :]
    return (1.0 - k) * jnp.eye(N, dtype=jnp.float32) + k * A_norm


def _run_case(name, num_users, num_items, batch, n_layers, k, seed,
              item_limit=None, tm=None, tk=None):
    key = jax.random.PRNGKey(seed)
    k_u, k_i, k_g, k_uid, k_iid = jax.random.split(key, 5)
    latent_dim = 64
    user_emb = xavier_uniform(k_u, (num_users, latent_dim))
    item_emb = xavier_uniform(k_i, (num_items, latent_dim))
    graph = build_graph(k_g, num_users, num_items, k, item_limit=item_limit)
    users = jax.random.randint(k_uid, (batch,), 0, num_users)
    items = jax.random.randint(k_iid, (batch,), 0, num_items)

    # One-time graph prep (pad + bf16 cast + tile-sparsity metadata), hoisted
    # out of the per-forward jitted path.
    graph_bf16, ktile_ids, ktile_cnt, tm, tk = prepare_graph(graph, tm=tm, tk=tk)

    fwd = jax.jit(eghg_forward, static_argnames=("n_layers", "tm", "tk"))
    gamma = fwd(graph_bf16, ktile_ids, ktile_cnt, user_emb, item_emb,
                users, items, n_layers=n_layers, tm=tm, tk=tk)
    jax.block_until_ready(gamma)

    gamma_ref = eghg_reference(graph, user_emb, item_emb, users, items, n_layers)
    assert gamma.shape == (batch,) and gamma.dtype == jnp.float32, name
    # bf16 graph/activations in the kernel -> loose tolerance vs. f32 reference.
    assert bool(jnp.allclose(gamma, gamma_ref, rtol=5e-2, atol=2e-2)), (
        name, gamma, gamma_ref)


if __name__ == "__main__":
    # Case 1: tiny (single tile, single grid step everywhere).
    _run_case("tiny", num_users=8, num_items=16, batch=8, n_layers=3, k=0.8,
              seed=0)
    # Case 2: multi-tile + tile-level sparsity + batched gather.
    #   Users only interact with items < 100, so with 128x128 tiles several
    #   graph blocks are all-zero: per-row-tile K-tile counts differ, which
    #   exercises the scalar-prefetched skip path, the multi-K accumulator
    #   init/finalize, and the >8-pair gather batching.
    _run_case("multi_tile", num_users=128, num_items=384, batch=20, n_layers=3,
              k=0.8, seed=1, item_limit=100, tm=128, tk=128)
    print("KERNEL_OK")
</pallas_src>

<mosaic_0001>
module attributes {stable_mosaic.version = 11 : i64} {
  func.func @_prop_kernel(%arg0: i32, %arg1: i32, %arg2: memref<1x1xi32, #tpu.memory_space<smem>>, %arg3: memref<1xi32, #tpu.memory_space<smem>>, %arg4: memref<128x128xbf16, #tpu.memory_space<vmem>>, %arg5: memref<128x128xbf16, #tpu.memory_space<vmem>>, %arg6: memref<128x128xf32, #tpu.memory_space<vmem>>, %arg7: memref<128x128xbf16, #tpu.memory_space<vmem>>, %arg8: memref<128x128xf32, #tpu.memory_space<vmem>>, %arg9: memref<128x128xf32, #tpu.memory_space<vmem>>) attributes {dimension_semantics = [#tpu.dimension_semantics<parallel>, #tpu.dimension_semantics<arbitrary>], iteration_bounds = array<i64: 1, 1>, scalar_prefetch = 2 : i64, scratch_operands = 1 : i64, tpu.core_type = #tpu.core_type<tc>, window_params = [{transform_indices = @transform_0, window_bounds = array<i64: 128, 128>}, {transform_indices = @transform_1, window_bounds = array<i64: 128, 128>}, {transform_indices = @transform_2, window_bounds = array<i64: 128, 128>}, {transform_indices = @transform_3, window_bounds = array<i64: 128, 128>}, {transform_indices = @transform_4, window_bounds = array<i64: 128, 128>}]} {
    %c0_i32 = arith.constant 0 : i32
    %0 = arith.cmpi eq, %arg1, %c0_i32 : i32
    %1 = arith.extui %0 : i1 to i32
    %c0_i32_0 = arith.constant 0 : i32
    %2 = arith.cmpi ne, %1, %c0_i32_0 : i32
    scf.if %2 {
      %cst = arith.constant 0.000000e+00 : f32
      %11 = vector.broadcast %cst : f32 to vector<128x128xf32>
      %c0 = arith.constant 0 : index
      %c0_4 = arith.constant 0 : index
      %12 = vector.load %arg9[%c0, %c0_4] : memref<128x128xf32, #tpu.memory_space<vmem>>, vector<128x128xf32>
      tpu.vector_store %arg9[%c0, %c0_4], %11 {strides = array<i32>} : memref<128x128xf32, #tpu.memory_space<vmem>>, vector<128x128xf32>,
    } else {
    }
    %3 = arith.index_cast %arg0 : i32 to index
    %4 = memref.load %arg3[%3] : memref<1xi32, #tpu.memory_space<smem>>
    %5 = arith.cmpi slt, %arg1, %4 : i32
    %6 = arith.extui %5 : i1 to i32
    %c0_i32_1 = arith.constant 0 : i32
    %7 = arith.cmpi ne, %6, %c0_i32_1 : i32
    scf.if %7 {
      %c0 = arith.constant 0 : index
      %c0_4 = arith.constant 0 : index
      %11 = vector.load %arg9[%c0, %c0_4] : memref<128x128xf32, #tpu.memory_space<vmem>>, vector<128x128xf32>
      %c0_5 = arith.constant 0 : index
      %c0_6 = arith.constant 0 : index
      %12 = vector.load %arg4[%c0_5, %c0_6] : memref<128x128xbf16, #tpu.memory_space<vmem>>, vector<128x128xbf16>
      %c0_7 = arith.constant 0 : index
      %c0_8 = arith.constant 0 : index
      %13 = vector.load %arg5[%c0_7, %c0_8] : memref<128x128xbf16, #tpu.memory_space<vmem>>, vector<128x128xbf16>
      %cst = arith.constant dense<0.000000e+00> : vector<128x128xf32>
      %14 = tpu.matmul %12, %13, %cst {dimension_numbers = #tpu.dot_dimension_numbers<[1], [0], [0], [1], [0, 0, 1, 1], [], []>} : vector<128x128xbf16>, vector<128x128xbf16>, vector<128x128xf32> -> vector<128x128xf32>
      %15 = arith.addf %11, %14 : vector<128x128xf32>
      %c0_9 = arith.constant 0 : index
      %c0_10 = arith.constant 0 : index
      %16 = vector.load %arg9[%c0_9, %c0_10] : memref<128x128xf32, #tpu.memory_space<vmem>>, vector<128x128xf32>
      tpu.vector_store %arg9[%c0_9, %c0_10], %15 {strides = array<i32>} : memref<128x128xf32, #tpu.memory_space<vmem>>, vector<128x128xf32>,
    } else {
    }
    %c0_i32_2 = arith.constant 0 : i32
    %8 = arith.cmpi eq, %arg1, %c0_i32_2 : i32
    %9 = arith.extui %8 : i1 to i32
    %c0_i32_3 = arith.constant 0 : i32
    %10 = arith.cmpi ne, %9, %c0_i32_3 : i32
    scf.if %10 {
      %c0 = arith.constant 0 : index
      %c0_4 = arith.constant 0 : index
      %11 = vector.load %arg9[%c0, %c0_4] : memref<128x128xf32, #tpu.memory_space<vmem>>, vector<128x128xf32>
      %12 = arith.truncf %11 : vector<128x128xf32> to vector<128x128xbf16>
      %c0_5 = arith.constant 0 : index
      %c0_6 = arith.constant 0 : index
      %13 = vector.load %arg7[%c0_5, %c0_6] : memref<128x128xbf16, #tpu.memory_space<vmem>>, vector<128x128xbf16>
      tpu.vector_store %arg7[%c0_5, %c0_6], %12 {strides = array<i32>} : memref<128x128xbf16, #tpu.memory_space<vmem>>, vector<128x128xbf16>,
      %c0_7 = arith.constant 0 : index
      %c0_8 = arith.constant 0 : index
      %14 = vector.load %arg6[%c0_7, %c0_8] : memref<128x128xf32, #tpu.memory_space<vmem>>, vector<128x128xf32>
      %15 = arith.addf %14, %11 : vector<128x128xf32>
      %cst = arith.constant 1.000000e+00 : f32
      %16 = vector.broadcast %cst : f32 to vector<128x128xf32>
      %17 = arith.mulf %15, %16 : vector<128x128xf32>
      %c0_9 = arith.constant 0 : index
      %c0_10 = arith.constant 0 : index
      %18 = vector.load %arg8[%c0_9, %c0_10] : memref<128x128xf32, #tpu.memory_space<vmem>>, vector<128x128xf32>
      tpu.vector_store %arg8[%c0_9, %c0_10], %17 {strides = array<i32>} : memref<128x128xf32, #tpu.memory_space<vmem>>, vector<128x128xf32>,
    } else {
    }
    return
  }
  func.func @transform_0(%arg0: i32, %arg1: i32, %arg2: memref<1x1xi32, #tpu.memory_space<smem>>, %arg3: memref<1xi32, #tpu.memory_space<smem>>) -> (i32, i32) {
    %0 = arith.index_cast %arg0 : i32 to index
    %1 = arith.index_cast %arg1 : i32 to index
    %2 = memref.load %arg2[%0, %1] : memref<1x1xi32, #tpu.memory_space<smem>>
    %c0_i32 = arith.constant 0 : i32
    return %arg0, %2 : i32, i32
  }
  func.func @transform_1(%arg0: i32, %arg1: i32, %arg2: memref<1x1xi32, #tpu.memory_space<smem>>, %arg3: memref<1xi32, #tpu.memory_space<smem>>) -> (i32, i32) {
    %0 = arith.index_cast %arg0 : i32 to index
    %1 = arith.index_cast %arg1 : i32 to index
    %2 = memref.load %arg2[%0, %1] : memref<1x1xi32, #tpu.memory_space<smem>>
    %c0_i32 = arith.constant 0 : i32
    %c0_i32_0 = arith.constant 0 : i32
    return %2, %c0_i32 : i32, i32
  }
  func.func @transform_2(%arg0: i32, %arg1: i32, %arg2: memref<1x1xi32, #tpu.memory_space<smem>>, %arg3: memref<1xi32, #tpu.memory_space<smem>>) -> (i32, i32) {
    %c0_i32 = arith.constant 0 : i32
    %c0_i32_0 = arith.constant 0 : i32
    return %arg0, %c0_i32 : i32, i32
  }
  func.func @transform_3(%arg0: i32, %arg1: i32, %arg2: memref<1x1xi32, #tpu.memory_space<smem>>, %arg3: memref<1xi32, #tpu.memory_space<smem>>) -> (i32, i32) {
    %c0_i32 = arith.constant 0 : i32
    %c0_i32_0 = arith.constant 0 : i32
    return %arg0, %c0_i32 : i32, i32
  }
  func.func @transform_4(%arg0: i32, %arg1: i32, %arg2: memref<1x1xi32, #tpu.memory_space<smem>>, %arg3: memref<1xi32, #tpu.memory_space<smem>>) -> (i32, i32) {
    %c0_i32 = arith.constant 0 : i32
    %c0_i32_0 = arith.constant 0 : i32
    return %arg0, %c0_i32 : i32, i32
  }
}

module attributes {stable_mosaic.version = 11 : i64} {
  func.func @_prop_kernel(%arg0: i32, %arg1: i32, %arg2: memref<1x1xi32, #tpu.memory_space<smem>>, %arg3: memref<1xi32, #tpu.memory_space<smem>>, %arg4: memref<128x128xbf16, #tpu.memory_space<vmem>>, %arg5: memref<128x128xbf16, #tpu.memory_space<vmem>>, %arg6: memref<128x128xf32, #tpu.memory_space<vmem>>, %arg7: memref<128x128xf32, #tpu.memory_space<vmem>>, %arg8: memref<128x128xf32, #tpu.memory_space<vmem>>) attributes {dimension_semantics = [#tpu.dimension_semantics<parallel>, #tpu.dimension_semantics<arbitrary>], iteration_bounds = array<i64: 1, 1>, scalar_prefetch = 2 : i64, scratch_operands = 1 : i64, tpu.core_type = #tpu.core_type<tc>, window_params = [{transform_indices = @transform_0, window_bounds = array<i64: 128, 128>}, {transform_indices = @transform_1, window_bounds = array<i64: 128, 128>}, {transform_indices = @transform_2, window_bounds = array<i64: 128, 128>}, {transform_indices = @transform_3, window_bounds = array<i64: 128, 128>}]} {
    %c0_i32 = arith.constant 0 : i32
    %0 = arith.cmpi eq, %arg1, %c0_i32 : i32
    %1 = arith.extui %0 : i1 to i32
    %c0_i32_0 = arith.constant 0 : i32
    %2 = arith.cmpi ne, %1, %c0_i32_0 : i32
    scf.if %2 {
      %cst = arith.constant 0.000000e+00 : f32
      %11 = vector.broadcast %cst : f32 to vector<128x128xf32>
      %c0 = arith.constant 0 : index
      %c0_4 = arith.constant 0 : index
      %12 = vector.load %arg8[%c0, %c0_4] : memref<128x128xf32, #tpu.memory_space<vmem>>, vector<128x128xf32>
      tpu.vector_store %arg8[%c0, %c0_4], %11 {strides = array<i32>} : memref<128x128xf32, #tpu.memory_space<vmem>>, vector<128x128xf32>,
    } else {
    }
    %3 = arith.index_cast %arg0 : i32 to index
    %4 = memref.load %arg3[%3] : memref<1xi32, #tpu.memory_space<smem>>
    %5 = arith.cmpi slt, %arg1, %4 : i32
    %6 = arith.extui %5 : i1 to i32
    %c0_i32_1 = arith.constant 0 : i32
    %7 = arith.cmpi ne, %6, %c0_i32_1 : i32
    scf.if %7 {
      %c0 = arith.constant 0 : index
      %c0_4 = arith.constant 0 : index
      %11 = vector.load %arg8[%c0, %c0_4] : memref<128x128xf32, #tpu.memory_space<vmem>>, vector<128x128xf32>
      %c0_5 = arith.constant 0 : index
      %c0_6 = arith.constant 0 : index
      %12 = vector.load %arg4[%c0_5, %c0_6] : memref<128x128xbf16, #tpu.memory_space<vmem>>, vector<128x128xbf16>
      %c0_7 = arith.constant 0 : index
      %c0_8 = arith.constant 0 : index
      %13 = vector.load %arg5[%c0_7, %c0_8] : memref<128x128xbf16, #tpu.memory_space<vmem>>, vector<128x128xbf16>
      %cst = arith.constant dense<0.000000e+00> : vector<128x128xf32>
      %14 = tpu.matmul %12, %13, %cst {dimension_numbers = #tpu.dot_dimension_numbers<[1], [0], [0], [1], [0, 0, 1, 1], [], []>} : vector<128x128xbf16>, vector<128x128xbf16>, vector<128x128xf32> -> vector<128x128xf32>
      %15 = arith.addf %11, %14 : vector<128x128xf32>
      %c0_9 = arith.constant 0 : index
      %c0_10 = arith.constant 0 : index
      %16 = vector.load %arg8[%c0_9, %c0_10] : memref<128x128xf32, #tpu.memory_space<vmem>>, vector<128x128xf32>
      tpu.vector_store %arg8[%c0_9, %c0_10], %15 {strides = array<i32>} : memref<128x128xf32, #tpu.memory_space<vmem>>, vector<128x128xf32>,
    } else {
    }
    %c0_i32_2 = arith.constant 0 : i32
    %8 = arith.cmpi eq, %arg1, %c0_i32_2 : i32
    %9 = arith.extui %8 : i1 to i32
    %c0_i32_3 = arith.constant 0 : i32
    %10 = arith.cmpi ne, %9, %c0_i32_3 : i32
    scf.if %10 {
      %c0 = arith.constant 0 : index
      %c0_4 = arith.constant 0 : index
      %11 = vector.load %arg8[%c0, %c0_4] : memref<128x128xf32, #tpu.memory_space<vmem>>, vector<128x128xf32>
      %c0_5 = arith.constant 0 : index
      %c0_6 = arith.constant 0 : index
      %12 = vector.load %arg6[%c0_5, %c0_6] : memref<128x128xf32, #tpu.memory_space<vmem>>, vector<128x128xf32>
      %13 = arith.addf %12, %11 : vector<128x128xf32>
      %cst = arith.constant 2.500000e-01 : f32
      %14 = vector.broadcast %cst : f32 to vector<128x128xf32>
      %15 = arith.mulf %13, %14 : vector<128x128xf32>
      %c0_7 = arith.constant 0 : index
      %c0_8 = arith.constant 0 : index
      %16 = vector.load %arg7[%c0_7, %c0_8] : memref<128x128xf32, #tpu.memory_space<vmem>>, vector<128x128xf32>
      tpu.vector_store %arg7[%c0_7, %c0_8], %15 {strides = array<i32>} : memref<128x128xf32, #tpu.memory_space<vmem>>, vector<128x128xf32>,
    } else {
    }
    return
  }
  func.func @transform_0(%arg0: i32, %arg1: i32, %arg2: memref<1x1xi32, #tpu.memory_space<smem>>, %arg3: memref<1xi32, #tpu.memory_space<smem>>) -> (i32, i32) {
    %0 = arith.index_cast %arg0 : i32 to index
    %1 = arith.index_cast %arg1 : i32 to index
    %2 = memref.load %arg2[%0, %1] : memref<1x1xi32, #tpu.memory_space<smem>>
    %c0_i32 = arith.constant 0 : i32
    return %arg0, %2 : i32, i32
  }
  func.func @transform_1(%arg0: i32, %arg1: i32, %arg2: memref<1x1xi32, #tpu.memory_space<smem>>, %arg3: memref<1xi32, #tpu.memory_space<smem>>) -> (i32, i32) {
    %0 = arith.index_cast %arg0 : i32 to index
    %1 = arith.index_cast %arg1 : i32 to index
    %2 = memref.load %arg2[%0, %1] : memref<1x1xi32, #tpu.memory_space<smem>>
    %c0_i32 = arith.constant 0 : i32
    %c0_i32_0 = arith.constant 0 : i32
    return %2, %c0_i32 : i32, i32
  }
  func.func @transform_2(%arg0: i32, %arg1: i32, %arg2: memref<1x1xi32, #tpu.memory_space<smem>>, %arg3: memref<1xi32, #tpu.memory_space<smem>>) -> (i32, i32) {
    %c0_i32 = arith.constant 0 : i32
    %c0_i32_0 = arith.constant 0 : i32
    return %arg0, %c0_i32 : i32, i32
  }
  func.func @transform_3(%arg0: i32, %arg1: i32, %arg2: memref<1x1xi32, #tpu.memory_space<smem>>, %arg3: memref<1xi32, #tpu.memory_space<smem>>) -> (i32, i32) {
    %c0_i32 = arith.constant 0 : i32
    %c0_i32_0 = arith.constant 0 : i32
    return %arg0, %c0_i32 : i32, i32
  }
}

module attributes {stable_mosaic.version = 11 : i64} {
  func.func @_gather_score_kernel(%arg0: i32, %arg1: memref<8xi32, #tpu.memory_space<smem>>, %arg2: memref<8xi32, #tpu.memory_space<smem>>, %arg3: memref<128x128xf32, #tpu.memory_space<any>>, %arg4: memref<8x128xf32, #tpu.memory_space<vmem>>, %arg5: memref<8x128xf32, #tpu.memory_space<vmem>>, %arg6: memref<8x128xf32, #tpu.memory_space<vmem>>, %arg7: memref<2x8x!tpu.dma_semaphore, #tpu.memory_space<semaphore_mem>>) attributes {dimension_semantics = [#tpu.dimension_semantics<arbitrary>], iteration_bounds = array<i64: 1>, scalar_prefetch = 2 : i64, scratch_operands = 3 : i64, tpu.core_type = #tpu.core_type<tc>, window_params = [{}, {transform_indices = @transform_1, window_bounds = array<i64: 8, 128>}]} {
    %c8_i32 = arith.constant 8 : i32
    %0 = arith.muli %arg0, %c8_i32 : i32
    %c0_i32 = arith.constant 0 : i32
    %1 = arith.addi %0, %c0_i32 : i32
    %2 = arith.index_cast %1 : i32 to index
    %3 = memref.load %arg1[%2] : memref<8xi32, #tpu.memory_space<smem>>
    %c0_i32_0 = arith.constant 0 : i32
    %4 = arith.addi %0, %c0_i32_0 : i32
    %5 = arith.index_cast %4 : i32 to index
    %6 = memref.load %arg2[%5] : memref<8xi32, #tpu.memory_space<smem>>
    %c0_i32_1 = arith.constant 0 : i32
    %c0_i32_2 = arith.constant 0 : i32
    %c0_i32_3 = arith.constant 0 : i32
    %7 = tpu.memref_slice %arg3[%3, %c0_i32_3] : memref<128x128xf32, #tpu.memory_space<any>> -> memref<1x128xf32, #tpu.memory_space<any>>
    %c0_i32_4 = arith.constant 0 : i32
    %c0_i32_5 = arith.constant 0 : i32
    %8 = tpu.memref_slice %arg5[%c0_i32_4, %c0_i32_5] : memref<8x128xf32, #tpu.memory_space<vmem>> -> memref<1x128xf32, #tpu.memory_space<vmem>>
    %9 = tpu.memref_slice %arg7[%c0_i32_1, %c0_i32_2] : memref<2x8x!tpu.dma_semaphore, #tpu.memory_space<semaphore_mem>> -> memref<1x1x!tpu.dma_semaphore, #tpu.memory_space<semaphore_mem>>
    %10 = tpu.memref_squeeze %9 : memref<1x1x!tpu.dma_semaphore, #tpu.memory_space<semaphore_mem>> -> memref<!tpu.dma_semaphore, #tpu.memory_space<semaphore_mem>>
    tpu.enqueue_dma source(%7 : memref<1x128xf32, #tpu.memory_space<any>>) target(%8 : memref<1x128xf32, #tpu.memory_space<vmem>>) target_semaphore(%10 : memref<!tpu.dma_semaphore, #tpu.memory_space<semaphore_mem>>)
    %c1_i32 = arith.constant 1 : i32
    %c0_i32_6 = arith.constant 0 : i32
    %c0_i32_7 = arith.constant 0 : i32
    %11 = tpu.memref_slice %arg3[%6, %c0_i32_7] : memref<128x128xf32, #tpu.memory_space<any>> -> memref<1x128xf32, #tpu.memory_space<any>>
    %c0_i32_8 = arith.constant 0 : i32
    %c0_i32_9 = arith.constant 0 : i32
    %12 = tpu.memref_slice %arg6[%c0_i32_8, %c0_i32_9] : memref<8x128xf32, #tpu.memory_space<vmem>> -> memref<1x128xf32, #tpu.memory_space<vmem>>
    %13 = tpu.memref_slice %arg7[%c1_i32, %c0_i32_6] : memref<2x8x!tpu.dma_semaphore, #tpu.memory_space<semaphore_mem>> -> memref<1x1x!tpu.dma_semaphore, #tpu.memory_space<semaphore_mem>>
    %14 = tpu.memref_squeeze %13 : memref<1x1x!tpu.dma_semaphore, #tpu.memory_space<semaphore_mem>> -> memref<!tpu.dma_semaphore, #tpu.memory_space<semaphore_mem>>
    tpu.enqueue_dma source(%11 : memref<1x128xf32, #tpu.memory_space<any>>) target(%12 : memref<1x128xf32, #tpu.memory_space<vmem>>) target_semaphore(%14 : memref<!tpu.dma_semaphore, #tpu.memory_space<semaphore_mem>>)
    %c1_i32_10 = arith.constant 1 : i32
    %15 = arith.addi %0, %c1_i32_10 : i32
    %16 = arith.index_cast %15 : i32 to index
    %17 = memref.load %arg1[%16] : memref<8xi32, #tpu.memory_space<smem>>
    %c1_i32_11 = arith.constant 1 : i32
    %18 = arith.addi %0, %c1_i32_11 : i32
    %19 = arith.index_cast %18 : i32 to index
    %20 = memref.load %arg2[%19] : memref<8xi32, #tpu.memory_space<smem>>
    %c0_i32_12 = arith.constant 0 : i32
    %c1_i32_13 = arith.constant 1 : i32
    %c0_i32_14 = arith.constant 0 : i32
    %21 = tpu.memref_slice %arg3[%17, %c0_i32_14] : memref<128x128xf32, #tpu.memory_space<any>> -> memref<1x128xf32, #tpu.memory_space<any>>
    %c1_i32_15 = arith.constant 1 : i32
    %c0_i32_16 = arith.constant 0 : i32
    %22 = tpu.memref_slice %arg5[%c1_i32_15, %c0_i32_16] : memref<8x128xf32, #tpu.memory_space<vmem>> -> memref<1x128xf32, #tpu.memory_space<vmem>>
    %23 = tpu.memref_slice %arg7[%c0_i32_12, %c1_i32_13] : memref<2x8x!tpu.dma_semaphore, #tpu.memory_space<semaphore_mem>> -> memref<1x1x!tpu.dma_semaphore, #tpu.memory_space<semaphore_mem>>
    %24 = tpu.memref_squeeze %23 : memref<1x1x!tpu.dma_semaphore, #tpu.memory_space<semaphore_mem>> -> memref<!tpu.dma_semaphore, #tpu.memory_space<semaphore_mem>>
    tpu.enqueue_dma source(%21 : memref<1x128xf32, #tpu.memory_space<any>>) target(%22 : memref<1x128xf32, #tpu.memory_space<vmem>>) target_semaphore(%24 : memref<!tpu.dma_semaphore, #tpu.memory_space<semaphore_mem>>)
    %c1_i32_17 = arith.constant 1 : i32
    %c1_i32_18 = arith.constant 1 : i32
    %c0_i32_19 = arith.constant 0 : i32
    %25 = tpu.memref_slice %arg3[%20, %c0_i32_19] : memref<128x128xf32, #tpu.memory_space<any>> -> memref<1x128xf32, #tpu.memory_space<any>>
    %c1_i32_20 = arith.constant 1 : i32
    %c0_i32_21 = arith.constant 0 : i32
    %26 = tpu.memref_slice %arg6[%c1_i32_20, %c0_i32_21] : memref<8x128xf32, #tpu.memory_space<vmem>> -> memref<1x128xf32, #tpu.memory_space<vmem>>
    %27 = tpu.memref_slice %arg7[%c1_i32_17, %c1_i32_18] : memref<2x8x!tpu.dma_semaphore, #tpu.memory_space<semaphore_mem>> -> memref<1x1x!tpu.dma_semaphore, #tpu.memory_space<semaphore_mem>>
    %28 = tpu.memref_squeeze %27 : memref<1x1x!tpu.dma_semaphore, #tpu.memory_space<semaphore_mem>> -> memref<!tpu.dma_semaphore, #tpu.memory_space<semaphore_mem>>
    tpu.enqueue_dma source(%25 : memref<1x128xf32, #tpu.memory_space<any>>) target(%26 : memref<1x128xf32, #tpu.memory_space<vmem>>) target_semaphore(%28 : memref<!tpu.dma_semaphore, #tpu.memory_space<semaphore_mem>>)
    %c2_i32 = arith.constant 2 : i32
    %29 = arith.addi %0, %c2_i32 : i32
    %30 = arith.index_cast %29 : i32 to index
    %31 = memref.load %arg1[%30] : memref<8xi32, #tpu.memory_space<smem>>
    %c2_i32_22 = arith.constant 2 : i32
    %32 = arith.addi %0, %c2_i32_22 : i32
    %33 = arith.index_cast %32 : i32 to index
    %34 = memref.load %arg2[%33] : memref<8xi32, #tpu.memory_space<smem>>
    %c0_i32_23 = arith.constant 0 : i32
    %c2_i32_24 = arith.constant 2 : i32
    %c0_i32_25 = arith.constant 0 : i32
    %35 = tpu.memref_slice %arg3[%31, %c0_i32_25] : memref<128x128xf32, #tpu.memory_space<any>> -> memref<1x128xf32, #tpu.memory_space<any>>
    %c2_i32_26 = arith.constant 2 : i32
    %c0_i32_27 = arith.constant 0 : i32
    %36 = tpu.memref_slice %arg5[%c2_i32_26, %c0_i32_27] : memref<8x128xf32, #tpu.memory_space<vmem>> -> memref<1x128xf32, #tpu.memory_space<vmem>>
    %37 = tpu.memref_slice %arg7[%c0_i32_23, %c2_i32_24] : memref<2x8x!tpu.dma_semaphore, #tpu.memory_space<semaphore_mem>> -> memref<1x1x!tpu.dma_semaphore, #tpu.memory_space<semaphore_mem>>
    %38 = tpu.memref_squeeze %37 : memref<1x1x!tpu.dma_semaphore, #tpu.memory_space<semaphore_mem>> -> memref<!tpu.dma_semaphore, #tpu.memory_space<semaphore_mem>>
    tpu.enqueue_dma source(%35 : memref<1x128xf32, #tpu.memory_space<any>>) target(%36 : memref<1x128xf32, #tpu.memory_space<vmem>>) target_semaphore(%38 : memref<!tpu.dma_semaphore, #tpu.memory_space<semaphore_mem>>)
    %c1_i32_28 = arith.constant 1 : i32
    %c2_i32_29 = arith.constant 2 : i32
    %c0_i32_30 = arith.constant 0 : i32
    %39 = tpu.memref_slice %arg3[%34, %c0_i32_30] : memref<128x128xf32, #tpu.memory_space<any>> -> memref<1x128xf32, #tpu.memory_space<any>>
    %c2_i32_31 = arith.constant 2 : i32
    %c0_i32_32 = arith.constant 0 : i32
    %40 = tpu.memref_slice %arg6[%c2_i32_31, %c0_i32_32] : memref<8x128xf32, #tpu.memory_space<vmem>> -> memref<1x128xf32, #tpu.memory_space<vmem>>
    %41 = tpu.memref_slice %arg7[%c1_i32_28, %c2_i32_29] : memref<2x8x!tpu.dma_semaphore, #tpu.memory_space<semaphore_mem>> -> memref<1x1x!tpu.dma_semaphore, #tpu.memory_space<semaphore_mem>>
    %42 = tpu.memref_squeeze %41 : memref<1x1x!tpu.dma_semaphore, #tpu.memory_space<semaphore_mem>> -> memref<!tpu.dma_semaphore, #tpu.memory_space<semaphore_mem>>
    tpu.enqueue_dma source(%39 : memref<1x128xf32, #tpu.memory_space<any>>) target(%40 : memref<1x128xf32, #tpu.memory_space<vmem>>) target_semaphore(%42 : memref<!tpu.dma_semaphore, #tpu.memory_space<semaphore_mem>>)
    %c3_i32 = arith.constant 3 : i32
    %43 = arith.addi %0, %c3_i32 : i32
    %44 = arith.index_cast %43 : i32 to index
    %45 = memref.load %arg1[%44] : memref<8xi32, #tpu.memory_space<smem>>
    %c3_i32_33 = arith.constant 3 : i32
    %46 = arith.addi %0, %c3_i32_33 : i32
    %47 = arith.index_cast %46 : i32 to index
    %48 = memref.load %arg2[%47] : memref<8xi32, #tpu.memory_space<smem>>
    %c0_i32_34 = arith.constant 0 : i32
    %c3_i32_35 = arith.constant 3 : i32
    %c0_i32_36 = arith.constant 0 : i32
    %49 = tpu.memref_slice %arg3[%45, %c0_i32_36] : memref<128x128xf32, #tpu.memory_space<any>> -> memref<1x128xf32, #tpu.memory_space<any>>
    %c3_i32_37 = arith.constant 3 : i32
    %c0_i32_38 = arith.constant 0 : i32
    %50 = tpu.memref_slice %arg5[%c3_i32_37, %c0_i32_38] : memref<8x128xf32, #tpu.memory_space<vmem>> -> memref<1x128xf32, #tpu.memory_space<vmem>>
    %51 = tpu.memref_slice %arg7[%c0_i32_34, %c3_i32_35] : memref<2x8x!tpu.dma_semaphore, #tpu.memory_space<semaphore_mem>> -> memref<1x1x!tpu.dma_semaphore, #tpu.memory_space<semaphore_mem>>
    %52 = tpu.memref_squeeze %51 : memref<1x1x!tpu.dma_semaphore, #tpu.memory_space<semaphore_mem>> -> memref<!tpu.dma_semaphore, #tpu.memory_space<semaphore_mem>>
    tpu.enqueue_dma source(%49 : memref<1x128xf32, #tpu.memory_space<any>>) target(%50 : memref<1x128xf32, #tpu.memory_space<vmem>>) target_semaphore(%52 : memref<!tpu.dma_semaphore, #tpu.memory_space<semaphore_mem>>)
    %c1_i32_39 = arith.constant 1 : i32
    %c3_i32_40 = arith.constant 3 : i32
    %c0_i32_41 = arith.constant 0 : i32
    %53 = tpu.memref_slice %arg3[%48, %c0_i32_41] : memref<128x128xf32, #tpu.memory_space<any>> -> memref<1x128xf32, #tpu.memory_space<any>>
    %c3_i32_42 = arith.constant 3 : i32
    %c0_i32_43 = arith.constant 0 : i32
    %54 = tpu.memref_slice %arg6[%c3_i32_42, %c0_i32_43] : memref<8x128xf32, #tpu.memory_space<vmem>> -> memref<1x128xf32, #tpu.memory_space<vmem>>
    %55 = tpu.memref_slice %arg7[%c1_i32_39, %c3_i32_40] : memref<2x8x!tpu.dma_semaphore, #tpu.memory_space<semaphore_mem>> -> memref<1x1x!tpu.dma_semaphore, #tpu.memory_space<semaphore_mem>>
    %56 = tpu.memref_squeeze %55 : memref<1x1x!tpu.dma_semaphore, #tpu.memory_space<semaphore_mem>> -> memref<!tpu.dma_semaphore, #tpu.memory_space<semaphore_mem>>
    tpu.enqueue_dma source(%53 : memref<1x128xf32, #tpu.memory_space<any>>) target(%54 : memref<1x128xf32, #tpu.memory_space<vmem>>) target_semaphore(%56 : memref<!tpu.dma_semaphore, #tpu.memory_space<semaphore_mem>>)
    %c4_i32 = arith.constant 4 : i32
    %57 = arith.addi %0, %c4_i32 : i32
    %58 = arith.index_cast %57 : i32 to index
    %59 = memref.load %arg1[%58] : memref<8xi32, #tpu.memory_space<smem>>
    %c4_i32_44 = arith.constant 4 : i32
    %60 = arith.addi %0, %c4_i32_44 : i32
    %61 = arith.index_cast %60 : i32 to index
    %62 = memref.load %arg2[%61] : memref<8xi32, #tpu.memory_space<smem>>
    %c0_i32_45 = arith.constant 0 : i32
    %c4_i32_46 = arith.constant 4 : i32
    %c0_i32_47 = arith.constant 0 : i32
    %63 = tpu.memref_slice %arg3[%59, %c0_i32_47] : memref<128x128xf32, #tpu.memory_space<any>> -> memref<1x128xf32, #tpu.memory_space<any>>
    %c4_i32_48 = arith.constant 4 : i32
    %c0_i32_49 = arith.constant 0 : i32
    %64 = tpu.memref_slice %arg5[%c4_i32_48, %c0_i32_49] : memref<8x128xf32, #tpu.memory_space<vmem>> -> memref<1x128xf32, #tpu.memory_space<vmem>>
    %65 = tpu.memref_slice %arg7[%c0_i32_45, %c4_i32_46] : memref<2x8x!tpu.dma_semaphore, #tpu.memory_space<semaphore_mem>> -> memref<1x1x!tpu.dma_semaphore, #tpu.memory_space<semaphore_mem>>
    %66 = tpu.memref_squeeze %65 : memref<1x1x!tpu.dma_semaphore, #tpu.memory_space<semaphore_mem>> -> memref<!tpu.dma_semaphore, #tpu.memory_space<semaphore_mem>>
    tpu.enqueue_dma source(%63 : memref<1x128xf32, #tpu.memory_space<any>>) target(%64 : memref<1x128xf32, #tpu.memory_space<vmem>>) target_semaphore(%66 : memref<!tpu.dma_semaphore, #tpu.memory_space<semaphore_mem>>)
    %c1_i32_50 = arith.constant 1 : i32
    %c4_i32_51 = arith.constant 4 : i32
    %c0_i32_52 = arith.constant 0 : i32
    %67 = tpu.memref_slice %arg3[%62, %c0_i32_52] : memref<128x128xf32, #tpu.memory_space<any>> -> memref<1x128xf32, #tpu.memory_space<any>>
    %c4_i32_53 = arith.constant 4 : i32
    %c0_i32_54 = arith.constant 0 : i32
    %68 = tpu.memref_slice %arg6[%c4_i32_53, %c0_i32_54] : memref<8x128xf32, #tpu.memory_space<vmem>> -> memref<1x128xf32, #tpu.memory_space<vmem>>
    %69 = tpu.memref_slice %arg7[%c1_i32_50, %c4_i32_51] : memref<2x8x!tpu.dma_semaphore, #tpu.memory_space<semaphore_mem>> -> memref<1x1x!tpu.dma_semaphore, #tpu.memory_space<semaphore_mem>>
    %70 = tpu.memref_squeeze %69 : memref<1x1x!tpu.dma_semaphore, #tpu.memory_space<semaphore_mem>> -> memref<!tpu.dma_semaphore, #tpu.memory_space<semaphore_mem>>
    tpu.enqueue_dma source(%67 : memref<1x128xf32, #tpu.memory_space<any>>) target(%68 : memref<1x128xf32, #tpu.memory_space<vmem>>) target_semaphore(%70 : memref<!tpu.dma_semaphore, #tpu.memory_space<semaphore_mem>>)
    %c5_i32 = arith.constant 5 : i32
    %71 = arith.addi %0, %c5_i32 : i32
    %72 = arith.index_cast %71 : i32 to index
    %73 = memref.load %arg1[%72] : memref<8xi32, #tpu.memory_space<smem>>
    %c5_i32_55 = arith.constant 5 : i32
    %74 = arith.addi %0, %c5_i32_55 : i32
    %75 = arith.index_cast %74 : i32 to index
    %76 = memref.load %arg2[%75] : memref<8xi32, #tpu.memory_space<smem>>
    %c0_i32_56 = arith.constant 0 : i32
    %c5_i32_57 = arith.constant 5 : i32
    %c0_i32_58 = arith.constant 0 : i32
    %77 = tpu.memref_slice %arg3[%73, %c0_i32_58] : memref<128x128xf32, #tpu.memory_space<any>> -> memref<1x128xf32, #tpu.memory_space<any>>
    %c5_i32_59 = arith.constant 5 : i32
    %c0_i32_60 = arith.constant 0 : i32
    %78 = tpu.memref_slice %arg5[%c5_i32_59, %c0_i32_60] : memref<8x128xf32, #tpu.memory_space<vmem>> -> memref<1x128xf32, #tpu.memory_space<vmem>>
    %79 = tpu.memref_slice %arg7[%c0_i32_56, %c5_i32_57] : memref<2x8x!tpu.dma_semaphore, #tpu.memory_space<semaphore_mem>> -> memref<1x1x!tpu.dma_semaphore, #tpu.memory_space<semaphore_mem>>
    %80 = tpu.memref_squeeze %79 : memref<1x1x!tpu.dma_semaphore, #tpu.memory_space<semaphore_mem>> -> memref<!tpu.dma_semaphore, #tpu.memory_space<semaphore_mem>>
    tpu.enqueue_dma source(%77 : memref<1x128xf32, #tpu.memory_space<any>>) target(%78 : memref<1x128xf32, #tpu.memory_space<vmem>>) target_semaphore(%80 : memref<!tpu.dma_semaphore, #tpu.memory_space<semaphore_mem>>)
    %c1_i32_61 = arith.constant 1 : i32
    %c5_i32_62 = arith.constant 5 : i32
    %c0_i32_63 = arith.constant 0 : i32
    %81 = tpu.memref_slice %arg3[%76, %c0_i32_63] : memref<128x128xf32, #tpu.memory_space<any>> -> memref<1x128xf32, #tpu.memory_space<any>>
    %c5_i32_64 = arith.constant 5 : i32
    %c0_i32_65 = arith.constant 0 : i32
    %82 = tpu.memref_slice %arg6[%c5_i32_64, %c0_i32_65] : memref<8x128xf32, #tpu.memory_space<vmem>> -> memref<1x128xf32, #tpu.memory_space<vmem>>
    %83 = tpu.memref_slice %arg7[%c1_i32_61, %c5_i32_62] : memref<2x8x!tpu.dma_semaphore, #tpu.memory_space<semaphore_mem>> -> memref<1x1x!tpu.dma_semaphore, #tpu.memory_space<semaphore_mem>>
    %84 = tpu.memref_squeeze %83 : memref<1x1x!tpu.dma_semaphore, #tpu.memory_space<semaphore_mem>> -> memref<!tpu.dma_semaphore, #tpu.memory_space<semaphore_mem>>
    tpu.enqueue_dma source(%81 : memref<1x128xf32, #tpu.memory_space<any>>) target(%82 : memref<1x128xf32, #tpu.memory_space<vmem>>) target_semaphore(%84 : memref<!tpu.dma_semaphore, #tpu.memory_space<semaphore_mem>>)
    %c6_i32 = arith.constant 6 : i32
    %85 = arith.addi %0, %c6_i32 : i32
    %86 = arith.index_cast %85 : i32 to index
    %87 = memref.load %arg1[%86] : memref<8xi32, #tpu.memory_space<smem>>
    %c6_i32_66 = arith.constant 6 : i32
    %88 = arith.addi %0, %c6_i32_66 : i32
    %89 = arith.index_cast %88 : i32 to index
    %90 = memref.load %arg2[%89] : memref<8xi32, #tpu.memory_space<smem>>
    %c0_i32_67 = arith.constant 0 : i32
    %c6_i32_68 = arith.constant 6 : i32
    %c0_i32_69 = arith.constant 0 : i32
    %91 = tpu.memref_slice %arg3[%87, %c0_i32_69] : memref<128x128xf32, #tpu.memory_space<any>> -> memref<1x128xf32, #tpu.memory_space<any>>
    %c6_i32_70 = arith.constant 6 : i32
    %c0_i32_71 = arith.constant 0 : i32
    %92 = tpu.memref_slice %arg5[%c6_i32_70, %c0_i32_71] : memref<8x128xf32, #tpu.memory_space<vmem>> -> memref<1x128xf32, #tpu.memory_space<vmem>>
    %93 = tpu.memref_slice %arg7[%c0_i32_67, %c6_i32_68] : memref<2x8x!tpu.dma_semaphore, #tpu.memory_space<semaphore_mem>> -> memref<1x1x!tpu.dma_semaphore, #tpu.memory_space<semaphore_mem>>
    %94 = tpu.memref_squeeze %93 : memref<1x1x!tpu.dma_semaphore, #tpu.memory_space<semaphore_mem>> -> memref<!tpu.dma_semaphore, #tpu.memory_space<semaphore_mem>>
    tpu.enqueue_dma source(%91 : memref<1x128xf32, #tpu.memory_space<any>>) target(%92 : memref<1x128xf32, #tpu.memory_space<vmem>>) target_semaphore(%94 : memref<!tpu.dma_semaphore, #tpu.memory_space<semaphore_mem>>)
    %c1_i32_72 = arith.constant 1 : i32
    %c6_i32_73 = arith.constant 6 : i32
    %c0_i32_74 = arith.constant 0 : i32
    %95 = tpu.memref_slice %arg3[%90, %c0_i32_74] : memref<128x128xf32, #tpu.memory_space<any>> -> memref<1x128xf32, #tpu.memory_space<any>>
    %c6_i32_75 = arith.constant 6 : i32
    %c0_i32_76 = arith.constant 0 : i32
    %96 = tpu.memref_slice %arg6[%c6_i32_75, %c0_i32_76] : memref<8x128xf32, #tpu.memory_space<vmem>> -> memref<1x128xf32, #tpu.memory_space<vmem>>
    %97 = tpu.memref_slice %arg7[%c1_i32_72, %c6_i32_73] : memref<2x8x!tpu.dma_semaphore, #tpu.memory_space<semaphore_mem>> -> memref<1x1x!tpu.dma_semaphore, #tpu.memory_space<semaphore_mem>>
    %98 = tpu.memref_squeeze %97 : memref<1x1x!tpu.dma_semaphore, #tpu.memory_space<semaphore_mem>> -> memref<!tpu.dma_semaphore, #tpu.memory_space<semaphore_mem>>
    tpu.enqueue_dma source(%95 : memref<1x128xf32, #tpu.memory_space<any>>) target(%96 : memref<1x128xf32, #tpu.memory_space<vmem>>) target_semaphore(%98 : memref<!tpu.dma_semaphore, #tpu.memory_space<semaphore_mem>>)
    %c7_i32 = arith.constant 7 : i32
    %99 = arith.addi %0, %c7_i32 : i32
    %100 = arith.index_cast %99 : i32 to index
    %101 = memref.load %arg1[%100] : memref<8xi32, #tpu.memory_space<smem>>
    %c7_i32_77 = arith.constant 7 : i32
    %102 = arith.addi %0, %c7_i32_77 : i32
    %103 = arith.index_cast %102 : i32 to index
    %104 = memref.load %arg2[%103] : memref<8xi32, #tpu.memory_space<smem>>
    %c0_i32_78 = arith.constant 0 : i32
    %c7_i32_79 = arith.constant 7 : i32
    %c0_i32_80 = arith.constant 0 : i32
    %105 = tpu.memref_slice %arg3[%101, %c0_i32_80] : memref<128x128xf32, #tpu.memory_space<any>> -> memref<1x128xf32, #tpu.memory_space<any>>
    %c7_i32_81 = arith.constant 7 : i32
    %c0_i32_82 = arith.constant 0 : i32
    %106 = tpu.memref_slice %arg5[%c7_i32_81, %c0_i32_82] : memref<8x128xf32, #tpu.memory_space<vmem>> -> memref<1x128xf32, #tpu.memory_space<vmem>>
    %107 = tpu.memref_slice %arg7[%c0_i32_78, %c7_i32_79] : memref<2x8x!tpu.dma_semaphore, #tpu.memory_space<semaphore_mem>> -> memref<1x1x!tpu.dma_semaphore, #tpu.memory_space<semaphore_mem>>
    %108 = tpu.memref_squeeze %107 : memref<1x1x!tpu.dma_semaphore, #tpu.memory_space<semaphore_mem>> -> memref<!tpu.dma_semaphore, #tpu.memory_space<semaphore_mem>>
    tpu.enqueue_dma source(%105 : memref<1x128xf32, #tpu.memory_space<any>>) target(%106 : memref<1x128xf32, #tpu.memory_space<vmem>>) target_semaphore(%108 : memref<!tpu.dma_semaphore, #tpu.memory_space<semaphore_mem>>)
    %c1_i32_83 = arith.constant 1 : i32
    %c7_i32_84 = arith.constant 7 : i32
    %c0_i32_85 = arith.constant 0 : i32
    %109 = tpu.memref_slice %arg3[%104, %c0_i32_85] : memref<128x128xf32, #tpu.memory_space<any>> -> memref<1x128xf32, #tpu.memory_space<any>>
    %c7_i32_86 = arith.constant 7 : i32
    %c0_i32_87 = arith.constant 0 : i32
    %110 = tpu.memref_slice %arg6[%c7_i32_86, %c0_i32_87] : memref<8x128xf32, #tpu.memory_space<vmem>> -> memref<1x128xf32, #tpu.memory_space<vmem>>
    %111 = tpu.memref_slice %arg7[%c1_i32_83, %c7_i32_84] : memref<2x8x!tpu.dma_semaphore, #tpu.memory_space<semaphore_mem>> -> memref<1x1x!tpu.dma_semaphore, #tpu.memory_space<semaphore_mem>>
    %112 = tpu.memref_squeeze %111 : memref<1x1x!tpu.dma_semaphore, #tpu.memory_space<semaphore_mem>> -> memref<!tpu.dma_semaphore, #tpu.memory_space<semaphore_mem>>
    tpu.enqueue_dma source(%109 : memref<1x128xf32, #tpu.memory_space<any>>) target(%110 : memref<1x128xf32, #tpu.memory_space<vmem>>) target_semaphore(%112 : memref<!tpu.dma_semaphore, #tpu.memory_space<semaphore_mem>>)
    %c0_i32_88 = arith.constant 0 : i32
    %c0_i32_89 = arith.constant 0 : i32
    %c0_i32_90 = arith.constant 0 : i32
    %113 = tpu.memref_slice %arg3[%3, %c0_i32_90] : memref<128x128xf32, #tpu.memory_space<any>> -> memref<1x128xf32, #tpu.memory_space<any>>
    %c0_i32_91 = arith.constant 0 : i32
    %c0_i32_92 = arith.constant 0 : i32
    %114 = tpu.memref_slice %arg5[%c0_i32_91, %c0_i32_92] : memref<8x128xf32, #tpu.memory_space<vmem>> -> memref<1x128xf32, #tpu.memory_space<vmem>>
    %115 = tpu.memref_slice %arg7[%c0_i32_88, %c0_i32_89] : memref<2x8x!tpu.dma_semaphore, #tpu.memory_space<semaphore_mem>> -> memref<1x1x!tpu.dma_semaphore, #tpu.memory_space<semaphore_mem>>
    %116 = tpu.memref_squeeze %115 : memref<1x1x!tpu.dma_semaphore, #tpu.memory_space<semaphore_mem>> -> memref<!tpu.dma_semaphore, #tpu.memory_space<semaphore_mem>>
    tpu.wait_dma2 semaphore(%116 : memref<!tpu.dma_semaphore, #tpu.memory_space<semaphore_mem>>) src(%113 : memref<1x128xf32, #tpu.memory_space<any>>) dst(%114 : memref<1x128xf32, #tpu.memory_space<vmem>>)
    %c1_i32_93 = arith.constant 1 : i32
    %c0_i32_94 = arith.constant 0 : i32
    %c0_i32_95 = arith.constant 0 : i32
    %117 = tpu.memref_slice %arg3[%6, %c0_i32_95] : memref<128x128xf32, #tpu.memory_space<any>> -> memref<1x128xf32, #tpu.memory_space<any>>
    %c0_i32_96 = arith.constant 0 : i32
    %c0_i32_97 = arith.constant 0 : i32
    %118 = tpu.memref_slice %arg6[%c0_i32_96, %c0_i32_97] : memref<8x128xf32, #tpu.memory_space<vmem>> -> memref<1x128xf32, #tpu.memory_space<vmem>>
    %119 = tpu.memref_slice %arg7[%c1_i32_93, %c0_i32_94] : memref<2x8x!tpu.dma_semaphore, #tpu.memory_space<semaphore_mem>> -> memref<1x1x!tpu.dma_semaphore, #tpu.memory_space<semaphore_mem>>
    %120 = tpu.memref_squeeze %119 : memref<1x1x!tpu.dma_semaphore, #tpu.memory_space<semaphore_mem>> -> memref<!tpu.dma_semaphore, #tpu.memory_space<semaphore_mem>>
    tpu.wait_dma2 semaphore(%120 : memref<!tpu.dma_semaphore, #tpu.memory_space<semaphore_mem>>) src(%117 : memref<1x128xf32, #tpu.memory_space<any>>) dst(%118 : memref<1x128xf32, #tpu.memory_space<vmem>>)
    %c0_i32_98 = arith.constant 0 : i32
    %c1_i32_99 = arith.constant 1 : i32
    %c0_i32_100 = arith.constant 0 : i32
    %121 = tpu.memref_slice %arg3[%17, %c0_i32_100] : memref<128x128xf32, #tpu.memory_space<any>> -> memref<1x128xf32, #tpu.memory_space<any>>
    %c1_i32_101 = arith.constant 1 : i32
    %c0_i32_102 = arith.constant 0 : i32
    %122 = tpu.memref_slice %arg5[%c1_i32_101, %c0_i32_102] : memref<8x128xf32, #tpu.memory_space<vmem>> -> memref<1x128xf32, #tpu.memory_space<vmem>>
    %123 = tpu.memref_slice %arg7[%c0_i32_98, %c1_i32_99] : memref<2x8x!tpu.dma_semaphore, #tpu.memory_space<semaphore_mem>> -> memref<1x1x!tpu.dma_semaphore, #tpu.memory_space<semaphore_mem>>
    %124 = tpu.memref_squeeze %123 : memref<1x1x!tpu.dma_semaphore, #tpu.memory_space<semaphore_mem>> -> memref<!tpu.dma_semaphore, #tpu.memory_space<semaphore_mem>>
    tpu.wait_dma2 semaphore(%124 : memref<!tpu.dma_semaphore, #tpu.memory_space<semaphore_mem>>) src(%121 : memref<1x128xf32, #tpu.memory_space<any>>) dst(%122 : memref<1x128xf32, #tpu.memory_space<vmem>>)
    %c1_i32_103 = arith.constant 1 : i32
    %c1_i32_104 = arith.constant 1 : i32
    %c0_i32_105 = arith.constant 0 : i32
    %125 = tpu.memref_slice %arg3[%20, %c0_i32_105] : memref<128x128xf32, #tpu.memory_space<any>> -> memref<1x128xf32, #tpu.memory_space<any>>
    %c1_i32_106 = arith.constant 1 : i32
    %c0_i32_107 = arith.constant 0 : i32
    %126 = tpu.memref_slice %arg6[%c1_i32_106, %c0_i32_107] : memref<8x128xf32, #tpu.memory_space<vmem>> -> memref<1x128xf32, #tpu.memory_space<vmem>>
    %127 = tpu.memref_slice %arg7[%c1_i32_103, %c1_i32_104] : memref<2x8x!tpu.dma_semaphore, #tpu.memory_space<semaphore_mem>> -> memref<1x1x!tpu.dma_semaphore, #tpu.memory_space<semaphore_mem>>
    %128 = tpu.memref_squeeze %127 : memref<1x1x!tpu.dma_semaphore, #tpu.memory_space<semaphore_mem>> -> memref<!tpu.dma_semaphore, #tpu.memory_space<semaphore_mem>>
    tpu.wait_dma2 semaphore(%128 : memref<!tpu.dma_semaphore, #tpu.memory_space<semaphore_mem>>) src(%125 : memref<1x128xf32, #tpu.memory_space<any>>) dst(%126 : memref<1x128xf32, #tpu.memory_space<vmem>>)
    %c0_i32_108 = arith.constant 0 : i32
    %c2_i32_109 = arith.constant 2 : i32
    %c0_i32_110 = arith.constant 0 : i32
    %129 = tpu.memref_slice %arg3[%31, %c0_i32_110] : memref<128x128xf32, #tpu.memory_space<any>> -> memref<1x128xf32, #tpu.memory_space<any>>
    %c2_i32_111 = arith.constant 2 : i32
    %c0_i32_112 = arith.constant 0 : i32
    %130 = tpu.memref_slice %arg5[%c2_i32_111, %c0_i32_112] : memref<8x128xf32, #tpu.memory_space<vmem>> -> memref<1x128xf32, #tpu.memory_space<vmem>>
    %131 = tpu.memref_slice %arg7[%c0_i32_108, %c2_i32_109] : memref<2x8x!tpu.dma_semaphore, #tpu.memory_space<semaphore_mem>> -> memref<1x1x!tpu.dma_semaphore, #tpu.memory_space<semaphore_mem>>
    %132 = tpu.memref_squeeze %131 : memref<1x1x!tpu.dma_semaphore, #tpu.memory_space<semaphore_mem>> -> memref<!tpu.dma_semaphore, #tpu.memory_space<semaphore_mem>>
    tpu.wait_dma2 semaphore(%132 : memref<!tpu.dma_semaphore, #tpu.memory_space<semaphore_mem>>) src(%129 : memref<1x128xf32, #tpu.memory_space<any>>) dst(%130 : memref<1x128xf32, #tpu.memory_space<vmem>>)
    %c1_i32_113 = arith.constant 1 : i32
    %c2_i32_114 = arith.constant 2 : i32
    %c0_i32_115 = arith.constant 0 : i32
    %133 = tpu.memref_slice %arg3[%34, %c0_i32_115] : memref<128x128xf32, #tpu.memory_space<any>> -> memref<1x128xf32, #tpu.memory_space<any>>
    %c2_i32_116 = arith.constant 2 : i32
    %c0_i32_117 = arith.constant 0 : i32
    %134 = tpu.memref_slice %arg6[%c2_i32_116, %c0_i32_117] : memref<8x128xf32, #tpu.memory_space<vmem>> -> memref<1x128xf32, #tpu.memory_space<vmem>>
    %135 = tpu.memref_slice %arg7[%c1_i32_113, %c2_i32_114] : memref<2x8x!tpu.dma_semaphore, #tpu.memory_space<semaphore_mem>> -> memref<1x1x!tpu.dma_semaphore, #tpu.memory_space<semaphore_mem>>
    %136 = tpu.memref_squeeze %135 : memref<1x1x!tpu.dma_semaphore, #tpu.memory_space<semaphore_mem>> -> memref<!tpu.dma_semaphore, #tpu.memory_space<semaphore_mem>>
    tpu.wait_dma2 semaphore(%136 : memref<!tpu.dma_semaphore, #tpu.memory_space<semaphore_mem>>) src(%133 : memref<1x128xf32, #tpu.memory_space<any>>) dst(%134 : memref<1x128xf32, #tpu.memory_space<vmem>>)
    %c0_i32_118 = arith.constant 0 : i32
    %c3_i32_119 = arith.constant 3 : i32
    %c0_i32_120 = arith.constant 0 : i32
    %137 = tpu.memref_slice %arg3[%45, %c0_i32_120] : memref<128x128xf32, #tpu.memory_space<any>> -> memref<1x128xf32, #tpu.memory_space<any>>
    %c3_i32_121 = arith.constant 3 : i32
    %c0_i32_122 = arith.constant 0 : i32
    %138 = tpu.memref_slice %arg5[%c3_i32_121, %c0_i32_122] : memref<8x128xf32, #tpu.memory_space<vmem>> -> memref<1x128xf32, #tpu.memory_space<vmem>>
    %139 = tpu.memref_slice %arg7[%c0_i32_118, %c3_i32_119] : memref<2x8x!tpu.dma_semaphore, #tpu.memory_space<semaphore_mem>> -> memref<1x1x!tpu.dma_semaphore, #tpu.memory_space<semaphore_mem>>
    %140 = tpu.memref_squeeze %139 : memref<1x1x!tpu.dma_semaphore, #tpu.memory_space<semaphore_mem>> -> memref<!tpu.dma_semaphore, #tpu.memory_space<semaphore_mem>>
    tpu.wait_dma2 semaphore(%140 : memref<!tpu.dma_semaphore, #tpu.memory_space<semaphore_mem>>) src(%137 : memref<1x128xf32, #tpu.memory_space<any>>) dst(%138 : memref<1x128xf32, #tpu.memory_space<vmem>>)
    %c1_i32_123 = arith.constant 1 : i32
    %c3_i32_124 = arith.constant 3 : i32
    %c0_i32_125 = arith.constant 0 : i32
    %141 = tpu.memref_slice %arg3[%48, %c0_i32_125] : memref<128x128xf32, #tpu.memory_space<any>> -> memref<1x128xf32, #tpu.memory_space<any>>
    %c3_i32_126 = arith.constant 3 : i32
    %c0_i32_127 = arith.constant 0 : i32
    %142 = tpu.memref_slice %arg6[%c3_i32_126, %c0_i32_127] : memref<8x128xf32, #tpu.memory_space<vmem>> -> memref<1x128xf32, #tpu.memory_space<vmem>>
    %143 = tpu.memref_slice %arg7[%c1_i32_123, %c3_i32_124] : memref<2x8x!tpu.dma_semaphore, #tpu.memory_space<semaphore_mem>> -> memref<1x1x!tpu.dma_semaphore, #tpu.memory_space<semaphore_mem>>
    %144 = tpu.memref_squeeze %143 : memref<1x1x!tpu.dma_semaphore, #tpu.memory_space<semaphore_mem>> -> memref<!tpu.dma_semaphore, #tpu.memory_space<semaphore_mem>>
    tpu.wait_dma2 semaphore(%144 : memref<!tpu.dma_semaphore, #tpu.memory_space<semaphore_mem>>) src(%141 : memref<1x128xf32, #tpu.memory_space<any>>) dst(%142 : memref<1x128xf32, #tpu.memory_space<vmem>>)
    %c0_i32_128 = arith.constant 0 : i32
    %c4_i32_129 = arith.constant 4 : i32
    %c0_i32_130 = arith.constant 0 : i32
    %145 = tpu.memref_slice %arg3[%59, %c0_i32_130] : memref<128x128xf32, #tpu.memory_space<any>> -> memref<1x128xf32, #tpu.memory_space<any>>
    %c4_i32_131 = arith.constant 4 : i32
    %c0_i32_132 = arith.constant 0 : i32
    %146 = tpu.memref_slice %arg5[%c4_i32_131, %c0_i32_132] : memref<8x128xf32, #tpu.memory_space<vmem>> -> memref<1x128xf32, #tpu.memory_space<vmem>>
    %147 = tpu.memref_slice %arg7[%c0_i32_128, %c4_i32_129] : memref<2x8x!tpu.dma_semaphore, #tpu.memory_space<semaphore_mem>> -> memref<1x1x!tpu.dma_semaphore, #tpu.memory_space<semaphore_mem>>
    %148 = tpu.memref_squeeze %147 : memref<1x1x!tpu.dma_semaphore, #tpu.memory_space<semaphore_mem>> -> memref<!tpu.dma_semaphore, #tpu.memory_space<semaphore_mem>>
    tpu.wait_dma2 semaphore(%148 : memref<!tpu.dma_semaphore, #tpu.memory_space<semaphore_mem>>) src(%145 : memref<1x128xf32, #tpu.memory_space<any>>) dst(%146 : memref<1x128xf32, #tpu.memory_space<vmem>>)
    %c1_i32_133 = arith.constant 1 : i32
    %c4_i32_134 = arith.constant 4 : i32
    %c0_i32_135 = arith.constant 0 : i32
    %149 = tpu.memref_slice %arg3[%62, %c0_i32_135] : memref<128x128xf32, #tpu.memory_space<any>> -> memref<1x128xf32, #tpu.memory_space<any>>
    %c4_i32_136 = arith.constant 4 : i32
    %c0_i32_137 = arith.constant 0 : i32
    %150 = tpu.memref_slice %arg6[%c4_i32_136, %c0_i32_137] : memref<8x128xf32, #tpu.memory_space<vmem>> -> memref<1x128xf32, #tpu.memory_space<vmem>>
    %151 = tpu.memref_slice %arg7[%c1_i32_133, %c4_i32_134] : memref<2x8x!tpu.dma_semaphore, #tpu.memory_space<semaphore_mem>> -> memref<1x1x!tpu.dma_semaphore, #tpu.memory_space<semaphore_mem>>
    %152 = tpu.memref_squeeze %151 : memref<1x1x!tpu.dma_semaphore, #tpu.memory_space<semaphore_mem>> -> memref<!tpu.dma_semaphore, #tpu.memory_space<semaphore_mem>>
    tpu.wait_dma2 semaphore(%152 : memref<!tpu.dma_semaphore, #tpu.memory_space<semaphore_mem>>) src(%149 : memref<1x128xf32, #tpu.memory_space<any>>) dst(%150 : memref<1x128xf32, #tpu.memory_space<vmem>>)
    %c0_i32_138 = arith.constant 0 : i32
    %c5_i32_139 = arith.constant 5 : i32
    %c0_i32_140 = arith.constant 0 : i32
    %153 = tpu.memref_slice %arg3[%73, %c0_i32_140] : memref<128x128xf32, #tpu.memory_space<any>> -> memref<1x128xf32, #tpu.memory_space<any>>
    %c5_i32_141 = arith.constant 5 : i32
    %c0_i32_142 = arith.constant 0 : i32
    %154 = tpu.memref_slice %arg5[%c5_i32_141, %c0_i32_142] : memref<8x128xf32, #tpu.memory_space<vmem>> -> memref<1x128xf32, #tpu.memory_space<vmem>>
    %155 = tpu.memref_slice %arg7[%c0_i32_138, %c5_i32_139] : memref<2x8x!tpu.dma_semaphore, #tpu.memory_space<semaphore_mem>> -> memref<1x1x!tpu.dma_semaphore, #tpu.memory_space<semaphore_mem>>
    %156 = tpu.memref_squeeze %155 : memref<1x1x!tpu.dma_semaphore, #tpu.memory_space<semaphore_mem>> -> memref<!tpu.dma_semaphore, #tpu.memory_space<semaphore_mem>>
    tpu.wait_dma2 semaphore(%156 : memref<!tpu.dma_semaphore, #tpu.memory_space<semaphore_mem>>) src(%153 : memref<1x128xf32, #tpu.memory_space<any>>) dst(%154 : memref<1x128xf32, #tpu.memory_space<vmem>>)
    %c1_i32_143 = arith.constant 1 : i32
    %c5_i32_144 = arith.constant 5 : i32
    %c0_i32_145 = arith.constant 0 : i32
    %157 = tpu.memref_slice %arg3[%76, %c0_i32_145] : memref<128x128xf32, #tpu.memory_space<any>> -> memref<1x128xf32, #tpu.memory_space<any>>
    %c5_i32_146 = arith.constant 5 : i32
    %c0_i32_147 = arith.constant 0 : i32
    %158 = tpu.memref_slice %arg6[%c5_i32_146, %c0_i32_147] : memref<8x128xf32, #tpu.memory_space<vmem>> -> memref<1x128xf32, #tpu.memory_space<vmem>>
    %159 = tpu.memref_slice %arg7[%c1_i32_143, %c5_i32_144] : memref<2x8x!tpu.dma_semaphore, #tpu.memory_space<semaphore_mem>> -> memref<1x1x!tpu.dma_semaphore, #tpu.memory_space<semaphore_mem>>
    %160 = tpu.memref_squeeze %159 : memref<1x1x!tpu.dma_semaphore, #tpu.memory_space<semaphore_mem>> -> memref<!tpu.dma_semaphore, #tpu.memory_space<semaphore_mem>>
    tpu.wait_dma2 semaphore(%160 : memref<!tpu.dma_semaphore, #tpu.memory_space<semaphore_mem>>) src(%157 : memref<1x128xf32, #tpu.memory_space<any>>) dst(%158 : memref<1x128xf32, #tpu.memory_space<vmem>>)
    %c0_i32_148 = arith.constant 0 : i32
    %c6_i32_149 = arith.constant 6 : i32
    %c0_i32_150 = arith.constant 0 : i32
    %161 = tpu.memref_slice %arg3[%87, %c0_i32_150] : memref<128x128xf32, #tpu.memory_space<any>> -> memref<1x128xf32, #tpu.memory_space<any>>
    %c6_i32_151 = arith.constant 6 : i32
    %c0_i32_152 = arith.constant 0 : i32
    %162 = tpu.memref_slice %arg5[%c6_i32_151, %c0_i32_152] : memref<8x128xf32, #tpu.memory_space<vmem>> -> memref<1x128xf32, #tpu.memory_space<vmem>>
    %163 = tpu.memref_slice %arg7[%c0_i32_148, %c6_i32_149] : memref<2x8x!tpu.dma_semaphore, #tpu.memory_space<semaphore_mem>> -> memref<1x1x!tpu.dma_semaphore, #tpu.memory_space<semaphore_mem>>
    %164 = tpu.memref_squeeze %163 : memref<1x1x!tpu.dma_semaphore, #tpu.memory_space<semaphore_mem>> -> memref<!tpu.dma_semaphore, #tpu.memory_space<semaphore_mem>>
    tpu.wait_dma2 semaphore(%164 : memref<!tpu.dma_semaphore, #tpu.memory_space<semaphore_mem>>) src(%161 : memref<1x128xf32, #tpu.memory_space<any>>) dst(%162 : memref<1x128xf32, #tpu.memory_space<vmem>>)
    %c1_i32_153 = arith.constant 1 : i32
    %c6_i32_154 = arith.constant 6 : i32
    %c0_i32_155 = arith.constant 0 : i32
    %165 = tpu.memref_slice %arg3[%90, %c0_i32_155] : memref<128x128xf32, #tpu.memory_space<any>> -> memref<1x128xf32, #tpu.memory_space<any>>
    %c6_i32_156 = arith.constant 6 : i32
    %c0_i32_157 = arith.constant 0 : i32
    %166 = tpu.memref_slice %arg6[%c6_i32_156, %c0_i32_157] : memref<8x128xf32, #tpu.memory_space<vmem>> -> memref<1x128xf32, #tpu.memory_space<vmem>>
    %167 = tpu.memref_slice %arg7[%c1_i32_153, %c6_i32_154] : memref<2x8x!tpu.dma_semaphore, #tpu.memory_space<semaphore_mem>> -> memref<1x1x!tpu.dma_semaphore, #tpu.memory_space<semaphore_mem>>
    %168 = tpu.memref_squeeze %167 : memref<1x1x!tpu.dma_semaphore, #tpu.memory_space<semaphore_mem>> -> memref<!tpu.dma_semaphore, #tpu.memory_space<semaphore_mem>>
    tpu.wait_dma2 semaphore(%168 : memref<!tpu.dma_semaphore, #tpu.memory_space<semaphore_mem>>) src(%165 : memref<1x128xf32, #tpu.memory_space<any>>) dst(%166 : memref<1x128xf32, #tpu.memory_space<vmem>>)
    %c0_i32_158 = arith.constant 0 : i32
    %c7_i32_159 = arith.constant 7 : i32
    %c0_i32_160 = arith.constant 0 : i32
    %169 = tpu.memref_slice %arg3[%101, %c0_i32_160] : memref<128x128xf32, #tpu.memory_space<any>> -> memref<1x128xf32, #tpu.memory_space<any>>
    %c7_i32_161 = arith.constant 7 : i32
    %c0_i32_162 = arith.constant 0 : i32
    %170 = tpu.memref_slice %arg5[%c7_i32_161, %c0_i32_162] : memref<8x128xf32, #tpu.memory_space<vmem>> -> memref<1x128xf32, #tpu.memory_space<vmem>>
    %171 = tpu.memref_slice %arg7[%c0_i32_158, %c7_i32_159] : memref<2x8x!tpu.dma_semaphore, #tpu.memory_space<semaphore_mem>> -> memref<1x1x!tpu.dma_semaphore, #tpu.memory_space<semaphore_mem>>
    %172 = tpu.memref_squeeze %171 : memref<1x1x!tpu.dma_semaphore, #tpu.memory_space<semaphore_mem>> -> memref<!tpu.dma_semaphore, #tpu.memory_space<semaphore_mem>>
    tpu.wait_dma2 semaphore(%172 : memref<!tpu.dma_semaphore, #tpu.memory_space<semaphore_mem>>) src(%169 : memref<1x128xf32, #tpu.memory_space<any>>) dst(%170 : memref<1x128xf32, #tpu.memory_space<vmem>>)
    %c1_i32_163 = arith.constant 1 : i32
    %c7_i32_164 = arith.constant 7 : i32
    %c0_i32_165 = arith.constant 0 : i32
    %173 = tpu.memref_slice %arg3[%104, %c0_i32_165] : memref<128x128xf32, #tpu.memory_space<any>> -> memref<1x128xf32, #tpu.memory_space<any>>
    %c7_i32_166 = arith.constant 7 : i32
    %c0_i32_167 = arith.constant 0 : i32
    %174 = tpu.memref_slice %arg6[%c7_i32_166, %c0_i32_167] : memref<8x128xf32, #tpu.memory_space<vmem>> -> memref<1x128xf32, #tpu.memory_space<vmem>>
    %175 = tpu.memref_slice %arg7[%c1_i32_163, %c7_i32_164] : memref<2x8x!tpu.dma_semaphore, #tpu.memory_space<semaphore_mem>> -> memref<1x1x!tpu.dma_semaphore, #tpu.memory_space<semaphore_mem>>
    %176 = tpu.memref_squeeze %175 : memref<1x1x!tpu.dma_semaphore, #tpu.memory_space<semaphore_mem>> -> memref<!tpu.dma_semaphore, #tpu.memory_space<semaphore_mem>>
    tpu.wait_dma2 semaphore(%176 : memref<!tpu.dma_semaphore, #tpu.memory_space<semaphore_mem>>) src(%173 : memref<1x128xf32, #tpu.memory_space<any>>) dst(%174 : memref<1x128xf32, #tpu.memory_space<vmem>>)
    %c0 = arith.constant 0 : index
    %c0_168 = arith.constant 0 : index
    %177 = vector.load %arg5[%c0, %c0_168] : memref<8x128xf32, #tpu.memory_space<vmem>>, vector<8x128xf32>
    %c0_169 = arith.constant 0 : index
    %c0_170 = arith.constant 0 : index
    %178 = vector.load %arg6[%c0_169, %c0_170] : memref<8x128xf32, #tpu.memory_space<vmem>>, vector<8x128xf32>
    %179 = arith.mulf %177, %178 : vector<8x128xf32>
    %cst = arith.constant dense<0.000000e+00> : vector<8xf32>
    %180 = vector.multi_reduction <add>, %179, %cst [1] : vector<8x128xf32> to vector<8xf32>
    %181 = vector.shape_cast %180 : vector<8xf32> to vector<8x1xf32>
    %182 = vector.shape_cast %181 : vector<8x1xf32> to vector<8x1xf32>
    %183 = vector.broadcast %182 : vector<8x1xf32> to vector<8x128xf32>
    %c0_171 = arith.constant 0 : index
    %c0_172 = arith.constant 0 : index
    %184 = vector.load %arg4[%c0_171, %c0_172] : memref<8x128xf32, #tpu.memory_space<vmem>>, vector<8x128xf32>
    tpu.vector_store %arg4[%c0_171, %c0_172], %183 {strides = array<i32>} : memref<8x128xf32, #tpu.memory_space<vmem>>, vector<8x128xf32>,
    return
  }
  func.func @transform_1(%arg0: i32, %arg1: memref<8xi32, #tpu.memory_space<smem>>, %arg2: memref<8xi32, #tpu.memory_space<smem>>) -> (i32, i32) {
    %c0_i32 = arith.constant 0 : i32
    %c0_i32_0 = arith.constant 0 : i32
    return %arg0, %c0_i32 : i32, i32
  }
}

</mosaic_0001>

<llo_original>
// kernel: eghg_forward.7
$region0: #{eghg_forward.7}
  #allocation0 [shape = 'u32[]', space=smem, size = 0x4, offset = 0x4, fixed_abs, tag = 'smem constant byte address 0x4 - core index']
  #allocation1 [shape = 'u32[144,128]{1,0:T(1,128)}', space=vmem, size = 0x12000, scoped, tag = 'internal scratch']
  #allocation2 [shape = 'f32[8,128]{1,0:T(8,128)}', space=vmem, size = 0x1000, scoped, tag = 'scratch operand']
  #allocation3 [shape = 'f32[8,128]{1,0:T(8,128)}', space=vmem, size = 0x1000, scoped, tag = 'scratch operand']
  #allocation4 [shape = 's32[16]{0}', space=sflag, size = 0x40, scoped, tag = 'scratch operand']
  #allocation5 [shape = 's32[1]{0}', space=sflag, size = 0x4, scoped, tag = 'scoped memory for eghg_forward.7']
  #allocation6 [shape = 'u8[512]{0}', space=smem, size = 0x200, scoped, tag = 'prefetched SMEM operand 0']
  #allocation7 [shape = 'u8[512]{0}', space=smem, size = 0x200, scoped, tag = 'prefetched SMEM operand 1']
  #allocation8 [shape = 's32[]', space=sflag, size = 0x4, offset = 0, fixed_abs, tag = 'sflag constant byte address 0x0 - dummy sync flag']
  #allocation9 [shape = 's32[]', space=sflag, size = 0x4, offset = 0, fixed_abs, tag = 'sflag constant byte address 0x0 - dummy sync flag']
  #allocation10 [shape = 's32[]', space=sflag, size = 0x4, offset = 0, fixed_abs, tag = 'sflag constant byte address 0x0 - dummy sync flag']
  #allocation11 [shape = 's32[]', space=sflag, size = 0x4, offset = 0, fixed_abs, tag = 'sflag constant byte address 0x0 - dummy sync flag']
  #allocation12 [shape = 's32[]', space=sflag, size = 0x4, offset = 0, fixed_abs, tag = 'sflag constant byte address 0x0 - dummy sync flag']
  #allocation13 [shape = 's32[]', space=sflag, size = 0x4, offset = 0, fixed_abs, tag = 'sflag constant byte address 0x0 - dummy sync flag']
  #allocation14 [shape = 's32[]', space=sflag, size = 0x4, offset = 0, fixed_abs, tag = 'sflag constant byte address 0x0 - dummy sync flag']
  #allocation15 [shape = 's32[]', space=sflag, size = 0x4, offset = 0, fixed_abs, tag = 'sflag constant byte address 0x0 - dummy sync flag']
  #allocation16 [shape = 's32[]', space=sflag, size = 0x4, offset = 0, fixed_abs, tag = 'sflag constant byte address 0x0 - dummy sync flag']
  #allocation17 [shape = 's32[]', space=sflag, size = 0x4, offset = 0, fixed_abs, tag = 'sflag constant byte address 0x0 - dummy sync flag']
  #allocation18 [shape = 's32[]', space=sflag, size = 0x4, offset = 0, fixed_abs, tag = 'sflag constant byte address 0x0 - dummy sync flag']
  #allocation19 [shape = 's32[]', space=sflag, size = 0x4, offset = 0, fixed_abs, tag = 'sflag constant byte address 0x0 - dummy sync flag']
  #allocation20 [shape = 's32[]', space=sflag, size = 0x4, offset = 0, fixed_abs, tag = 'sflag constant byte address 0x0 - dummy sync flag']
  #allocation21 [shape = 's32[]', space=sflag, size = 0x4, offset = 0, fixed_abs, tag = 'sflag constant byte address 0x0 - dummy sync flag']
  #allocation22 [shape = 's32[]', space=sflag, size = 0x4, offset = 0, fixed_abs, tag = 'sflag constant byte address 0x0 - dummy sync flag']
  #allocation23 [shape = 's32[]', space=sflag, size = 0x4, offset = 0, fixed_abs, tag = 'sflag constant byte address 0x0 - dummy sync flag']
  %s0 = inlined_call_operand.vmem [shape: s32[8], index: 0, kind: input, shape index: {}]
  %s1 = inlined_call_operand.vmem [shape: s32[8], index: 1, kind: input, shape index: {}]
  %s2 = inlined_call_operand.vmem [shape: f32[128,128], index: 2, kind: input, shape index: {}]
  %s3 = inlined_call_operand.vmem [shape: f32[8,128], index: 3, kind: output, shape index: {}]
  %s4 = sld [smem:[#allocation0]]
  $region490: #{eghg_forward.7} parent=0
    _
  %s6 = ssub.s32 1, %s4
  %s7 = scalar_select 0, %s6, %s4
  %s8 = sshll.u32 %s0, 4
  %s9 = int_to_ptr.vmem [resolvable:$true] %s8
  %11 = dma.vmem_to_smem %s9, 16, [#allocation6], [#allocation5]
  %s12 = sshll.u32 %s1, 4
  %s13 = int_to_ptr.vmem [resolvable:$true] %s12
  %15 = dma.vmem_to_smem %s13, 16, [#allocation7], [#allocation5]
  %16 = dma.done [#allocation5], 32
  %17 = sfence
  %s18 = smul.u32 0, 8
  %s19 = sld [smem:[#allocation6 + %s18]]
  %s20 = sld [smem:[#allocation7 + %s18]]
  %s21 = scalar_lea.vmem %s2, %s19
  %p23 = scmp.lt.u32.totalorder 1, 8
  %p24 = pneg %p23
  // Predicated region
  $region2: #{eghg_forward.7} parent=0 // pred_check
    _
  $region3: #{eghg_forward.7} parent=0 // pred_check_branch
    %26 = sbr.rel (%p23) target = $region5
  $region4: #{eghg_forward.7} parent=0 // pred_region
    %s42 = sand.u32 1, 7
    %p43 = scmp.eq.s32.totalorder %s42, 0
    %p44 = pneg %p43
    // Predicated region
    $region17: #{eghg_forward.7} parent=4 // pred_check
      _
    $region18: #{eghg_forward.7} parent=4 // pred_check_branch
      %46 = sbr.rel (%p43) target = $region20
    $region19: #{eghg_forward.7} parent=4 // pred_region
      %s47 = sand.u32 1, 7
      %s48 = ssub.s32 1, %s47
      %s49 = scalar_lea.vmem %s21, %s48
      %s50 = ssub.s32 1, %s47
      %s51 = scalar_lea.vmem [#allocation2], %s50
      %s52 = sshll.u32 1, %s47
      %s53 = ssub.s32 %s52, 1
      loop: start=0, step=1, limit=1
      $region21: #{eghg_forward.7} parent=19 // loop_pre_header
        _
      $region22: #{eghg_forward.7} parent=19 // loop_header
        %s55 = sphi 0, %s59
        %p56 = scmp.ge.s32.totalorder %s55, 1
        %s60 = sphi %s49, %s49
        %s61 = sphi %s51, %s51
      $region23: #{eghg_forward.7} parent=19 // loop_header_branch
        %58 = sbr.rel (%p56) target = $region27
      $region24: #{eghg_forward.7} parent=19 // loop_body
        %v62 = vld [vmem:[%s60] sm:%s53]
        %63 = vst [vmem:[%s61] sm:%s53] %v62
      $region25: #{eghg_forward.7} parent=19 // loop_footer
        %s59 = sadd.s32 1, %s55
      $region26: #{eghg_forward.7} parent=19 // loop_footer_branch
        %54 = sbr.rel target = $region22
      $region27: #{eghg_forward.7} parent=19 // loop_exit
        _
    $region20: #{eghg_forward.7} parent=4 // pred_fallthru
      _
  $region5: #{eghg_forward.7} parent=0 // pred_fallthru
    _
  // Predicated region
  $region6: #{eghg_forward.7} parent=0 // pred_check
    %p27 = pneg %p23
  $region7: #{eghg_forward.7} parent=0 // pred_check_branch
    %29 = sbr.rel (%p27) target = $region9
  $region8: #{eghg_forward.7} parent=0 // pred_region
    %s30 = sshll.u32 1, 1
    %s31 = ssub.s32 %s30, 1
    loop: start=0, step=1, limit=1
    $region10: #{eghg_forward.7} parent=8 // loop_pre_header
      _
    $region11: #{eghg_forward.7} parent=8 // loop_header
      %s33 = sphi 0, %s37
      %p34 = scmp.ge.s32.totalorder %s33, 1
      %s38 = sphi %s21, %s21
      %s39 = sphi [#allocation2], [#allocation2]
    $region12: #{eghg_forward.7} parent=8 // loop_header_branch
      %36 = sbr.rel (%p34) target = $region16
    $region13: #{eghg_forward.7} parent=8 // loop_body
      %v40 = vld [vmem:[%s38] sm:%s31]
      %41 = vst [vmem:[%s39] sm:%s31] %v40
    $region14: #{eghg_forward.7} parent=8 // loop_footer
      %s37 = sadd.s32 1, %s33
    $region15: #{eghg_forward.7} parent=8 // loop_footer_branch
      %32 = sbr.rel target = $region11
    $region16: #{eghg_forward.7} parent=8 // loop_exit
      _
  $region9: #{eghg_forward.7} parent=0 // pred_fallthru
    _
  // Predicated region
  $region28: #{eghg_forward.7} parent=0 // pred_check
    _
  $region29: #{eghg_forward.7} parent=0 // pred_check_branch
    %66 = sbr.rel (0) target = $region31
  $region30: #{eghg_forward.7} parent=0 // pred_region
    %67 = vsyncadd [#allocation4], 16
  $region31: #{eghg_forward.7} parent=0 // pred_fallthru
    _
  %s68 = scalar_lea.vmem %s2, %s20
  %s69 = scalar_lea.sflag [#allocation4], 8
  %p71 = scmp.lt.u32.totalorder 1, 8
  %p72 = pneg %p71
  // Predicated region
  $region32: #{eghg_forward.7} parent=0 // pred_check
    _
  $region33: #{eghg_forward.7} parent=0 // pred_check_branch
    %74 = sbr.rel (%p71) target = $region35
  $region34: #{eghg_forward.7} parent=0 // pred_region
    %s90 = sand.u32 1, 7
    %p91 = scmp.eq.s32.totalorder %s90, 0
    %p92 = pneg %p91
    // Predicated region
    $region47: #{eghg_forward.7} parent=34 // pred_check
      _
    $region48: #{eghg_forward.7} parent=34 // pred_check_branch
      %94 = sbr.rel (%p91) target = $region50
    $region49: #{eghg_forward.7} parent=34 // pred_region
      %s95 = sand.u32 1, 7
      %s96 = ssub.s32 1, %s95
      %s97 = scalar_lea.vmem %s68, %s96
      %s98 = ssub.s32 1, %s95
      %s99 = scalar_lea.vmem [#allocation3], %s98
      %s100 = sshll.u32 1, %s95
      %s101 = ssub.s32 %s100, 1
      loop: start=0, step=1, limit=1
      $region51: #{eghg_forward.7} parent=49 // loop_pre_header
        _
      $region52: #{eghg_forward.7} parent=49 // loop_header
        %s103 = sphi 0, %s107
        %p104 = scmp.ge.s32.totalorder %s103, 1
        %s108 = sphi %s97, %s97
        %s109 = sphi %s99, %s99
      $region53: #{eghg_forward.7} parent=49 // loop_header_branch
        %106 = sbr.rel (%p104) target = $region57
      $region54: #{eghg_forward.7} parent=49 // loop_body
        %v110 = vld [vmem:[%s108] sm:%s101]
        %111 = vst [vmem:[%s109] sm:%s101] %v110
      $region55: #{eghg_forward.7} parent=49 // loop_footer
        %s107 = sadd.s32 1, %s103
      $region56: #{eghg_forward.7} parent=49 // loop_footer_branch
        %102 = sbr.rel target = $region52
      $region57: #{eghg_forward.7} parent=49 // loop_exit
        _
    $region50: #{eghg_forward.7} parent=34 // pred_fallthru
      _
  $region35: #{eghg_forward.7} parent=0 // pred_fallthru
    _
  // Predicated region
  $region36: #{eghg_forward.7} parent=0 // pred_check
    %p75 = pneg %p71
  $region37: #{eghg_forward.7} parent=0 // pred_check_branch
    %77 = sbr.rel (%p75) target = $region39
  $region38: #{eghg_forward.7} parent=0 // pred_region
    %s78 = sshll.u32 1, 1
    %s79 = ssub.s32 %s78, 1
    loop: start=0, step=1, limit=1
    $region40: #{eghg_forward.7} parent=38 // loop_pre_header
      _
    $region41: #{eghg_forward.7} parent=38 // loop_header
      %s81 = sphi 0, %s85
      %p82 = scmp.ge.s32.totalorder %s81, 1
      %s86 = sphi %s68, %s68
      %s87 = sphi [#allocation3], [#allocation3]
    $region42: #{eghg_forward.7} parent=38 // loop_header_branch
      %84 = sbr.rel (%p82) target = $region46
    $region43: #{eghg_forward.7} parent=38 // loop_body
      %v88 = vld [vmem:[%s86] sm:%s79]
      %89 = vst [vmem:[%s87] sm:%s79] %v88
    $region44: #{eghg_forward.7} parent=38 // loop_footer
      %s85 = sadd.s32 1, %s81
    $region45: #{eghg_forward.7} parent=38 // loop_footer_branch
      %80 = sbr.rel target = $region41
    $region46: #{eghg_forward.7} parent=38 // loop_exit
      _
  $region39: #{eghg_forward.7} parent=0 // pred_fallthru
    _
  // Predicated region
  $region58: #{eghg_forward.7} parent=0 // pred_check
    _
  $region59: #{eghg_forward.7} parent=0 // pred_check_branch
    %114 = sbr.rel (0) target = $region61
  $region60: #{eghg_forward.7} parent=0 // pred_region
    %115 = vsyncadd %s69, 16
  $region61: #{eghg_forward.7} parent=0 // pred_fallthru
    _
  %s116 = sadd.s32 %s18, 1
  %s117 = sld [smem:[#allocation6 + %s116]]
  %s118 = sld [smem:[#allocation7 + %s116]]
  %s119 = scalar_lea.vmem %s2, %s117
  %s120 = scalar_lea.vmem [#allocation2], 1
  %s121 = scalar_lea.sflag [#allocation4], 1
  %p123 = scmp.lt.u32.totalorder 1, 8
  %p124 = pneg %p123
  // Predicated region
  $region62: #{eghg_forward.7} parent=0 // pred_check
    _
  $region63: #{eghg_forward.7} parent=0 // pred_check_branch
    %126 = sbr.rel (%p123) target = $region65
  $region64: #{eghg_forward.7} parent=0 // pred_region
    %s142 = sand.u32 1, 7
    %p143 = scmp.eq.s32.totalorder %s142, 0
    %p144 = pneg %p143
    // Predicated region
    $region77: #{eghg_forward.7} parent=64 // pred_check
      _
    $region78: #{eghg_forward.7} parent=64 // pred_check_branch
      %146 = sbr.rel (%p143) target = $region80
    $region79: #{eghg_forward.7} parent=64 // pred_region
      %s147 = sand.u32 1, 7
      %s148 = ssub.s32 1, %s147
      %s149 = scalar_lea.vmem %s119, %s148
      %s150 = ssub.s32 1, %s147
      %s151 = scalar_lea.vmem %s120, %s150 [#allocation2]
      %s152 = sshll.u32 1, %s147
      %s153 = ssub.s32 %s152, 1
      loop: start=0, step=1, limit=1
      $region81: #{eghg_forward.7} parent=79 // loop_pre_header
        _
      $region82: #{eghg_forward.7} parent=79 // loop_header
        %s155 = sphi 0, %s159
        %p156 = scmp.ge.s32.totalorder %s155, 1
        %s160 = sphi %s149, %s149
        %s161 = sphi %s151, %s151
      $region83: #{eghg_forward.7} parent=79 // loop_header_branch
        %158 = sbr.rel (%p156) target = $region87
      $region84: #{eghg_forward.7} parent=79 // loop_body
        %v162 = vld [vmem:[%s160] sm:%s153]
        %163 = vst [vmem:[%s161] sm:%s153] %v162
      $region85: #{eghg_forward.7} parent=79 // loop_footer
        %s159 = sadd.s32 1, %s155
      $region86: #{eghg_forward.7} parent=79 // loop_footer_branch
        %154 = sbr.rel target = $region82
      $region87: #{eghg_forward.7} parent=79 // loop_exit
        _
    $region80: #{eghg_forward.7} parent=64 // pred_fallthru
      _
  $region65: #{eghg_forward.7} parent=0 // pred_fallthru
    _
  // Predicated region
  $region66: #{eghg_forward.7} parent=0 // pred_check
    %p127 = pneg %p123
  $region67: #{eghg_forward.7} parent=0 // pred_check_branch
    %129 = sbr.rel (%p127) target = $region69
  $region68: #{eghg_forward.7} parent=0 // pred_region
    %s130 = sshll.u32 1, 1
    %s131 = ssub.s32 %s130, 1
    loop: start=0, step=1, limit=1
    $region70: #{eghg_forward.7} parent=68 // loop_pre_header
      _
    $region71: #{eghg_forward.7} parent=68 // loop_header
      %s133 = sphi 0, %s137
      %p134 = scmp.ge.s32.totalorder %s133, 1
      %s138 = sphi %s119, %s119
      %s139 = sphi %s120, %s120
    $region72: #{eghg_forward.7} parent=68 // loop_header_branch
      %136 = sbr.rel (%p134) target = $region76
    $region73: #{eghg_forward.7} parent=68 // loop_body
      %v140 = vld [vmem:[%s138] sm:%s131]
      %141 = vst [vmem:[%s139] sm:%s131] %v140
    $region74: #{eghg_forward.7} parent=68 // loop_footer
      %s137 = sadd.s32 1, %s133
    $region75: #{eghg_forward.7} parent=68 // loop_footer_branch
      %132 = sbr.rel target = $region71
    $region76: #{eghg_forward.7} parent=68 // loop_exit
      _
  $region69: #{eghg_forward.7} parent=0 // pred_fallthru
    _
  // Predicated region
  $region88: #{eghg_forward.7} parent=0 // pred_check
    _
  $region89: #{eghg_forward.7} parent=0 // pred_check_branch
    %166 = sbr.rel (0) target = $region91
  $region90: #{eghg_forward.7} parent=0 // pred_region
    %167 = vsyncadd %s121, 16
  $region91: #{eghg_forward.7} parent=0 // pred_fallthru
    _
  %s168 = scalar_lea.vmem %s2, %s118
  %s169 = scalar_lea.vmem [#allocation3], 1
  %s170 = scalar_lea.sflag [#allocation4], 9
  %p172 = scmp.lt.u32.totalorder 1, 8
  %p173 = pneg %p172
  // Predicated region
  $region92: #{eghg_forward.7} parent=0 // pred_check
    _
  $region93: #{eghg_forward.7} parent=0 // pred_check_branch
    %175 = sbr.rel (%p172) target = $region95
  $region94: #{eghg_forward.7} parent=0 // pred_region
    %s191 = sand.u32 1, 7
    %p192 = scmp.eq.s32.totalorder %s191, 0
    %p193 = pneg %p192
    // Predicated region
    $region107: #{eghg_forward.7} parent=94 // pred_check
      _
    $region108: #{eghg_forward.7} parent=94 // pred_check_branch
      %195 = sbr.rel (%p192) target = $region110
    $region109: #{eghg_forward.7} parent=94 // pred_region
      %s196 = sand.u32 1, 7
      %s197 = ssub.s32 1, %s196
      %s198 = scalar_lea.vmem %s168, %s197
      %s199 = ssub.s32 1, %s196
      %s200 = scalar_lea.vmem %s169, %s199 [#allocation3]
      %s201 = sshll.u32 1, %s196
      %s202 = ssub.s32 %s201, 1
      loop: start=0, step=1, limit=1
      $region111: #{eghg_forward.7} parent=109 // loop_pre_header
        _
      $region112: #{eghg_forward.7} parent=109 // loop_header
        %s204 = sphi 0, %s208
        %p205 = scmp.ge.s32.totalorder %s204, 1
        %s209 = sphi %s198, %s198
        %s210 = sphi %s200, %s200
      $region113: #{eghg_forward.7} parent=109 // loop_header_branch
        %207 = sbr.rel (%p205) target = $region117
      $region114: #{eghg_forward.7} parent=109 // loop_body
        %v211 = vld [vmem:[%s209] sm:%s202]
        %212 = vst [vmem:[%s210] sm:%s202] %v211
      $region115: #{eghg_forward.7} parent=109 // loop_footer
        %s208 = sadd.s32 1, %s204
      $region116: #{eghg_forward.7} parent=109 // loop_footer_branch
        %203 = sbr.rel target = $region112
      $region117: #{eghg_forward.7} parent=109 // loop_exit
        _
    $region110: #{eghg_forward.7} parent=94 // pred_fallthru
      _
  $region95: #{eghg_forward.7} parent=0 // pred_fallthru
    _
  // Predicated region
  $region96: #{eghg_forward.7} parent=0 // pred_check
    %p176 = pneg %p172
  $region97: #{eghg_forward.7} parent=0 // pred_check_branch
    %178 = sbr.rel (%p176) target = $region99
  $region98: #{eghg_forward.7} parent=0 // pred_region
    %s179 = sshll.u32 1, 1
    %s180 = ssub.s32 %s179, 1
    loop: start=0, step=1, limit=1
    $region100: #{eghg_forward.7} parent=98 // loop_pre_header
      _
    $region101: #{eghg_forward.7} parent=98 // loop_header
      %s182 = sphi 0, %s186
      %p183 = scmp.ge.s32.totalorder %s182, 1
      %s187 = sphi %s168, %s168
      %s188 = sphi %s169, %s169
    $region102: #{eghg_forward.7} parent=98 // loop_header_branch
      %185 = sbr.rel (%p183) target = $region106
    $region103: #{eghg_forward.7} parent=98 // loop_body
      %v189 = vld [vmem:[%s187] sm:%s180]
      %190 = vst [vmem:[%s188] sm:%s180] %v189
    $region104: #{eghg_forward.7} parent=98 // loop_footer
      %s186 = sadd.s32 1, %s182
    $region105: #{eghg_forward.7} parent=98 // loop_footer_branch
      %181 = sbr.rel target = $region101
    $region106: #{eghg_forward.7} parent=98 // loop_exit
      _
  $region99: #{eghg_forward.7} parent=0 // pred_fallthru
    _
  // Predicated region
  $region118: #{eghg_forward.7} parent=0 // pred_check
    _
  $region119: #{eghg_forward.7} parent=0 // pred_check_branch
    %215 = sbr.rel (0) target = $region121
  $region120: #{eghg_forward.7} parent=0 // pred_region
    %216 = vsyncadd %s170, 16
  $region121: #{eghg_forward.7} parent=0 // pred_fallthru
    _
  %s217 = sadd.s32 %s18, 2
  %s218 = sld [smem:[#allocation6 + %s217]]
  %s219 = sld [smem:[#allocation7 + %s217]]
  %s220 = scalar_lea.vmem %s2, %s218
  %s221 = scalar_lea.vmem [#allocation2], 2
  %s222 = scalar_lea.sflag [#allocation4], 2
  %p224 = scmp.lt.u32.totalorder 1, 8
  %p225 = pneg %p224
  // Predicated region
  $region122: #{eghg_forward.7} parent=0 // pred_check
    _
  $region123: #{eghg_forward.7} parent=0 // pred_check_branch
    %227 = sbr.rel (%p224) target = $region125
  $region124: #{eghg_forward.7} parent=0 // pred_region
    %s243 = sand.u32 1, 7
    %p244 = scmp.eq.s32.totalorder %s243, 0
    %p245 = pneg %p244
    // Predicated region
    $region137: #{eghg_forward.7} parent=124 // pred_check
      _
    $region138: #{eghg_forward.7} parent=124 // pred_check_branch
      %247 = sbr.rel (%p244) target = $region140
    $region139: #{eghg_forward.7} parent=124 // pred_region
      %s248 = sand.u32 1, 7
      %s249 = ssub.s32 1, %s248
      %s250 = scalar_lea.vmem %s220, %s249
      %s251 = ssub.s32 1, %s248
      %s252 = scalar_lea.vmem %s221, %s251 [#allocation2]
      %s253 = sshll.u32 1, %s248
      %s254 = ssub.s32 %s253, 1
      loop: start=0, step=1, limit=1
      $region141: #{eghg_forward.7} parent=139 // loop_pre_header
        _
      $region142: #{eghg_forward.7} parent=139 // loop_header
        %s256 = sphi 0, %s260
        %p257 = scmp.ge.s32.totalorder %s256, 1
        %s261 = sphi %s250, %s250
        %s262 = sphi %s252, %s252
      $region143: #{eghg_forward.7} parent=139 // loop_header_branch
        %259 = sbr.rel (%p257) target = $region147
      $region144: #{eghg_forward.7} parent=139 // loop_body
        %v263 = vld [vmem:[%s261] sm:%s254]
        %264 = vst [vmem:[%s262] sm:%s254] %v263
      $region145: #{eghg_forward.7} parent=139 // loop_footer
        %s260 = sadd.s32 1, %s256
      $region146: #{eghg_forward.7} parent=139 // loop_footer_branch
        %255 = sbr.rel target = $region142
      $region147: #{eghg_forward.7} parent=139 // loop_exit
        _
    $region140: #{eghg_forward.7} parent=124 // pred_fallthru
      _
  $region125: #{eghg_forward.7} parent=0 // pred_fallthru
    _
  // Predicated region
  $region126: #{eghg_forward.7} parent=0 // pred_check
    %p228 = pneg %p224
  $region127: #{eghg_forward.7} parent=0 // pred_check_branch
    %230 = sbr.rel (%p228) target = $region129
  $region128: #{eghg_forward.7} parent=0 // pred_region
    %s231 = sshll.u32 1, 1
    %s232 = ssub.s32 %s231, 1
    loop: start=0, step=1, limit=1
    $region130: #{eghg_forward.7} parent=128 // loop_pre_header
      _
    $region131: #{eghg_forward.7} parent=128 // loop_header
      %s234 = sphi 0, %s238
      %p235 = scmp.ge.s32.totalorder %s234, 1
      %s239 = sphi %s220, %s220
      %s240 = sphi %s221, %s221
    $region132: #{eghg_forward.7} parent=128 // loop_header_branch
      %237 = sbr.rel (%p235) target = $region136
    $region133: #{eghg_forward.7} parent=128 // loop_body
      %v241 = vld [vmem:[%s239] sm:%s232]
      %242 = vst [vmem:[%s240] sm:%s232] %v241
    $region134: #{eghg_forward.7} parent=128 // loop_footer
      %s238 = sadd.s32 1, %s234
    $region135: #{eghg_forward.7} parent=128 // loop_footer_branch
      %233 = sbr.rel target = $region131
    $region136: #{eghg_forward.7} parent=128 // loop_exit
      _
  $region129: #{eghg_forward.7} parent=0 // pred_fallthru
    _
  // Predicated region
  $region148: #{eghg_forward.7} parent=0 // pred_check
    _
  $region149: #{eghg_forward.7} parent=0 // pred_check_branch
    %267 = sbr.rel (0) target = $region151
  $region150: #{eghg_forward.7} parent=0 // pred_region
    %268 = vsyncadd %s222, 16
  $region151: #{eghg_forward.7} parent=0 // pred_fallthru
    _
  %s269 = scalar_lea.vmem %s2, %s219
  %s270 = scalar_lea.vmem [#allocation3], 2
  %s271 = scalar_lea.sflag [#allocation4], 10
  %p273 = scmp.lt.u32.totalorder 1, 8
  %p274 = pneg %p273
  // Predicated region
  $region152: #{eghg_forward.7} parent=0 // pred_check
    _
  $region153: #{eghg_forward.7} parent=0 // pred_check_branch
    %276 = sbr.rel (%p273) target = $region155
  $region154: #{eghg_forward.7} parent=0 // pred_region
    %s292 = sand.u32 1, 7
    %p293 = scmp.eq.s32.totalorder %s292, 0
    %p294 = pneg %p293
    // Predicated region
    $region167: #{eghg_forward.7} parent=154 // pred_check
      _
    $region168: #{eghg_forward.7} parent=154 // pred_check_branch
      %296 = sbr.rel (%p293) target = $region170
    $region169: #{eghg_forward.7} parent=154 // pred_region
      %s297 = sand.u32 1, 7
      %s298 = ssub.s32 1, %s297
      %s299 = scalar_lea.vmem %s269, %s298
      %s300 = ssub.s32 1, %s297
      %s301 = scalar_lea.vmem %s270, %s300 [#allocation3]
      %s302 = sshll.u32 1, %s297
      %s303 = ssub.s32 %s302, 1
      loop: start=0, step=1, limit=1
      $region171: #{eghg_forward.7} parent=169 // loop_pre_header
        _
      $region172: #{eghg_forward.7} parent=169 // loop_header
        %s305 = sphi 0, %s309
        %p306 = scmp.ge.s32.totalorder %s305, 1
        %s310 = sphi %s299, %s299
        %s311 = sphi %s301, %s301
      $region173: #{eghg_forward.7} parent=169 // loop_header_branch
        %308 = sbr.rel (%p306) target = $region177
      $region174: #{eghg_forward.7} parent=169 // loop_body
        %v312 = vld [vmem:[%s310] sm:%s303]
        %313 = vst [vmem:[%s311] sm:%s303] %v312
      $region175: #{eghg_forward.7} parent=169 // loop_footer
        %s309 = sadd.s32 1, %s305
      $region176: #{eghg_forward.7} parent=169 // loop_footer_branch
        %304 = sbr.rel target = $region172
      $region177: #{eghg_forward.7} parent=169 // loop_exit
        _
    $region170: #{eghg_forward.7} parent=154 // pred_fallthru
      _
  $region155: #{eghg_forward.7} parent=0 // pred_fallthru
    _
  // Predicated region
  $region156: #{eghg_forward.7} parent=0 // pred_check
    %p277 = pneg %p273
  $region157: #{eghg_forward.7} parent=0 // pred_check_branch
    %279 = sbr.rel (%p277) target = $region159
  $region158: #{eghg_forward.7} parent=0 // pred_region
    %s280 = sshll.u32 1, 1
    %s281 = ssub.s32 %s280, 1
    loop: start=0, step=1, limit=1
    $region160: #{eghg_forward.7} parent=158 // loop_pre_header
      _
    $region161: #{eghg_forward.7} parent=158 // loop_header
      %s283 = sphi 0, %s287
      %p284 = scmp.ge.s32.totalorder %s283, 1
      %s288 = sphi %s269, %s269
      %s289 = sphi %s270, %s270
    $region162: #{eghg_forward.7} parent=158 // loop_header_branch
      %286 = sbr.rel (%p284) target = $region166
    $region163: #{eghg_forward.7} parent=158 // loop_body
      %v290 = vld [vmem:[%s288] sm:%s281]
      %291 = vst [vmem:[%s289] sm:%s281] %v290
    $region164: #{eghg_forward.7} parent=158 // loop_footer
      %s287 = sadd.s32 1, %s283
    $region165: #{eghg_forward.7} parent=158 // loop_footer_branch
      %282 = sbr.rel target = $region161
    $region166: #{eghg_forward.7} parent=158 // loop_exit
      _
  $region159: #{eghg_forward.7} parent=0 // pred_fallthru
    _
  // Predicated region
  $region178: #{eghg_forward.7} parent=0 // pred_check
    _
  $region179: #{eghg_forward.7} parent=0 // pred_check_branch
    %316 = sbr.rel (0) target = $region181
  $region180: #{eghg_forward.7} parent=0 // pred_region
    %317 = vsyncadd %s271, 16
  $region181: #{eghg_forward.7} parent=0 // pred_fallthru
    _
  %s318 = sadd.s32 %s18, 3
  %s319 = sld [smem:[#allocation6 + %s318]]
  %s320 = sld [smem:[#allocation7 + %s318]]
  %s321 = scalar_lea.vmem %s2, %s319
  %s322 = scalar_lea.vmem [#allocation2], 3
  %s323 = scalar_lea.sflag [#allocation4], 3
  %p325 = scmp.lt.u32.totalorder 1, 8
  %p326 = pneg %p325
  // Predicated region
  $region182: #{eghg_forward.7} parent=0 // pred_check
    _
  $region183: #{eghg_forward.7} parent=0 // pred_check_branch
    %328 = sbr.rel (%p325) target = $region185
  $region184: #{eghg_forward.7} parent=0 // pred_region
    %s344 = sand.u32 1, 7
    %p345 = scmp.eq.s32.totalorder %s344, 0
    %p346 = pneg %p345
    // Predicated region
    $region197: #{eghg_forward.7} parent=184 // pred_check
      _
    $region198: #{eghg_forward.7} parent=184 // pred_check_branch
      %348 = sbr.rel (%p345) target = $region200
    $region199: #{eghg_forward.7} parent=184 // pred_region
      %s349 = sand.u32 1, 7
      %s350 = ssub.s32 1, %s349
      %s351 = scalar_lea.vmem %s321, %s350
      %s352 = ssub.s32 1, %s349
      %s353 = scalar_lea.vmem %s322, %s352 [#allocation2]
      %s354 = sshll.u32 1, %s349
      %s355 = ssub.s32 %s354, 1
      loop: start=0, step=1, limit=1
      $region201: #{eghg_forward.7} parent=199 // loop_pre_header
        _
      $region202: #{eghg_forward.7} parent=199 // loop_header
        %s357 = sphi 0, %s361
        %p358 = scmp.ge.s32.totalorder %s357, 1
        %s362 = sphi %s351, %s351
        %s363 = sphi %s353, %s353
      $region203: #{eghg_forward.7} parent=199 // loop_header_branch
        %360 = sbr.rel (%p358) target = $region207
      $region204: #{eghg_forward.7} parent=199 // loop_body
        %v364 = vld [vmem:[%s362] sm:%s355]
        %365 = vst [vmem:[%s363] sm:%s355] %v364
      $region205: #{eghg_forward.7} parent=199 // loop_footer
        %s361 = sadd.s32 1, %s357
      $region206: #{eghg_forward.7} parent=199 // loop_footer_branch
        %356 = sbr.rel target = $region202
      $region207: #{eghg_forward.7} parent=199 // loop_exit
        _
    $region200: #{eghg_forward.7} parent=184 // pred_fallthru
      _
  $region185: #{eghg_forward.7} parent=0 // pred_fallthru
    _
  // Predicated region
  $region186: #{eghg_forward.7} parent=0 // pred_check
    %p329 = pneg %p325
  $region187: #{eghg_forward.7} parent=0 // pred_check_branch
    %331 = sbr.rel (%p329) target = $region189
  $region188: #{eghg_forward.7} parent=0 // pred_region
    %s332 = sshll.u32 1, 1
    %s333 = ssub.s32 %s332, 1
    loop: start=0, step=1, limit=1
    $region190: #{eghg_forward.7} parent=188 // loop_pre_header
      _
    $region191: #{eghg_forward.7} parent=188 // loop_header
      %s335 = sphi 0, %s339
      %p336 = scmp.ge.s32.totalorder %s335, 1
      %s340 = sphi %s321, %s321
      %s341 = sphi %s322, %s322
    $region192: #{eghg_forward.7} parent=188 // loop_header_branch
      %338 = sbr.rel (%p336) target = $region196
    $region193: #{eghg_forward.7} parent=188 // loop_body
      %v342 = vld [vmem:[%s340] sm:%s333]
      %343 = vst [vmem:[%s341] sm:%s333] %v342
    $region194: #{eghg_forward.7} parent=188 // loop_footer
      %s339 = sadd.s32 1, %s335
    $region195: #{eghg_forward.7} parent=188 // loop_footer_branch
      %334 = sbr.rel target = $region191
    $region196: #{eghg_forward.7} parent=188 // loop_exit
      _
  $region189: #{eghg_forward.7} parent=0 // pred_fallthru
    _
  // Predicated region
  $region208: #{eghg_forward.7} parent=0 // pred_check
    _
  $region209: #{eghg_forward.7} parent=0 // pred_check_branch
    %368 = sbr.rel (0) target = $region211
  $region210: #{eghg_forward.7} parent=0 // pred_region
    %369 = vsyncadd %s323, 16
  $region211: #{eghg_forward.7} parent=0 // pred_fallthru
    _
  %s370 = scalar_lea.vmem %s2, %s320
  %s371 = scalar_lea.vmem [#allocation3], 3
  %s372 = scalar_lea.sflag [#allocation4], 11
  %p374 = scmp.lt.u32.totalorder 1, 8
  %p375 = pneg %p374
  // Predicated region
  $region212: #{eghg_forward.7} parent=0 // pred_check
    _
  $region213: #{eghg_forward.7} parent=0 // pred_check_branch
    %377 = sbr.rel (%p374) target = $region215
  $region214: #{eghg_forward.7} parent=0 // pred_region
    %s393 = sand.u32 1, 7
    %p394 = scmp.eq.s32.totalorder %s393, 0
    %p395 = pneg %p394
    // Predicated region
    $region227: #{eghg_forward.7} parent=214 // pred_check
      _
    $region228: #{eghg_forward.7} parent=214 // pred_check_branch
      %397 = sbr.rel (%p394) target = $region230
    $region229: #{eghg_forward.7} parent=214 // pred_region
      %s398 = sand.u32 1, 7
      %s399 = ssub.s32 1, %s398
      %s400 = scalar_lea.vmem %s370, %s399
      %s401 = ssub.s32 1, %s398
      %s402 = scalar_lea.vmem %s371, %s401 [#allocation3]
      %s403 = sshll.u32 1, %s398
      %s404 = ssub.s32 %s403, 1
      loop: start=0, step=1, limit=1
      $region231: #{eghg_forward.7} parent=229 // loop_pre_header
        _
      $region232: #{eghg_forward.7} parent=229 // loop_header
        %s406 = sphi 0, %s410
        %p407 = scmp.ge.s32.totalorder %s406, 1
        %s411 = sphi %s400, %s400
        %s412 = sphi %s402, %s402
      $region233: #{eghg_forward.7} parent=229 // loop_header_branch
        %409 = sbr.rel (%p407) target = $region237
      $region234: #{eghg_forward.7} parent=229 // loop_body
        %v413 = vld [vmem:[%s411] sm:%s404]
        %414 = vst [vmem:[%s412] sm:%s404] %v413
      $region235: #{eghg_forward.7} parent=229 // loop_footer
        %s410 = sadd.s32 1, %s406
      $region236: #{eghg_forward.7} parent=229 // loop_footer_branch
        %405 = sbr.rel target = $region232
      $region237: #{eghg_forward.7} parent=229 // loop_exit
        _
    $region230: #{eghg_forward.7} parent=214 // pred_fallthru
      _
  $region215: #{eghg_forward.7} parent=0 // pred_fallthru
    _
  // Predicated region
  $region216: #{eghg_forward.7} parent=0 // pred_check
    %p378 = pneg %p374
  $region217: #{eghg_forward.7} parent=0 // pred_check_branch
    %380 = sbr.rel (%p378) target = $region219
  $region218: #{eghg_forward.7} parent=0 // pred_region
    %s381 = sshll.u32 1, 1
    %s382 = ssub.s32 %s381, 1
    loop: start=0, step=1, limit=1
    $region220: #{eghg_forward.7} parent=218 // loop_pre_header
      _
    $region221: #{eghg_forward.7} parent=218 // loop_header
      %s384 = sphi 0, %s388
      %p385 = scmp.ge.s32.totalorder %s384, 1
      %s389 = sphi %s370, %s370
      %s390 = sphi %s371, %s371
    $region222: #{eghg_forward.7} parent=218 // loop_header_branch
      %387 = sbr.rel (%p385) target = $region226
    $region223: #{eghg_forward.7} parent=218 // loop_body
      %v391 = vld [vmem:[%s389] sm:%s382]
      %392 = vst [vmem:[%s390] sm:%s382] %v391
    $region224: #{eghg_forward.7} parent=218 // loop_footer
      %s388 = sadd.s32 1, %s384
    $region225: #{eghg_forward.7} parent=218 // loop_footer_branch
      %383 = sbr.rel target = $region221
    $region226: #{eghg_forward.7} parent=218 // loop_exit
      _
  $region219: #{eghg_forward.7} parent=0 // pred_fallthru
    _
  // Predicated region
  $region238: #{eghg_forward.7} parent=0 // pred_check
    _
  $region239: #{eghg_forward.7} parent=0 // pred_check_branch
    %417 = sbr.rel (0) target = $region241
  $region240: #{eghg_forward.7} parent=0 // pred_region
    %418 = vsyncadd %s372, 16
  $region241: #{eghg_forward.7} parent=0 // pred_fallthru
    _
  %s419 = sadd.s32 %s18, 4
  %s420 = sld [smem:[#allocation6 + %s419]]
  %s421 = sld [smem:[#allocation7 + %s419]]
  %s422 = scalar_lea.vmem %s2, %s420
  %s423 = scalar_lea.vmem [#allocation2], 4
  %s424 = scalar_lea.sflag [#allocation4], 4
  %p426 = scmp.lt.u32.totalorder 1, 8
  %p427 = pneg %p426
  // Predicated region
  $region242: #{eghg_forward.7} parent=0 // pred_check
    _
  $region243: #{eghg_forward.7} parent=0 // pred_check_branch
    %429 = sbr.rel (%p426) target = $region245
  $region244: #{eghg_forward.7} parent=0 // pred_region
    %s445 = sand.u32 1, 7
    %p446 = scmp.eq.s32.totalorder %s445, 0
    %p447 = pneg %p446
    // Predicated region
    $region257: #{eghg_forward.7} parent=244 // pred_check
      _
    $region258: #{eghg_forward.7} parent=244 // pred_check_branch
      %449 = sbr.rel (%p446) target = $region260
    $region259: #{eghg_forward.7} parent=244 // pred_region
      %s450 = sand.u32 1, 7
      %s451 = ssub.s32 1, %s450
      %s452 = scalar_lea.vmem %s422, %s451
      %s453 = ssub.s32 1, %s450
      %s454 = scalar_lea.vmem %s423, %s453 [#allocation2]
      %s455 = sshll.u32 1, %s450
      %s456 = ssub.s32 %s455, 1
      loop: start=0, step=1, limit=1
      $region261: #{eghg_forward.7} parent=259 // loop_pre_header
        _
      $region262: #{eghg_forward.7} parent=259 // loop_header
        %s458 = sphi 0, %s462
        %p459 = scmp.ge.s32.totalorder %s458, 1
        %s463 = sphi %s452, %s452
        %s464 = sphi %s454, %s454
      $region263: #{eghg_forward.7} parent=259 // loop_header_branch
        %461 = sbr.rel (%p459) target = $region267
      $region264: #{eghg_forward.7} parent=259 // loop_body
        %v465 = vld [vmem:[%s463] sm:%s456]
        %466 = vst [vmem:[%s464] sm:%s456] %v465
      $region265: #{eghg_forward.7} parent=259 // loop_footer
        %s462 = sadd.s32 1, %s458
      $region266: #{eghg_forward.7} parent=259 // loop_footer_branch
        %457 = sbr.rel target = $region262
      $region267: #{eghg_forward.7} parent=259 // loop_exit
        _
    $region260: #{eghg_forward.7} parent=244 // pred_fallthru
      _
  $region245: #{eghg_forward.7} parent=0 // pred_fallthru
    _
  // Predicated region
  $region246: #{eghg_forward.7} parent=0 // pred_check
    %p430 = pneg %p426
  $region247: #{eghg_forward.7} parent=0 // pred_check_branch
    %432 = sbr.rel (%p430) target = $region249
  $region248: #{eghg_forward.7} parent=0 // pred_region
    %s433 = sshll.u32 1, 1
    %s434 = ssub.s32 %s433, 1
    loop: start=0, step=1, limit=1
    $region250: #{eghg_forward.7} parent=248 // loop_pre_header
      _
    $region251: #{eghg_forward.7} parent=248 // loop_header
      %s436 = sphi 0, %s440
      %p437 = scmp.ge.s32.totalorder %s436, 1
      %s441 = sphi %s422, %s422
      %s442 = sphi %s423, %s423
    $region252: #{eghg_forward.7} parent=248 // loop_header_branch
      %439 = sbr.rel (%p437) target = $region256
    $region253: #{eghg_forward.7} parent=248 // loop_body
      %v443 = vld [vmem:[%s441] sm:%s434]
      %444 = vst [vmem:[%s442] sm:%s434] %v443
    $region254: #{eghg_forward.7} parent=248 // loop_footer
      %s440 = sadd.s32 1, %s436
    $region255: #{eghg_forward.7} parent=248 // loop_footer_branch
      %435 = sbr.rel target = $region251
    $region256: #{eghg_forward.7} parent=248 // loop_exit
      _
  $region249: #{eghg_forward.7} parent=0 // pred_fallthru
    _
  // Predicated region
  $region268: #{eghg_forward.7} parent=0 // pred_check
    _
  $region269: #{eghg_forward.7} parent=0 // pred_check_branch
    %469 = sbr.rel (0) target = $region271
  $region270: #{eghg_forward.7} parent=0 // pred_region
    %470 = vsyncadd %s424, 16
  $region271: #{eghg_forward.7} parent=0 // pred_fallthru
    _
  %s471 = scalar_lea.vmem %s2, %s421
  %s472 = scalar_lea.vmem [#allocation3], 4
  %s473 = scalar_lea.sflag [#allocation4], 12
  %p475 = scmp.lt.u32.totalorder 1, 8
  %p476 = pneg %p475
  // Predicated region
  $region272: #{eghg_forward.7} parent=0 // pred_check
    _
  $region273: #{eghg_forward.7} parent=0 // pred_check_branch
    %478 = sbr.rel (%p475) target = $region275
  $region274: #{eghg_forward.7} parent=0 // pred_region
    %s494 = sand.u32 1, 7
    %p495 = scmp.eq.s32.totalorder %s494, 0
    %p496 = pneg %p495
    // Predicated region
    $region287: #{eghg_forward.7} parent=274 // pred_check
      _
    $region288: #{eghg_forward.7} parent=274 // pred_check_branch
      %498 = sbr.rel (%p495) target = $region290
    $region289: #{eghg_forward.7} parent=274 // pred_region
      %s499 = sand.u32 1, 7
      %s500 = ssub.s32 1, %s499
      %s501 = scalar_lea.vmem %s471, %s500
      %s502 = ssub.s32 1, %s499
      %s503 = scalar_lea.vmem %s472, %s502 [#allocation3]
      %s504 = sshll.u32 1, %s499
      %s505 = ssub.s32 %s504, 1
      loop: start=0, step=1, limit=1
      $region291: #{eghg_forward.7} parent=289 // loop_pre_header
        _
      $region292: #{eghg_forward.7} parent=289 // loop_header
        %s507 = sphi 0, %s511
        %p508 = scmp.ge.s32.totalorder %s507, 1
        %s512 = sphi %s501, %s501
        %s513 = sphi %s503, %s503
      $region293: #{eghg_forward.7} parent=289 // loop_header_branch
        %510 = sbr.rel (%p508) target = $region297
      $region294: #{eghg_forward.7} parent=289 // loop_body
        %v514 = vld [vmem:[%s512] sm:%s505]
        %515 = vst [vmem:[%s513] sm:%s505] %v514
      $region295: #{eghg_forward.7} parent=289 // loop_footer
        %s511 = sadd.s32 1, %s507
      $region296: #{eghg_forward.7} parent=289 // loop_footer_branch
        %506 = sbr.rel target = $region292
      $region297: #{eghg_forward.7} parent=289 // loop_exit
        _
    $region290: #{eghg_forward.7} parent=274 // pred_fallthru
      _
  $region275: #{eghg_forward.7} parent=0 // pred_fallthru
    _
  // Predicated region
  $region276: #{eghg_forward.7} parent=0 // pred_check
    %p479 = pneg %p475
  $region277: #{eghg_forward.7} parent=0 // pred_check_branch
    %481 = sbr.rel (%p479) target = $region279
  $region278: #{eghg_forward.7} parent=0 // pred_region
    %s482 = sshll.u32 1, 1
    %s483 = ssub.s32 %s482, 1
    loop: start=0, step=1, limit=1
    $region280: #{eghg_forward.7} parent=278 // loop_pre_header
      _
    $region281: #{eghg_forward.7} parent=278 // loop_header
      %s485 = sphi 0, %s489
      %p486 = scmp.ge.s32.totalorder %s485, 1
      %s490 = sphi %s471, %s471
      %s491 = sphi %s472, %s472
    $region282: #{eghg_forward.7} parent=278 // loop_header_branch
      %488 = sbr.rel (%p486) target = $region286
    $region283: #{eghg_forward.7} parent=278 // loop_body
      %v492 = vld [vmem:[%s490] sm:%s483]
      %493 = vst [vmem:[%s491] sm:%s483] %v492
    $region284: #{eghg_forward.7} parent=278 // loop_footer
      %s489 = sadd.s32 1, %s485
    $region285: #{eghg_forward.7} parent=278 // loop_footer_branch
      %484 = sbr.rel target = $region281
    $region286: #{eghg_forward.7} parent=278 // loop_exit
      _
  $region279: #{eghg_forward.7} parent=0 // pred_fallthru
    _
  // Predicated region
  $region298: #{eghg_forward.7} parent=0 // pred_check
    _
  $region299: #{eghg_forward.7} parent=0 // pred_check_branch
    %518 = sbr.rel (0) target = $region301
  $region300: #{eghg_forward.7} parent=0 // pred_region
    %519 = vsyncadd %s473, 16
  $region301: #{eghg_forward.7} parent=0 // pred_fallthru
    _
  %s520 = sadd.s32 %s18, 5
  %s521 = sld [smem:[#allocation6 + %s520]]
  %s522 = sld [smem:[#allocation7 + %s520]]
  %s523 = scalar_lea.vmem %s2, %s521
  %s524 = scalar_lea.vmem [#allocation2], 5
  %s525 = scalar_lea.sflag [#allocation4], 5
  %p527 = scmp.lt.u32.totalorder 1, 8
  %p528 = pneg %p527
  // Predicated region
  $region302: #{eghg_forward.7} parent=0 // pred_check
    _
  $region303: #{eghg_forward.7} parent=0 // pred_check_branch
    %530 = sbr.rel (%p527) target = $region305
  $region304: #{eghg_forward.7} parent=0 // pred_region
    %s546 = sand.u32 1, 7
    %p547 = scmp.eq.s32.totalorder %s546, 0
    %p548 = pneg %p547
    // Predicated region
    $region317: #{eghg_forward.7} parent=304 // pred_check
      _
    $region318: #{eghg_forward.7} parent=304 // pred_check_branch
      %550 = sbr.rel (%p547) target = $region320
    $region319: #{eghg_forward.7} parent=304 // pred_region
      %s551 = sand.u32 1, 7
      %s552 = ssub.s32 1, %s551
      %s553 = scalar_lea.vmem %s523, %s552
      %s554 = ssub.s32 1, %s551
      %s555 = scalar_lea.vmem %s524, %s554 [#allocation2]
      %s556 = sshll.u32 1, %s551
      %s557 = ssub.s32 %s556, 1
      loop: start=0, step=1, limit=1
      $region321: #{eghg_forward.7} parent=319 // loop_pre_header
        _
      $region322: #{eghg_forward.7} parent=319 // loop_header
        %s559 = sphi 0, %s563
        %p560 = scmp.ge.s32.totalorder %s559, 1
        %s564 = sphi %s553, %s553
        %s565 = sphi %s555, %s555
      $region323: #{eghg_forward.7} parent=319 // loop_header_branch
        %562 = sbr.rel (%p560) target = $region327
      $region324: #{eghg_forward.7} parent=319 // loop_body
        %v566 = vld [vmem:[%s564] sm:%s557]
        %567 = vst [vmem:[%s565] sm:%s557] %v566
      $region325: #{eghg_forward.7} parent=319 // loop_footer
        %s563 = sadd.s32 1, %s559
      $region326: #{eghg_forward.7} parent=319 // loop_footer_branch
        %558 = sbr.rel target = $region322
      $region327: #{eghg_forward.7} parent=319 // loop_exit
        _
    $region320: #{eghg_forward.7} parent=304 // pred_fallthru
      _
  $region305: #{eghg_forward.7} parent=0 // pred_fallthru
    _
  // Predicated region
  $region306: #{eghg_forward.7} parent=0 // pred_check
    %p531 = pneg %p527
  $region307: #{eghg_forward.7} parent=0 // pred_check_branch
    %533 = sbr.rel (%p531) target = $region309
  $region308: #{eghg_forward.7} parent=0 // pred_region
    %s534 = sshll.u32 1, 1
    %s535 = ssub.s32 %s534, 1
    loop: start=0, step=1, limit=1
    $region310: #{eghg_forward.7} parent=308 // loop_pre_header
      _
    $region311: #{eghg_forward.7} parent=308 // loop_header
      %s537 = sphi 0, %s541
      %p538 = scmp.ge.s32.totalorder %s537, 1
      %s542 = sphi %s523, %s523
      %s543 = sphi %s524, %s524
    $region312: #{eghg_forward.7} parent=308 // loop_header_branch
      %540 = sbr.rel (%p538) target = $region316
    $region313: #{eghg_forward.7} parent=308 // loop_body
      %v544 = vld [vmem:[%s542] sm:%s535]
      %545 = vst [vmem:[%s543] sm:%s535] %v544
    $region314: #{eghg_forward.7} parent=308 // loop_footer
      %s541 = sadd.s32 1, %s537
    $region315: #{eghg_forward.7} parent=308 // loop_footer_branch
      %536 = sbr.rel target = $region311
    $region316: #{eghg_forward.7} parent=308 // loop_exit
      _
  $region309: #{eghg_forward.7} parent=0 // pred_fallthru
    _
  // Predicated region
  $region328: #{eghg_forward.7} parent=0 // pred_check
    _
  $region329: #{eghg_forward.7} parent=0 // pred_check_branch
    %570 = sbr.rel (0) target = $region331
  $region330: #{eghg_forward.7} parent=0 // pred_region
    %571 = vsyncadd %s525, 16
  $region331: #{eghg_forward.7} parent=0 // pred_fallthru
    _
  %s572 = scalar_lea.vmem %s2, %s522
  %s573 = scalar_lea.vmem [#allocation3], 5
  %s574 = scalar_lea.sflag [#allocation4], 13
  %p576 = scmp.lt.u32.totalorder 1, 8
  %p577 = pneg %p576
  // Predicated region
  $region332: #{eghg_forward.7} parent=0 // pred_check
    _
  $region333: #{eghg_forward.7} parent=0 // pred_check_branch
    %579 = sbr.rel (%p576) target = $region335
  $region334: #{eghg_forward.7} parent=0 // pred_region
    %s595 = sand.u32 1, 7
    %p596 = scmp.eq.s32.totalorder %s595, 0
    %p597 = pneg %p596
    // Predicated region
    $region347: #{eghg_forward.7} parent=334 // pred_check
      _
    $region348: #{eghg_forward.7} parent=334 // pred_check_branch
      %599 = sbr.rel (%p596) target = $region350
    $region349: #{eghg_forward.7} parent=334 // pred_region
      %s600 = sand.u32 1, 7
      %s601 = ssub.s32 1, %s600
      %s602 = scalar_lea.vmem %s572, %s601
      %s603 = ssub.s32 1, %s600
      %s604 = scalar_lea.vmem %s573, %s603 [#allocation3]
      %s605 = sshll.u32 1, %s600
      %s606 = ssub.s32 %s605, 1
      loop: start=0, step=1, limit=1
      $region351: #{eghg_forward.7} parent=349 // loop_pre_header
        _
      $region352: #{eghg_forward.7} parent=349 // loop_header
        %s608 = sphi 0, %s612
        %p609 = scmp.ge.s32.totalorder %s608, 1
        %s613 = sphi %s602, %s602
        %s614 = sphi %s604, %s604
      $region353: #{eghg_forward.7} parent=349 // loop_header_branch
        %611 = sbr.rel (%p609) target = $region357
      $region354: #{eghg_forward.7} parent=349 // loop_body
        %v615 = vld [vmem:[%s613] sm:%s606]
        %616 = vst [vmem:[%s614] sm:%s606] %v615
      $region355: #{eghg_forward.7} parent=349 // loop_footer
        %s612 = sadd.s32 1, %s608
      $region356: #{eghg_forward.7} parent=349 // loop_footer_branch
        %607 = sbr.rel target = $region352
      $region357: #{eghg_forward.7} parent=349 // loop_exit
        _
    $region350: #{eghg_forward.7} parent=334 // pred_fallthru
      _
  $region335: #{eghg_forward.7} parent=0 // pred_fallthru
    _
  // Predicated region
  $region336: #{eghg_forward.7} parent=0 // pred_check
    %p580 = pneg %p576
  $region337: #{eghg_forward.7} parent=0 // pred_check_branch
    %582 = sbr.rel (%p580) target = $region339
  $region338: #{eghg_forward.7} parent=0 // pred_region
    %s583 = sshll.u32 1, 1
    %s584 = ssub.s32 %s583, 1
    loop: start=0, step=1, limit=1
    $region340: #{eghg_forward.7} parent=338 // loop_pre_header
      _
    $region341: #{eghg_forward.7} parent=338 // loop_header
      %s586 = sphi 0, %s590
      %p587 = scmp.ge.s32.totalorder %s586, 1
      %s591 = sphi %s572, %s572
      %s592 = sphi %s573, %s573
    $region342: #{eghg_forward.7} parent=338 // loop_header_branch
      %589 = sbr.rel (%p587) target = $region346
    $region343: #{eghg_forward.7} parent=338 // loop_body
      %v593 = vld [vmem:[%s591] sm:%s584]
      %594 = vst [vmem:[%s592] sm:%s584] %v593
    $region344: #{eghg_forward.7} parent=338 // loop_footer
      %s590 = sadd.s32 1, %s586
    $region345: #{eghg_forward.7} parent=338 // loop_footer_branch
      %585 = sbr.rel target = $region341
    $region346: #{eghg_forward.7} parent=338 // loop_exit
      _
  $region339: #{eghg_forward.7} parent=0 // pred_fallthru
    _
  // Predicated region
  $region358: #{eghg_forward.7} parent=0 // pred_check
    _
  $region359: #{eghg_forward.7} parent=0 // pred_check_branch
    %619 = sbr.rel (0) target = $region361
  $region360: #{eghg_forward.7} parent=0 // pred_region
    %620 = vsyncadd %s574, 16
  $region361: #{eghg_forward.7} parent=0 // pred_fallthru
    _
  %s621 = sadd.s32 %s18, 6
  %s622 = sld [smem:[#allocation6 + %s621]]
  %s623 = sld [smem:[#allocation7 + %s621]]
  %s624 = scalar_lea.vmem %s2, %s622
  %s625 = scalar_lea.vmem [#allocation2], 6
  %s626 = scalar_lea.sflag [#allocation4], 6
  %p628 = scmp.lt.u32.totalorder 1, 8
  %p629 = pneg %p628
  // Predicated region
  $region362: #{eghg_forward.7} parent=0 // pred_check
    _
  $region363: #{eghg_forward.7} parent=0 // pred_check_branch
    %631 = sbr.rel (%p628) target = $region365
  $region364: #{eghg_forward.7} parent=0 // pred_region
    %s647 = sand.u32 1, 7
    %p648 = scmp.eq.s32.totalorder %s647, 0
    %p649 = pneg %p648
    // Predicated region
    $region377: #{eghg_forward.7} parent=364 // pred_check
      _
    $region378: #{eghg_forward.7} parent=364 // pred_check_branch
      %651 = sbr.rel (%p648) target = $region380
    $region379: #{eghg_forward.7} parent=364 // pred_region
      %s652 = sand.u32 1, 7
      %s653 = ssub.s32 1, %s652
      %s654 = scalar_lea.vmem %s624, %s653
      %s655 = ssub.s32 1, %s652
      %s656 = scalar_lea.vmem %s625, %s655 [#allocation2]
      %s657 = sshll.u32 1, %s652
      %s658 = ssub.s32 %s657, 1
      loop: start=0, step=1, limit=1
      $region381: #{eghg_forward.7} parent=379 // loop_pre_header
        _
      $region382: #{eghg_forward.7} parent=379 // loop_header
        %s660 = sphi 0, %s664
        %p661 = scmp.ge.s32.totalorder %s660, 1
        %s665 = sphi %s654, %s654
        %s666 = sphi %s656, %s656
      $region383: #{eghg_forward.7} parent=379 // loop_header_branch
        %663 = sbr.rel (%p661) target = $region387
      $region384: #{eghg_forward.7} parent=379 // loop_body
        %v667 = vld [vmem:[%s665] sm:%s658]
        %668 = vst [vmem:[%s666] sm:%s658] %v667
      $region385: #{eghg_forward.7} parent=379 // loop_footer
        %s664 = sadd.s32 1, %s660
      $region386: #{eghg_forward.7} parent=379 // loop_footer_branch
        %659 = sbr.rel target = $region382
      $region387: #{eghg_forward.7} parent=379 // loop_exit
        _
    $region380: #{eghg_forward.7} parent=364 // pred_fallthru
      _
  $region365: #{eghg_forward.7} parent=0 // pred_fallthru
    _
  // Predicated region
  $region366: #{eghg_forward.7} parent=0 // pred_check
    %p632 = pneg %p628
  $region367: #{eghg_forward.7} parent=0 // pred_check_branch
    %634 = sbr.rel (%p632) target = $region369
  $region368: #{eghg_forward.7} parent=0 // pred_region
    %s635 = sshll.u32 1, 1
    %s636 = ssub.s32 %s635, 1
    loop: start=0, step=1, limit=1
    $region370: #{eghg_forward.7} parent=368 // loop_pre_header
      _
    $region371: #{eghg_forward.7} parent=368 // loop_header
      %s638 = sphi 0, %s642
      %p639 = scmp.ge.s32.totalorder %s638, 1
      %s643 = sphi %s624, %s624
      %s644 = sphi %s625, %s625
    $region372: #{eghg_forward.7} parent=368 // loop_header_branch
      %641 = sbr.rel (%p639) target = $region376
    $region373: #{eghg_forward.7} parent=368 // loop_body
      %v645 = vld [vmem:[%s643] sm:%s636]
      %646 = vst [vmem:[%s644] sm:%s636] %v645
    $region374: #{eghg_forward.7} parent=368 // loop_footer
      %s642 = sadd.s32 1, %s638
    $region375: #{eghg_forward.7} parent=368 // loop_footer_branch
      %637 = sbr.rel target = $region371
    $region376: #{eghg_forward.7} parent=368 // loop_exit
      _
  $region369: #{eghg_forward.7} parent=0 // pred_fallthru
    _
  // Predicated region
  $region388: #{eghg_forward.7} parent=0 // pred_check
    _
  $region389: #{eghg_forward.7} parent=0 // pred_check_branch
    %671 = sbr.rel (0) target = $region391
  $region390: #{eghg_forward.7} parent=0 // pred_region
    %672 = vsyncadd %s626, 16
  $region391: #{eghg_forward.7} parent=0 // pred_fallthru
    _
  %s673 = scalar_lea.vmem %s2, %s623
  %s674 = scalar_lea.vmem [#allocation3], 6
  %s675 = scalar_lea.sflag [#allocation4], 14
  %p677 = scmp.lt.u32.totalorder 1, 8
  %p678 = pneg %p677
  // Predicated region
  $region392: #{eghg_forward.7} parent=0 // pred_check
    _
  $region393: #{eghg_forward.7} parent=0 // pred_check_branch
    %680 = sbr.rel (%p677) target = $region395
  $region394: #{eghg_forward.7} parent=0 // pred_region
    %s696 = sand.u32 1, 7
    %p697 = scmp.eq.s32.totalorder %s696, 0
    %p698 = pneg %p697
    // Predicated region
    $region407: #{eghg_forward.7} parent=394 // pred_check
      _
    $region408: #{eghg_forward.7} parent=394 // pred_check_branch
      %700 = sbr.rel (%p697) target = $region410
    $region409: #{eghg_forward.7} parent=394 // pred_region
      %s701 = sand.u32 1, 7
      %s702 = ssub.s32 1, %s701
      %s703 = scalar_lea.vmem %s673, %s702
      %s704 = ssub.s32 1, %s701
      %s705 = scalar_lea.vmem %s674, %s704 [#allocation3]
      %s706 = sshll.u32 1, %s701
      %s707 = ssub.s32 %s706, 1
      loop: start=0, step=1, limit=1
      $region411: #{eghg_forward.7} parent=409 // loop_pre_header
        _
      $region412: #{eghg_forward.7} parent=409 // loop_header
        %s709 = sphi 0, %s713
        %p710 = scmp.ge.s32.totalorder %s709, 1
        %s714 = sphi %s703, %s703
        %s715 = sphi %s705, %s705
      $region413: #{eghg_forward.7} parent=409 // loop_header_branch
        %712 = sbr.rel (%p710) target = $region417
      $region414: #{eghg_forward.7} parent=409 // loop_body
        %v716 = vld [vmem:[%s714] sm:%s707]
        %717 = vst [vmem:[%s715] sm:%s707] %v716
      $region415: #{eghg_forward.7} parent=409 // loop_footer
        %s713 = sadd.s32 1, %s709
      $region416: #{eghg_forward.7} parent=409 // loop_footer_branch
        %708 = sbr.rel target = $region412
      $region417: #{eghg_forward.7} parent=409 // loop_exit
        _
    $region410: #{eghg_forward.7} parent=394 // pred_fallthru
      _
  $region395: #{eghg_forward.7} parent=0 // pred_fallthru
    _
  // Predicated region
  $region396: #{eghg_forward.7} parent=0 // pred_check
    %p681 = pneg %p677
  $region397: #{eghg_forward.7} parent=0 // pred_check_branch
    %683 = sbr.rel (%p681) target = $region399
  $region398: #{eghg_forward.7} parent=0 // pred_region
    %s684 = sshll.u32 1, 1
    %s685 = ssub.s32 %s684, 1
    loop: start=0, step=1, limit=1
    $region400: #{eghg_forward.7} parent=398 // loop_pre_header
      _
    $region401: #{eghg_forward.7} parent=398 // loop_header
      %s687 = sphi 0, %s691
      %p688 = scmp.ge.s32.totalorder %s687, 1
      %s692 = sphi %s673, %s673
      %s693 = sphi %s674, %s674
    $region402: #{eghg_forward.7} parent=398 // loop_header_branch
      %690 = sbr.rel (%p688) target = $region406
    $region403: #{eghg_forward.7} parent=398 // loop_body
      %v694 = vld [vmem:[%s692] sm:%s685]
      %695 = vst [vmem:[%s693] sm:%s685] %v694
    $region404: #{eghg_forward.7} parent=398 // loop_footer
      %s691 = sadd.s32 1, %s687
    $region405: #{eghg_forward.7} parent=398 // loop_footer_branch
      %686 = sbr.rel target = $region401
    $region406: #{eghg_forward.7} parent=398 // loop_exit
      _
  $region399: #{eghg_forward.7} parent=0 // pred_fallthru
    _
  // Predicated region
  $region418: #{eghg_forward.7} parent=0 // pred_check
    _
  $region419: #{eghg_forward.7} parent=0 // pred_check_branch
    %720 = sbr.rel (0) target = $region421
  $region420: #{eghg_forward.7} parent=0 // pred_region
    %721 = vsyncadd %s675, 16
  $region421: #{eghg_forward.7} parent=0 // pred_fallthru
    _
  %s722 = sadd.s32 %s18, 7
  %s723 = sld [smem:[#allocation6 + %s722]]
  %s724 = sld [smem:[#allocation7 + %s722]]
  %s725 = scalar_lea.vmem %s2, %s723
  %s726 = scalar_lea.vmem [#allocation2], 7
  %s727 = scalar_lea.sflag [#allocation4], 7
  %p729 = scmp.lt.u32.totalorder 1, 8
  %p730 = pneg %p729
  // Predicated region
  $region422: #{eghg_forward.7} parent=0 // pred_check
    _
  $region423: #{eghg_forward.7} parent=0 // pred_check_branch
    %732 = sbr.rel (%p729) target = $region425
  $region424: #{eghg_forward.7} parent=0 // pred_region
    %s748 = sand.u32 1, 7
    %p749 = scmp.eq.s32.totalorder %s748, 0
    %p750 = pneg %p749
    // Predicated region
    $region437: #{eghg_forward.7} parent=424 // pred_check
      _
    $region438: #{eghg_forward.7} parent=424 // pred_check_branch
      %752 = sbr.rel (%p749) target = $region440
    $region439: #{eghg_forward.7} parent=424 // pred_region
      %s753 = sand.u32 1, 7
      %s754 = ssub.s32 1, %s753
      %s755 = scalar_lea.vmem %s725, %s754
      %s756 = ssub.s32 1, %s753
      %s757 = scalar_lea.vmem %s726, %s756 [#allocation2]
      %s758 = sshll.u32 1, %s753
      %s759 = ssub.s32 %s758, 1
      loop: start=0, step=1, limit=1
      $region441: #{eghg_forward.7} parent=439 // loop_pre_header
        _
      $region442: #{eghg_forward.7} parent=439 // loop_header
        %s761 = sphi 0, %s765
        %p762 = scmp.ge.s32.totalorder %s761, 1
        %s766 = sphi %s755, %s755
        %s767 = sphi %s757, %s757
      $region443: #{eghg_forward.7} parent=439 // loop_header_branch
        %764 = sbr.rel (%p762) target = $region447
      $region444: #{eghg_forward.7} parent=439 // loop_body
        %v768 = vld [vmem:[%s766] sm:%s759]
        %769 = vst [vmem:[%s767] sm:%s759] %v768
      $region445: #{eghg_forward.7} parent=439 // loop_footer
        %s765 = sadd.s32 1, %s761
      $region446: #{eghg_forward.7} parent=439 // loop_footer_branch
        %760 = sbr.rel target = $region442
      $region447: #{eghg_forward.7} parent=439 // loop_exit
        _
    $region440: #{eghg_forward.7} parent=424 // pred_fallthru
      _
  $region425: #{eghg_forward.7} parent=0 // pred_fallthru
    _
  // Predicated region
  $region426: #{eghg_forward.7} parent=0 // pred_check
    %p733 = pneg %p729
  $region427: #{eghg_forward.7} parent=0 // pred_check_branch
    %735 = sbr.rel (%p733) target = $region429
  $region428: #{eghg_forward.7} parent=0 // pred_region
    %s736 = sshll.u32 1, 1
    %s737 = ssub.s32 %s736, 1
    loop: start=0, step=1, limit=1
    $region430: #{eghg_forward.7} parent=428 // loop_pre_header
      _
    $region431: #{eghg_forward.7} parent=428 // loop_header
      %s739 = sphi 0, %s743
      %p740 = scmp.ge.s32.totalorder %s739, 1
      %s744 = sphi %s725, %s725
      %s745 = sphi %s726, %s726
    $region432: #{eghg_forward.7} parent=428 // loop_header_branch
      %742 = sbr.rel (%p740) target = $region436
    $region433: #{eghg_forward.7} parent=428 // loop_body
      %v746 = vld [vmem:[%s744] sm:%s737]
      %747 = vst [vmem:[%s745] sm:%s737] %v746
    $region434: #{eghg_forward.7} parent=428 // loop_footer
      %s743 = sadd.s32 1, %s739
    $region435: #{eghg_forward.7} parent=428 // loop_footer_branch
      %738 = sbr.rel target = $region431
    $region436: #{eghg_forward.7} parent=428 // loop_exit
      _
  $region429: #{eghg_forward.7} parent=0 // pred_fallthru
    _
  // Predicated region
  $region448: #{eghg_forward.7} parent=0 // pred_check
    _
  $region449: #{eghg_forward.7} parent=0 // pred_check_branch
    %772 = sbr.rel (0) target = $region451
  $region450: #{eghg_forward.7} parent=0 // pred_region
    %773 = vsyncadd %s727, 16
  $region451: #{eghg_forward.7} parent=0 // pred_fallthru
    _
  %s774 = scalar_lea.vmem %s2, %s724
  %s775 = scalar_lea.vmem [#allocation3], 7
  %s776 = scalar_lea.sflag [#allocation4], 15
  %p778 = scmp.lt.u32.totalorder 1, 8
  %p779 = pneg %p778
  // Predicated region
  $region452: #{eghg_forward.7} parent=0 // pred_check
    _
  $region453: #{eghg_forward.7} parent=0 // pred_check_branch
    %781 = sbr.rel (%p778) target = $region455
  $region454: #{eghg_forward.7} parent=0 // pred_region
    %s797 = sand.u32 1, 7
    %p798 = scmp.eq.s32.totalorder %s797, 0
    %p799 = pneg %p798
    // Predicated region
    $region467: #{eghg_forward.7} parent=454 // pred_check
      _
    $region468: #{eghg_forward.7} parent=454 // pred_check_branch
      %801 = sbr.rel (%p798) target = $region470
    $region469: #{eghg_forward.7} parent=454 // pred_region
      %s802 = sand.u32 1, 7
      %s803 = ssub.s32 1, %s802
      %s804 = scalar_lea.vmem %s774, %s803
      %s805 = ssub.s32 1, %s802
      %s806 = scalar_lea.vmem %s775, %s805 [#allocation3]
      %s807 = sshll.u32 1, %s802
      %s808 = ssub.s32 %s807, 1
      loop: start=0, step=1, limit=1
      $region471: #{eghg_forward.7} parent=469 // loop_pre_header
        _
      $region472: #{eghg_forward.7} parent=469 // loop_header
        %s810 = sphi 0, %s814
        %p811 = scmp.ge.s32.totalorder %s810, 1
        %s815 = sphi %s804, %s804
        %s816 = sphi %s806, %s806
      $region473: #{eghg_forward.7} parent=469 // loop_header_branch
        %813 = sbr.rel (%p811) target = $region477
      $region474: #{eghg_forward.7} parent=469 // loop_body
        %v817 = vld [vmem:[%s815] sm:%s808]
        %818 = vst [vmem:[%s816] sm:%s808] %v817
      $region475: #{eghg_forward.7} parent=469 // loop_footer
        %s814 = sadd.s32 1, %s810
      $region476: #{eghg_forward.7} parent=469 // loop_footer_branch
        %809 = sbr.rel target = $region472
      $region477: #{eghg_forward.7} parent=469 // loop_exit
        _
    $region470: #{eghg_forward.7} parent=454 // pred_fallthru
      _
  $region455: #{eghg_forward.7} parent=0 // pred_fallthru
    _
  // Predicated region
  $region456: #{eghg_forward.7} parent=0 // pred_check
    %p782 = pneg %p778
  $region457: #{eghg_forward.7} parent=0 // pred_check_branch
    %784 = sbr.rel (%p782) target = $region459
  $region458: #{eghg_forward.7} parent=0 // pred_region
    %s785 = sshll.u32 1, 1
    %s786 = ssub.s32 %s785, 1
    loop: start=0, step=1, limit=1
    $region460: #{eghg_forward.7} parent=458 // loop_pre_header
      _
    $region461: #{eghg_forward.7} parent=458 // loop_header
      %s788 = sphi 0, %s792
      %p789 = scmp.ge.s32.totalorder %s788, 1
      %s793 = sphi %s774, %s774
      %s794 = sphi %s775, %s775
    $region462: #{eghg_forward.7} parent=458 // loop_header_branch
      %791 = sbr.rel (%p789) target = $region466
    $region463: #{eghg_forward.7} parent=458 // loop_body
      %v795 = vld [vmem:[%s793] sm:%s786]
      %796 = vst [vmem:[%s794] sm:%s786] %v795
    $region464: #{eghg_forward.7} parent=458 // loop_footer
      %s792 = sadd.s32 1, %s788
    $region465: #{eghg_forward.7} parent=458 // loop_footer_branch
      %787 = sbr.rel target = $region461
    $region466: #{eghg_forward.7} parent=458 // loop_exit
      _
  $region459: #{eghg_forward.7} parent=0 // pred_fallthru
    _
  // Predicated region
  $region478: #{eghg_forward.7} parent=0 // pred_check
    _
  $region479: #{eghg_forward.7} parent=0 // pred_check_branch
    %821 = sbr.rel (0) target = $region481
  $region480: #{eghg_forward.7} parent=0 // pred_region
    %822 = vsyncadd %s776, 16
  $region481: #{eghg_forward.7} parent=0 // pred_fallthru
    _
  %s823 = smul.u32 1, 1
  %s824 = sshll.u32 %s823, 4
  %825 = dma.done [#allocation4], %s824
  %s826 = sshll.u32 %s823, 4
  %827 = dma.done %s69, %s826
  %s828 = sshll.u32 %s823, 4
  %829 = dma.done %s121, %s828
  %s830 = sshll.u32 %s823, 4
  %831 = dma.done %s170, %s830
  %s832 = sshll.u32 %s823, 4
  %833 = dma.done %s222, %s832
  %s834 = sshll.u32 %s823, 4
  %835 = dma.done %s271, %s834
  %s836 = sshll.u32 %s823, 4
  %837 = dma.done %s323, %s836
  %s838 = sshll.u32 %s823, 4
  %839 = dma.done %s372, %s838
  %s840 = sshll.u32 %s823, 4
  %841 = dma.done %s424, %s840
  %s842 = sshll.u32 %s823, 4
  %843 = dma.done %s473, %s842
  %s844 = sshll.u32 %s823, 4
  %845 = dma.done %s525, %s844
  %s846 = sshll.u32 %s823, 4
  %847 = dma.done %s574, %s846
  %s848 = sshll.u32 %s823, 4
  %849 = dma.done %s626, %s848
  %s850 = sshll.u32 %s823, 4
  %851 = dma.done %s675, %s850
  %s852 = sshll.u32 %s823, 4
  %853 = dma.done %s727, %s852
  %s854 = sshll.u32 %s823, 4
  %855 = dma.done %s776, %s854
  %v856 = vld [vmem:[#allocation2] sm:$0xff]
  %v857 = vld [vmem:[#allocation3] sm:$0xff]
  %v858 = vmul.f32 %v856, %v857
  %859 = vadd.xlane.f32.xlu0 %v858
  %v860 = vpop.xlane.xlu0 %859
  %861 = vst [vmem:[%s3] sm:$0xff] %v860
  // Predicated region
  $region482: #{eghg_forward.7} parent=0 // pred_check
    _
  $region483: #{eghg_forward.7} parent=0 // pred_check_branch
    %863 = sbr.rel (0) target = $region485
  $region484: #{eghg_forward.7} parent=0 // pred_region
    _
  $region485: #{eghg_forward.7} parent=0 // pred_fallthru
    _
  // Predicated region
  $region486: #{eghg_forward.7} parent=0 // pred_check
    _
  $region487: #{eghg_forward.7} parent=0 // pred_check_branch
    %865 = sbr.rel (0) target = $region489
  $region488: #{eghg_forward.7} parent=0 // pred_region
    _
  $region489: #{eghg_forward.7} parent=0 // pred_fallthru
    _
  %866 = vsyncmov [#allocation4]
  %s867 = vpop.sfrf %866
  %p868 = scmp.eq.s32.totalorder %s867, 0
  %p869 = pneg %p868
  %871 = shalt.err (%p869)
  %s872 = scalar_lea.sflag [#allocation4], 1
  %873 = vsyncmov %s872
  %s874 = vpop.sfrf %873
  %p875 = scmp.eq.s32.totalorder %s874, 0
  %p876 = pneg %p875
  %878 = shalt.err (%p876)
  %s879 = scalar_lea.sflag [#allocation4], 2
  %880 = vsyncmov %s879
  %s881 = vpop.sfrf %880
  %p882 = scmp.eq.s32.totalorder %s881, 0
  %p883 = pneg %p882
  %885 = shalt.err (%p883)
  %s886 = scalar_lea.sflag [#allocation4], 3
  %887 = vsyncmov %s886
  %s888 = vpop.sfrf %887
  %p889 = scmp.eq.s32.totalorder %s888, 0
  %p890 = pneg %p889
  %892 = shalt.err (%p890)
  %s893 = scalar_lea.sflag [#allocation4], 4
  %894 = vsyncmov %s893
  %s895 = vpop.sfrf %894
  %p896 = scmp.eq.s32.totalorder %s895, 0
  %p897 = pneg %p896
  %899 = shalt.err (%p897)
  %s900 = scalar_lea.sflag [#allocation4], 5
  %901 = vsyncmov %s900
  %s902 = vpop.sfrf %901
  %p903 = scmp.eq.s32.totalorder %s902, 0
  %p904 = pneg %p903
  %906 = shalt.err (%p904)
  %s907 = scalar_lea.sflag [#allocation4], 6
  %908 = vsyncmov %s907
  %s909 = vpop.sfrf %908
  %p910 = scmp.eq.s32.totalorder %s909, 0
  %p911 = pneg %p910
  %913 = shalt.err (%p911)
  %s914 = scalar_lea.sflag [#allocation4], 7
  %915 = vsyncmov %s914
  %s916 = vpop.sfrf %915
  %p917 = scmp.eq.s32.totalorder %s916, 0
  %p918 = pneg %p917
  %920 = shalt.err (%p918)
  %s921 = scalar_lea.sflag [#allocation4], 8
  %922 = vsyncmov %s921
  %s923 = vpop.sfrf %922
  %p924 = scmp.eq.s32.totalorder %s923, 0
  %p925 = pneg %p924
  %927 = shalt.err (%p925)
  %s928 = scalar_lea.sflag [#allocation4], 9
  %929 = vsyncmov %s928
  %s930 = vpop.sfrf %929
  %p931 = scmp.eq.s32.totalorder %s930, 0
  %p932 = pneg %p931
  %934 = shalt.err (%p932)
  %s935 = scalar_lea.sflag [#allocation4], 10
  %936 = vsyncmov %s935
  %s937 = vpop.sfrf %936
  %p938 = scmp.eq.s32.totalorder %s937, 0
  %p939 = pneg %p938
  %941 = shalt.err (%p939)
  %s942 = scalar_lea.sflag [#allocation4], 11
  %943 = vsyncmov %s942
  %s944 = vpop.sfrf %943
  %p945 = scmp.eq.s32.totalorder %s944, 0
  %p946 = pneg %p945
  %948 = shalt.err (%p946)
  %s949 = scalar_lea.sflag [#allocation4], 12
  %950 = vsyncmov %s949
  %s951 = vpop.sfrf %950
  %p952 = scmp.eq.s32.totalorder %s951, 0
  %p953 = pneg %p952
  %955 = shalt.err (%p953)
  %s956 = scalar_lea.sflag [#allocation4], 13
  %957 = vsyncmov %s956
  %s958 = vpop.sfrf %957
  %p959 = scmp.eq.s32.totalorder %s958, 0
  %p960 = pneg %p959
  %962 = shalt.err (%p960)
  %s963 = scalar_lea.sflag [#allocation4], 14
  %964 = vsyncmov %s963
  %s965 = vpop.sfrf %964
  %p966 = scmp.eq.s32.totalorder %s965, 0
  %p967 = pneg %p966
  %969 = shalt.err (%p967)
  %s970 = scalar_lea.sflag [#allocation4], 15
  %971 = vsyncmov %s970
  %s972 = vpop.sfrf %971
  %p973 = scmp.eq.s32.totalorder %s972, 0
  %p974 = pneg %p973
  %976 = shalt.err (%p974)

// kernel: eghg_forward.4
$region0: #{eghg_forward.4}
  #allocation0 [shape = 'u32[]', space=smem, size = 0x4, offset = 0x4, fixed_abs, tag = 'smem constant byte address 0x4 - core index']
  #allocation1 [shape = 'u32[144,128]{1,0:T(1,128)}', space=vmem, size = 0x12000, scoped, tag = 'internal scratch']
  #allocation2 [shape = 'f32[128,128]{1,0:T(8,128)}', space=vmem, size = 0x10000, scoped, tag = 'scratch operand']
  #allocation3 [shape = 's32[1]{0}', space=sflag, size = 0x4, scoped, tag = 'scoped memory for eghg_forward.4']
  #allocation4 [shape = 's32[1,1]{1,0:T(1,128)S(6)}', space=smem, size = 0x200, scoped, tag = 'prefetched SMEM operand 0']
  #allocation5 [shape = 's32[1]{0:T(128)S(6)}', space=smem, size = 0x200, scoped, tag = 'prefetched SMEM operand 1']
  %s0 = inlined_call_operand.<no memory space> [shape: s32[1,1], index: 0, kind: input, shape index: {}]
  %s1 = inlined_call_operand.<no memory space> [shape: s32[1], index: 1, kind: input, shape index: {}]
  %s2 = inlined_call_operand.vmem [shape: bf16[128,128], index: 2, kind: input, shape index: {}]
  %s3 = inlined_call_operand.vmem [shape: bf16[128,128], index: 3, kind: input, shape index: {}]
  %s4 = inlined_call_operand.vmem [shape: f32[128,128], index: 4, kind: input, shape index: {}]
  %s5 = inlined_call_operand.vmem [shape: bf16[128,128], index: 5, kind: output, shape index: {0}]
  %s6 = inlined_call_operand.vmem [shape: f32[128,128], index: 6, kind: output, shape index: {1}]
  %7 = xla_tuple %s5, %s6
  %s8 = sld [smem:[#allocation0]]
  $region42: #{eghg_forward.4} parent=0
    _
  %s10 = ssub.s32 1, %s8
  %s11 = scalar_select 0, %s10, %s8
  %12 = sst [smem:[#allocation4]] %s0
  %13 = sst [smem:[#allocation5]] %s1
  // Predicated region
  $region2: #{eghg_forward.4} parent=0 // pred_check
    _
  $region3: #{eghg_forward.4} parent=0 // pred_check_branch
    %15 = sbr.rel (0) target = $region5
  $region4: #{eghg_forward.4} parent=0 // pred_region
    %s16 = sadd.s32 0, 0
    %s17 = smul.u32 %s16, 128
    %s18 = sadd.s32 %s17, 0
    %s19 = sld [smem:[#allocation4 + %s18]]
    %p20 = scmp.lt.s32.totalorder %s19, 0
    %s21 = scalar_select %p20, %s19, 0
    %s22 = smul.addr %s21, 4
    %s23 = scalar_lea.vmem %s2, %s22
    %s24 = sadd.s32 0, 0
    %s25 = smul.u32 %s24, 128
    %s26 = sadd.s32 %s25, 0
    %s27 = sld [smem:[#allocation4 + %s26]]
  $region5: #{eghg_forward.4} parent=0 // pred_fallthru
    _
  // Predicated region
  $region6: #{eghg_forward.4} parent=0 // pred_check
    _
  $region7: #{eghg_forward.4} parent=0 // pred_check_branch
    %29 = sbr.rel (0) target = $region9
  $region8: #{eghg_forward.4} parent=0 // pred_region
    %s30 = sadd.s32 0, 0
    %s31 = smul.u32 %s30, 128
    %s32 = sadd.s32 %s31, 0
    %s33 = sld [smem:[#allocation4 + %s32]]
    %s34 = smul.u32 16, %s33
    %p35 = scmp.lt.s32.totalorder %s34, 15
    %s36 = scalar_select %p35, %s34, 15
    %s37 = smul.addr %s36, 4
    %s38 = scalar_lea.vmem %s3, %s37
    %s39 = sadd.s32 0, 0
    %s40 = smul.u32 %s39, 128
    %s41 = sadd.s32 %s40, 0
    %s42 = sld [smem:[#allocation4 + %s41]]
    %s43 = smul.u32 16, %s42
  $region9: #{eghg_forward.4} parent=0 // pred_fallthru
    _
  // Predicated region
  $region10: #{eghg_forward.4} parent=0 // pred_check
    _
  $region11: #{eghg_forward.4} parent=0 // pred_check_branch
    %45 = sbr.rel (0) target = $region13
  $region12: #{eghg_forward.4} parent=0 // pred_region
    _
  $region13: #{eghg_forward.4} parent=0 // pred_fallthru
    _
  %s46 = sadd.s32 0, 0
  %s47 = smul.u32 %s46, 128
  %s48 = sadd.s32 %s47, 0
  %s49 = sld [smem:[#allocation4 + %s48]]
  %p50 = scmp.lt.s32.totalorder %s49, 0
  %s51 = scalar_select %p50, %s49, 0
  %s52 = smul.addr %s51, 4
  %s53 = scalar_lea.vmem %s2, %s52
  %s54 = sadd.s32 0, 0
  %s55 = smul.u32 %s54, 128
  %s56 = sadd.s32 %s55, 0
  %s57 = sld [smem:[#allocation4 + %s56]]
  %s58 = smul.u32 16, %s57
  %p59 = scmp.lt.s32.totalorder %s58, 15
  %s60 = scalar_select %p59, %s58, 15
  %s61 = smul.addr %s60, 4
  %s62 = scalar_lea.vmem %s3, %s61
  %s63 = sadd.s32 0, 0
  %s64 = smul.u32 %s63, 128
  %s65 = sadd.s32 %s64, 0
  %s66 = sld [smem:[#allocation4 + %s65]]
  %p67 = scmp.lt.s32.totalorder %s66, 0
  %s68 = scalar_select %p67, %s66, 0
  %s69 = smul.addr %s68, 4
  %s70 = scalar_lea.vmem %s2, %s69
  %s71 = sadd.s32 0, 0
  %s72 = smul.u32 %s71, 128
  %s73 = sadd.s32 %s72, 0
  %s74 = sld [smem:[#allocation4 + %s73]]
  %s75 = sadd.s32 0, 0
  %s76 = smul.u32 %s75, 128
  %s77 = sadd.s32 %s76, 0
  %s78 = sld [smem:[#allocation4 + %s77]]
  %s79 = smul.u32 16, %s78
  %p80 = scmp.lt.s32.totalorder %s79, 15
  %s81 = scalar_select %p80, %s79, 15
  %s82 = smul.addr %s81, 4
  %s83 = scalar_lea.vmem %s3, %s82
  %s84 = sadd.s32 0, 0
  %s85 = smul.u32 %s84, 128
  %s86 = sadd.s32 %s85, 0
  %s87 = sld [smem:[#allocation4 + %s86]]
  %s88 = smul.u32 16, %s87
  %p90 = scmp.eq.s32.totalorder 0, 0
  // Predicated region
  $region14: #{eghg_forward.4} parent=0 // pred_check
    %p91 = pneg %p90
  $region15: #{eghg_forward.4} parent=0 // pred_check_branch
    %93 = sbr.rel (%p91) target = $region17
  $region16: #{eghg_forward.4} parent=0 // pred_region
    %94 = vst [vmem:[#allocation2] sm:$0xff] 0.0
    %95 = vst [vmem:[#allocation2 + $0x8] sm:$0xff] 0.0
    %96 = vst [vmem:[#allocation2 + $0x10] sm:$0xff] 0.0
    %97 = vst [vmem:[#allocation2 + $0x18] sm:$0xff] 0.0
    %98 = vst [vmem:[#allocation2 + $0x20] sm:$0xff] 0.0
    %99 = vst [vmem:[#allocation2 + $0x28] sm:$0xff] 0.0
    %100 = vst [vmem:[#allocation2 + $0x30] sm:$0xff] 0.0
    %101 = vst [vmem:[#allocation2 + $0x38] sm:$0xff] 0.0
    %102 = vst [vmem:[#allocation2 + $0x40] sm:$0xff] 0.0
    %103 = vst [vmem:[#allocation2 + $0x48] sm:$0xff] 0.0
    %104 = vst [vmem:[#allocation2 + $0x50] sm:$0xff] 0.0
    %105 = vst [vmem:[#allocation2 + $0x58] sm:$0xff] 0.0
    %106 = vst [vmem:[#allocation2 + $0x60] sm:$0xff] 0.0
    %107 = vst [vmem:[#allocation2 + $0x68] sm:$0xff] 0.0
    %108 = vst [vmem:[#allocation2 + $0x70] sm:$0xff] 0.0
    %109 = vst [vmem:[#allocation2 + $0x78] sm:$0xff] 0.0
  $region17: #{eghg_forward.4} parent=0 // pred_fallthru
    _
  %s110 = sld [smem:[#allocation5]]
  %p111 = scmp.lt.s32.totalorder 0, %s110
  // Predicated region
  $region18: #{eghg_forward.4} parent=0 // pred_check
    %p112 = pneg %p111
  $region19: #{eghg_forward.4} parent=0 // pred_check_branch
    %114 = sbr.rel (%p112) target = $region21
  $region20: #{eghg_forward.4} parent=0 // pred_region
    %v115 = vld [vmem:[#allocation2] sm:$0xff]
    %v116 = vld [vmem:[#allocation2 + $0x8] sm:$0xff]
    %v117 = vld [vmem:[#allocation2 + $0x10] sm:$0xff]
    %v118 = vld [vmem:[#allocation2 + $0x18] sm:$0xff]
    %v119 = vld [vmem:[#allocation2 + $0x20] sm:$0xff]
    %v120 = vld [vmem:[#allocation2 + $0x28] sm:$0xff]
    %v121 = vld [vmem:[#allocation2 + $0x30] sm:$0xff]
    %v122 = vld [vmem:[#allocation2 + $0x38] sm:$0xff]
    %v123 = vld [vmem:[#allocation2 + $0x40] sm:$0xff]
    %v124 = vld [vmem:[#allocation2 + $0x48] sm:$0xff]
    %v125 = vld [vmem:[#allocation2 + $0x50] sm:$0xff]
    %v126 = vld [vmem:[#allocation2 + $0x58] sm:$0xff]
    %v127 = vld [vmem:[#allocation2 + $0x60] sm:$0xff]
    %v128 = vld [vmem:[#allocation2 + $0x68] sm:$0xff]
    %v129 = vld [vmem:[#allocation2 + $0x70] sm:$0xff]
    %v130 = vld [vmem:[#allocation2 + $0x78] sm:$0xff]
    %v131 = vld [vmem:[%s70] sm:$0xf]
    %v132 = vld [vmem:[%s70 + $0x4] sm:$0xf]
    %v133 = vld [vmem:[%s70 + $0x8] sm:$0xf]
    %v134 = vld [vmem:[%s70 + $0xc] sm:$0xf]
    %v135 = vld [vmem:[%s70 + $0x10] sm:$0xf]
    %v136 = vld [vmem:[%s70 + $0x14] sm:$0xf]
    %v137 = vld [vmem:[%s70 + $0x18] sm:$0xf]
    %v138 = vld [vmem:[%s70 + $0x1c] sm:$0xf]
    %v139 = vld [vmem:[%s70 + $0x20] sm:$0xf]
    %v140 = vld [vmem:[%s70 + $0x24] sm:$0xf]
    %v141 = vld [vmem:[%s70 + $0x28] sm:$0xf]
    %v142 = vld [vmem:[%s70 + $0x2c] sm:$0xf]
    %v143 = vld [vmem:[%s70 + $0x30] sm:$0xf]
    %v144 = vld [vmem:[%s70 + $0x34] sm:$0xf]
    %v145 = vld [vmem:[%s70 + $0x38] sm:$0xf]
    %v146 = vld [vmem:[%s70 + $0x3c] sm:$0xf]
    %v147 = vld [vmem:[%s83] sm:$0xf]
    %v148 = vld [vmem:[%s83 + $0x4] sm:$0xf]
    %v149 = vld [vmem:[%s83 + $0x8] sm:$0xf]
    %v150 = vld [vmem:[%s83 + $0xc] sm:$0xf]
    %v151 = vld [vmem:[%s83 + $0x10] sm:$0xf]
    %v152 = vld [vmem:[%s83 + $0x14] sm:$0xf]
    %v153 = vld [vmem:[%s83 + $0x18] sm:$0xf]
    %v154 = vld [vmem:[%s83 + $0x1c] sm:$0xf]
    %v155 = vld [vmem:[%s83 + $0x20] sm:$0xf]
    %v156 = vld [vmem:[%s83 + $0x24] sm:$0xf]
    %v157 = vld [vmem:[%s83 + $0x28] sm:$0xf]
    %v158 = vld [vmem:[%s83 + $0x2c] sm:$0xf]
    %v159 = vld [vmem:[%s83 + $0x30] sm:$0xf]
    %v160 = vld [vmem:[%s83 + $0x34] sm:$0xf]
    %v161 = vld [vmem:[%s83 + $0x38] sm:$0xf]
    %v162 = vld [vmem:[%s83 + $0x3c] sm:$0xf]
    %v179 = vunpack.c.l.b16 %v131
    %v180 = vunpack.c.l.b16 %v132
    %v181 = vunpack.c.l.b16 %v133
    %v182 = vunpack.c.l.b16 %v134
    %v183 = vunpack.c.l.b16 %v135
    %v184 = vunpack.c.l.b16 %v136
    %v185 = vunpack.c.l.b16 %v137
    %v186 = vunpack.c.l.b16 %v138
    %v187 = vunpack.c.l.b16 %v139
    %v188 = vunpack.c.l.b16 %v140
    %v189 = vunpack.c.l.b16 %v141
    %v190 = vunpack.c.l.b16 %v142
    %v191 = vunpack.c.l.b16 %v143
    %v192 = vunpack.c.l.b16 %v144
    %v193 = vunpack.c.l.b16 %v145
    %v194 = vunpack.c.l.b16 %v146
    %v195 = vpack.c.b16 %v180, %v179
    %v196 = vpack.c.b16 %v182, %v181
    %v197 = vpack.c.b16 %v184, %v183
    %v198 = vpack.c.b16 %v186, %v185
    %v199 = vpack.c.b16 %v188, %v187
    %v200 = vpack.c.b16 %v190, %v189
    %v201 = vpack.c.b16 %v192, %v191
    %v202 = vpack.c.b16 %v194, %v193
    %v227 = vunpack.c.l.b16 %v147
    %v228 = vunpack.c.l.b16 %v148
    %v229 = vunpack.c.l.b16 %v149
    %v230 = vunpack.c.l.b16 %v150
    %v231 = vunpack.c.l.b16 %v151
    %v232 = vunpack.c.l.b16 %v152
    %v233 = vunpack.c.l.b16 %v153
    %v234 = vunpack.c.l.b16 %v154
    %v235 = vunpack.c.l.b16 %v155
    %v236 = vunpack.c.l.b16 %v156
    %v237 = vunpack.c.l.b16 %v157
    %v238 = vunpack.c.l.b16 %v158
    %v239 = vunpack.c.l.b16 %v159
    %v240 = vunpack.c.l.b16 %v160
    %v241 = vunpack.c.l.b16 %v161
    %v242 = vunpack.c.l.b16 %v162
    %v243 = vpack.c.b16 %v228, %v227
    %v244 = vpack.c.b16 %v230, %v229
    %v245 = vpack.c.b16 %v232, %v231
    %v246 = vpack.c.b16 %v234, %v233
    %v247 = vpack.c.b16 %v236, %v235
    %v248 = vpack.c.b16 %v238, %v237
    %v249 = vpack.c.b16 %v240, %v239
    %v250 = vpack.c.b16 %v242, %v241
    %259 = vmatprep.subr.bf16.mxu0 0
    %260 = vmatpush1.bf16.msra.mxu0 %v250
    %261 = vmatprep.subr.bf16.mxu0 0
    %262 = vmatpush1.bf16.msra.mxu0 %v249
    %263 = vmatprep.subr.bf16.mxu0 0
    %264 = vmatpush1.bf16.msra.mxu0 %v248
    %265 = vmatprep.subr.bf16.mxu0 0
    %266 = vmatpush1.bf16.msra.mxu0 %v247
    %267 = vmatprep.subr.bf16.mxu0 0
    %268 = vmatpush1.bf16.msra.mxu0 %v246
    %269 = vmatprep.subr.bf16.mxu0 0
    %270 = vmatpush1.bf16.msra.mxu0 %v245
    %271 = vmatprep.subr.bf16.mxu0 0
    %272 = vmatpush1.bf16.msra.mxu0 %v244
    %273 = vmatprep.subr.bf16.mxu0 0
    %274 = vmatpush1.bf16.msra.mxu0 %v243
    %275 = vmatprep.subr.bf16.mxu0 0
    %276 = vmatpush2.bf16.msra.mxu0 0
    %277 = vmatprep.subr.bf16.mxu0 0
    %278 = vmatpush2.bf16.msra.mxu0 0
    %279 = vmatprep.subr.bf16.mxu0 0
    %280 = vmatpush2.bf16.msra.mxu0 0
    %281 = vmatprep.subr.bf16.mxu0 0
    %282 = vmatpush2.bf16.msra.mxu0 0
    %283 = vmatprep.subr.bf16.mxu0 0
    %284 = vmatpush2.bf16.msra.mxu0 0
    %285 = vmatprep.subr.bf16.mxu0 0
    %286 = vmatpush2.bf16.msra.mxu0 0
    %287 = vmatprep.subr.bf16.mxu0 0
    %288 = vmatpush2.bf16.msra.mxu0 0
    %289 = vmatprep.subr.bf16.mxu0 0
    %290 = vmatpush2.bf16.msra.mxu0 0
    %291 = vmatprep.mubr.bf16.mxu0 0
    %292 = vmatmul.mubr.bf16.gmra.mxu0 %v195
    %v293 = vpop.f32.mrf.mxu0
    %v294 = vadd.f32 0.0, %v293
    %v295 = vpop.f32.mrf.mxu0
    %v296 = vpop.f32.mrf.mxu0
    %v297 = vadd.f32 0.0, %v296
    %v298 = vpop.f32.mrf.mxu0
    %299 = vmatprep.mubr.bf16.mxu0 0
    %300 = vmatmul.mubr.bf16.gmra.mxu0 %v196
    %v301 = vpop.f32.mrf.mxu0
    %v302 = vadd.f32 0.0, %v301
    %v303 = vpop.f32.mrf.mxu0
    %v304 = vpop.f32.mrf.mxu0
    %v305 = vadd.f32 0.0, %v304
    %v306 = vpop.f32.mrf.mxu0
    %307 = vmatprep.mubr.bf16.mxu0 0
    %308 = vmatmul.mubr.bf16.gmra.mxu0 %v197
    %v309 = vpop.f32.mrf.mxu0
    %v310 = vadd.f32 0.0, %v309
    %v311 = vpop.f32.mrf.mxu0
    %v312 = vpop.f32.mrf.mxu0
    %v313 = vadd.f32 0.0, %v312
    %v314 = vpop.f32.mrf.mxu0
    %315 = vmatprep.mubr.bf16.mxu0 0
    %316 = vmatmul.mubr.bf16.gmra.mxu0 %v198
    %v317 = vpop.f32.mrf.mxu0
    %v318 = vadd.f32 0.0, %v317
    %v319 = vpop.f32.mrf.mxu0
    %v320 = vpop.f32.mrf.mxu0
    %v321 = vadd.f32 0.0, %v320
    %v322 = vpop.f32.mrf.mxu0
    %323 = vmatprep.mubr.bf16.mxu0 0
    %324 = vmatmul.mubr.bf16.gmra.mxu0 %v199
    %v325 = vpop.f32.mrf.mxu0
    %v326 = vadd.f32 0.0, %v325
    %v327 = vpop.f32.mrf.mxu0
    %v328 = vpop.f32.mrf.mxu0
    %v329 = vadd.f32 0.0, %v328
    %v330 = vpop.f32.mrf.mxu0
    %331 = vmatprep.mubr.bf16.mxu0 0
    %332 = vmatmul.mubr.bf16.gmra.mxu0 %v200
    %v333 = vpop.f32.mrf.mxu0
    %v334 = vadd.f32 0.0, %v333
    %v335 = vpop.f32.mrf.mxu0
    %v336 = vpop.f32.mrf.mxu0
    %v337 = vadd.f32 0.0, %v336
    %v338 = vpop.f32.mrf.mxu0
    %339 = vmatprep.mubr.bf16.mxu0 0
    %340 = vmatmul.mubr.bf16.gmra.mxu0 %v201
    %v341 = vpop.f32.mrf.mxu0
    %v342 = vadd.f32 0.0, %v341
    %v343 = vpop.f32.mrf.mxu0
    %v344 = vpop.f32.mrf.mxu0
    %v345 = vadd.f32 0.0, %v344
    %v346 = vpop.f32.mrf.mxu0
    %347 = vmatprep.mubr.bf16.mxu0 0
    %348 = vmatmul.mubr.bf16.gmra.mxu0 %v202
    %v349 = vpop.f32.mrf.mxu0
    %v350 = vadd.f32 0.0, %v349
    %v351 = vpop.f32.mrf.mxu0
    %v352 = vpop.f32.mrf.mxu0
    %v353 = vadd.f32 0.0, %v352
    %v354 = vpop.f32.mrf.mxu0
    %355 = vdwg.mxu0
    %v356 = vadd.f32 %v115, %v294
    %v357 = vadd.f32 %v116, %v297
    %v358 = vadd.f32 %v117, %v302
    %v359 = vadd.f32 %v118, %v305
    %v360 = vadd.f32 %v119, %v310
    %v361 = vadd.f32 %v120, %v313
    %v362 = vadd.f32 %v121, %v318
    %v363 = vadd.f32 %v122, %v321
    %v364 = vadd.f32 %v123, %v326
    %v365 = vadd.f32 %v124, %v329
    %v366 = vadd.f32 %v125, %v334
    %v367 = vadd.f32 %v126, %v337
    %v368 = vadd.f32 %v127, %v342
    %v369 = vadd.f32 %v128, %v345
    %v370 = vadd.f32 %v129, %v350
    %v371 = vadd.f32 %v130, %v353
    %372 = vst [vmem:[#allocation2] sm:$0xff] %v356
    %373 = vst [vmem:[#allocation2 + $0x8] sm:$0xff] %v357
    %374 = vst [vmem:[#allocation2 + $0x10] sm:$0xff] %v358
    %375 = vst [vmem:[#allocation2 + $0x18] sm:$0xff] %v359
    %376 = vst [vmem:[#allocation2 + $0x20] sm:$0xff] %v360
    %377 = vst [vmem:[#allocation2 + $0x28] sm:$0xff] %v361
    %378 = vst [vmem:[#allocation2 + $0x30] sm:$0xff] %v362
    %379 = vst [vmem:[#allocation2 + $0x38] sm:$0xff] %v363
    %380 = vst [vmem:[#allocation2 + $0x40] sm:$0xff] %v364
    %381 = vst [vmem:[#allocation2 + $0x48] sm:$0xff] %v365
    %382 = vst [vmem:[#allocation2 + $0x50] sm:$0xff] %v366
    %383 = vst [vmem:[#allocation2 + $0x58] sm:$0xff] %v367
    %384 = vst [vmem:[#allocation2 + $0x60] sm:$0xff] %v368
    %385 = vst [vmem:[#allocation2 + $0x68] sm:$0xff] %v369
    %386 = vst [vmem:[#allocation2 + $0x70] sm:$0xff] %v370
    %387 = vst [vmem:[#allocation2 + $0x78] sm:$0xff] %v371
  $region21: #{eghg_forward.4} parent=0 // pred_fallthru
    _
  // Predicated region
  $region22: #{eghg_forward.4} parent=0 // pred_check
    %p388 = pneg %p90
  $region23: #{eghg_forward.4} parent=0 // pred_check_branch
    %390 = sbr.rel (%p388) target = $region25
  $region24: #{eghg_forward.4} parent=0 // pred_region
    %v391 = vld [vmem:[#allocation2] sm:$0xff]
    %v392 = vld [vmem:[#allocation2 + $0x8] sm:$0xff]
    %v393 = vld [vmem:[#allocation2 + $0x10] sm:$0xff]
    %v394 = vld [vmem:[#allocation2 + $0x18] sm:$0xff]
    %v395 = vld [vmem:[#allocation2 + $0x20] sm:$0xff]
    %v396 = vld [vmem:[#allocation2 + $0x28] sm:$0xff]
    %v397 = vld [vmem:[#allocation2 + $0x30] sm:$0xff]
    %v398 = vld [vmem:[#allocation2 + $0x38] sm:$0xff]
    %v399 = vld [vmem:[#allocation2 + $0x40] sm:$0xff]
    %v400 = vld [vmem:[#allocation2 + $0x48] sm:$0xff]
    %v401 = vld [vmem:[#allocation2 + $0x50] sm:$0xff]
    %v402 = vld [vmem:[#allocation2 + $0x58] sm:$0xff]
    %v403 = vld [vmem:[#allocation2 + $0x60] sm:$0xff]
    %v404 = vld [vmem:[#allocation2 + $0x68] sm:$0xff]
    %v405 = vld [vmem:[#allocation2 + $0x70] sm:$0xff]
    %v406 = vld [vmem:[#allocation2 + $0x78] sm:$0xff]
    %v407 = vpack.c.bf16 %v392, %v391
    %v408 = vpack.c.bf16 %v394, %v393
    %v409 = vpack.c.bf16 %v396, %v395
    %v410 = vpack.c.bf16 %v398, %v397
    %v411 = vpack.c.bf16 %v400, %v399
    %v412 = vpack.c.bf16 %v402, %v401
    %v413 = vpack.c.bf16 %v404, %v403
    %v414 = vpack.c.bf16 %v406, %v405
    %v423 = vunpack.c.l.b16 %v407
    %v424 = vunpack.c.h.b16 %v407
    %v425 = vunpack.c.l.b16 %v408
    %v426 = vunpack.c.h.b16 %v408
    %v427 = vunpack.c.l.b16 %v409
    %v428 = vunpack.c.h.b16 %v409
    %v429 = vunpack.c.l.b16 %v410
    %v430 = vunpack.c.h.b16 %v410
    %v431 = vunpack.c.l.b16 %v411
    %v432 = vunpack.c.h.b16 %v411
    %v433 = vunpack.c.l.b16 %v412
    %v434 = vunpack.c.h.b16 %v412
    %v435 = vunpack.c.l.b16 %v413
    %v436 = vunpack.c.h.b16 %v413
    %v437 = vunpack.c.l.b16 %v414
    %v438 = vunpack.c.h.b16 %v414
    %v439 = vpack.c.b16 %v423, %v423
    %v440 = vpack.c.b16 %v424, %v424
    %v441 = vpack.c.b16 %v425, %v425
    %v442 = vpack.c.b16 %v426, %v426
    %v443 = vpack.c.b16 %v427, %v427
    %v444 = vpack.c.b16 %v428, %v428
    %v445 = vpack.c.b16 %v429, %v429
    %v446 = vpack.c.b16 %v430, %v430
    %v447 = vpack.c.b16 %v431, %v431
    %v448 = vpack.c.b16 %v432, %v432
    %v449 = vpack.c.b16 %v433, %v433
    %v450 = vpack.c.b16 %v434, %v434
    %v451 = vpack.c.b16 %v435, %v435
    %v452 = vpack.c.b16 %v436, %v436
    %v453 = vpack.c.b16 %v437, %v437
    %v454 = vpack.c.b16 %v438, %v438
    %471 = vst [vmem:[%s5] sm:$0xf] %v439
    %472 = vst [vmem:[%s5 + $0x4] sm:$0xf] %v440
    %473 = vst [vmem:[%s5 + $0x8] sm:$0xf] %v441
    %474 = vst [vmem:[%s5 + $0xc] sm:$0xf] %v442
    %475 = vst [vmem:[%s5 + $0x10] sm:$0xf] %v443
    %476 = vst [vmem:[%s5 + $0x14] sm:$0xf] %v444
    %477 = vst [vmem:[%s5 + $0x18] sm:$0xf] %v445
    %478 = vst [vmem:[%s5 + $0x1c] sm:$0xf] %v446
    %479 = vst [vmem:[%s5 + $0x20] sm:$0xf] %v447
    %480 = vst [vmem:[%s5 + $0x24] sm:$0xf] %v448
    %481 = vst [vmem:[%s5 + $0x28] sm:$0xf] %v449
    %482 = vst [vmem:[%s5 + $0x2c] sm:$0xf] %v450
    %483 = vst [vmem:[%s5 + $0x30] sm:$0xf] %v451
    %484 = vst [vmem:[%s5 + $0x34] sm:$0xf] %v452
    %485 = vst [vmem:[%s5 + $0x38] sm:$0xf] %v453
    %486 = vst [vmem:[%s5 + $0x3c] sm:$0xf] %v454
    %v487 = vld [vmem:[%s4] sm:$0xff]
    %v488 = vld [vmem:[%s4 + $0x8] sm:$0xff]
    %v489 = vld [vmem:[%s4 + $0x10] sm:$0xff]
    %v490 = vld [vmem:[%s4 + $0x18] sm:$0xff]
    %v491 = vld [vmem:[%s4 + $0x20] sm:$0xff]
    %v492 = vld [vmem:[%s4 + $0x28] sm:$0xff]
    %v493 = vld [vmem:[%s4 + $0x30] sm:$0xff]
    %v494 = vld [vmem:[%s4 + $0x38] sm:$0xff]
    %v495 = vld [vmem:[%s4 + $0x40] sm:$0xff]
    %v496 = vld [vmem:[%s4 + $0x48] sm:$0xff]
    %v497 = vld [vmem:[%s4 + $0x50] sm:$0xff]
    %v498 = vld [vmem:[%s4 + $0x58] sm:$0xff]
    %v499 = vld [vmem:[%s4 + $0x60] sm:$0xff]
    %v500 = vld [vmem:[%s4 + $0x68] sm:$0xff]
    %v501 = vld [vmem:[%s4 + $0x70] sm:$0xff]
    %v502 = vld [vmem:[%s4 + $0x78] sm:$0xff]
    %v503 = vadd.f32 %v487, %v391
    %v504 = vadd.f32 %v488, %v392
    %v505 = vadd.f32 %v489, %v393
    %v506 = vadd.f32 %v490, %v394
    %v507 = vadd.f32 %v491, %v395
    %v508 = vadd.f32 %v492, %v396
    %v509 = vadd.f32 %v493, %v397
    %v510 = vadd.f32 %v494, %v398
    %v511 = vadd.f32 %v495, %v399
    %v512 = vadd.f32 %v496, %v400
    %v513 = vadd.f32 %v497, %v401
    %v514 = vadd.f32 %v498, %v402
    %v515 = vadd.f32 %v499, %v403
    %v516 = vadd.f32 %v500, %v404
    %v517 = vadd.f32 %v501, %v405
    %v518 = vadd.f32 %v502, %v406
    %519 = vst [vmem:[%s6] sm:$0xff] %v503
    %520 = vst [vmem:[%s6 + $0x8] sm:$0xff] %v504
    %521 = vst [vmem:[%s6 + $0x10] sm:$0xff] %v505
    %522 = vst [vmem:[%s6 + $0x18] sm:$0xff] %v506
    %523 = vst [vmem:[%s6 + $0x20] sm:$0xff] %v507
    %524 = vst [vmem:[%s6 + $0x28] sm:$0xff] %v508
    %525 = vst [vmem:[%s6 + $0x30] sm:$0xff] %v509
    %526 = vst [vmem:[%s6 + $0x38] sm:$0xff] %v510
    %527 = vst [vmem:[%s6 + $0x40] sm:$0xff] %v511
    %528 = vst [vmem:[%s6 + $0x48] sm:$0xff] %v512
    %529 = vst [vmem:[%s6 + $0x50] sm:$0xff] %v513
    %530 = vst [vmem:[%s6 + $0x58] sm:$0xff] %v514
    %531 = vst [vmem:[%s6 + $0x60] sm:$0xff] %v515
    %532 = vst [vmem:[%s6 + $0x68] sm:$0xff] %v516
    %533 = vst [vmem:[%s6 + $0x70] sm:$0xff] %v517
    %534 = vst [vmem:[%s6 + $0x78] sm:$0xff] %v518
  $region25: #{eghg_forward.4} parent=0 // pred_fallthru
    _
  // Predicated region
  $region26: #{eghg_forward.4} parent=0 // pred_check
    _
  $region27: #{eghg_forward.4} parent=0 // pred_check_branch
    %536 = sbr.rel (0) target = $region29
  $region28: #{eghg_forward.4} parent=0 // pred_region
    _
  $region29: #{eghg_forward.4} parent=0 // pred_fallthru
    _
  // Predicated region
  $region30: #{eghg_forward.4} parent=0 // pred_check
    _
  $region31: #{eghg_forward.4} parent=0 // pred_check_branch
    %538 = sbr.rel (0) target = $region33
  $region32: #{eghg_forward.4} parent=0 // pred_region
    _
  $region33: #{eghg_forward.4} parent=0 // pred_fallthru
    _
  // Predicated region
  $region34: #{eghg_forward.4} parent=0 // pred_check
    _
  $region35: #{eghg_forward.4} parent=0 // pred_check_branch
    %540 = sbr.rel (0) target = $region37
  $region36: #{eghg_forward.4} parent=0 // pred_region
    _
  $region37: #{eghg_forward.4} parent=0 // pred_fallthru
    _
  // Predicated region
  $region38: #{eghg_forward.4} parent=0 // pred_check
    _
  $region39: #{eghg_forward.4} parent=0 // pred_check_branch
    %542 = sbr.rel (0) target = $region41
  $region40: #{eghg_forward.4} parent=0 // pred_region
    _
  $region41: #{eghg_forward.4} parent=0 // pred_fallthru
    _

// kernel: eghg_forward.6
$region0: #{eghg_forward.6}
  #allocation0 [shape = 'u32[]', space=smem, size = 0x4, offset = 0x4, fixed_abs, tag = 'smem constant byte address 0x4 - core index']
  #allocation1 [shape = 'u32[144,128]{1,0:T(1,128)}', space=vmem, size = 0x12000, scoped, tag = 'internal scratch']
  #allocation2 [shape = 'f32[128,128]{1,0:T(8,128)}', space=vmem, size = 0x10000, scoped, tag = 'scratch operand']
  #allocation3 [shape = 's32[1]{0}', space=sflag, size = 0x4, scoped, tag = 'scoped memory for eghg_forward.6']
  #allocation4 [shape = 's32[1,1]{1,0:T(1,128)S(6)}', space=smem, size = 0x200, scoped, tag = 'prefetched SMEM operand 0']
  #allocation5 [shape = 's32[1]{0:T(128)S(6)}', space=smem, size = 0x200, scoped, tag = 'prefetched SMEM operand 1']
  %s0 = inlined_call_operand.<no memory space> [shape: s32[1,1], index: 0, kind: input, shape index: {}]
  %s1 = inlined_call_operand.<no memory space> [shape: s32[1], index: 1, kind: input, shape index: {}]
  %s2 = inlined_call_operand.vmem [shape: bf16[128,128], index: 2, kind: input, shape index: {}]
  %s3 = inlined_call_operand.vmem [shape: bf16[128,128], index: 3, kind: input, shape index: {}]
  %s4 = inlined_call_operand.vmem [shape: f32[128,128], index: 4, kind: input, shape index: {}]
  %s5 = inlined_call_operand.vmem [shape: f32[128,128], index: 5, kind: output, shape index: {}]
  %s6 = sld [smem:[#allocation0]]
  $region34: #{eghg_forward.6} parent=0
    _
  %s8 = ssub.s32 1, %s6
  %s9 = scalar_select 0, %s8, %s6
  %10 = sst [smem:[#allocation4]] %s0
  %11 = sst [smem:[#allocation5]] %s1
  // Predicated region
  $region2: #{eghg_forward.6} parent=0 // pred_check
    _
  $region3: #{eghg_forward.6} parent=0 // pred_check_branch
    %13 = sbr.rel (0) target = $region5
  $region4: #{eghg_forward.6} parent=0 // pred_region
    %s14 = sadd.s32 0, 0
    %s15 = smul.u32 %s14, 128
    %s16 = sadd.s32 %s15, 0
    %s17 = sld [smem:[#allocation4 + %s16]]
    %p18 = scmp.lt.s32.totalorder %s17, 0
    %s19 = scalar_select %p18, %s17, 0
    %s20 = smul.addr %s19, 4
    %s21 = scalar_lea.vmem %s2, %s20
    %s22 = sadd.s32 0, 0
    %s23 = smul.u32 %s22, 128
    %s24 = sadd.s32 %s23, 0
    %s25 = sld [smem:[#allocation4 + %s24]]
  $region5: #{eghg_forward.6} parent=0 // pred_fallthru
    _
  // Predicated region
  $region6: #{eghg_forward.6} parent=0 // pred_check
    _
  $region7: #{eghg_forward.6} parent=0 // pred_check_branch
    %27 = sbr.rel (0) target = $region9
  $region8: #{eghg_forward.6} parent=0 // pred_region
    %s28 = sadd.s32 0, 0
    %s29 = smul.u32 %s28, 128
    %s30 = sadd.s32 %s29, 0
    %s31 = sld [smem:[#allocation4 + %s30]]
    %s32 = smul.u32 16, %s31
    %p33 = scmp.lt.s32.totalorder %s32, 15
    %s34 = scalar_select %p33, %s32, 15
    %s35 = smul.addr %s34, 4
    %s36 = scalar_lea.vmem %s3, %s35
    %s37 = sadd.s32 0, 0
    %s38 = smul.u32 %s37, 128
    %s39 = sadd.s32 %s38, 0
    %s40 = sld [smem:[#allocation4 + %s39]]
    %s41 = smul.u32 16, %s40
  $region9: #{eghg_forward.6} parent=0 // pred_fallthru
    _
  // Predicated region
  $region10: #{eghg_forward.6} parent=0 // pred_check
    _
  $region11: #{eghg_forward.6} parent=0 // pred_check_branch
    %43 = sbr.rel (0) target = $region13
  $region12: #{eghg_forward.6} parent=0 // pred_region
    _
  $region13: #{eghg_forward.6} parent=0 // pred_fallthru
    _
  %s44 = sadd.s32 0, 0
  %s45 = smul.u32 %s44, 128
  %s46 = sadd.s32 %s45, 0
  %s47 = sld [smem:[#allocation4 + %s46]]
  %p48 = scmp.lt.s32.totalorder %s47, 0
  %s49 = scalar_select %p48, %s47, 0
  %s50 = smul.addr %s49, 4
  %s51 = scalar_lea.vmem %s2, %s50
  %s52 = sadd.s32 0, 0
  %s53 = smul.u32 %s52, 128
  %s54 = sadd.s32 %s53, 0
  %s55 = sld [smem:[#allocation4 + %s54]]
  %s56 = smul.u32 16, %s55
  %p57 = scmp.lt.s32.totalorder %s56, 15
  %s58 = scalar_select %p57, %s56, 15
  %s59 = smul.addr %s58, 4
  %s60 = scalar_lea.vmem %s3, %s59
  %s61 = sadd.s32 0, 0
  %s62 = smul.u32 %s61, 128
  %s63 = sadd.s32 %s62, 0
  %s64 = sld [smem:[#allocation4 + %s63]]
  %p65 = scmp.lt.s32.totalorder %s64, 0
  %s66 = scalar_select %p65, %s64, 0
  %s67 = smul.addr %s66, 4
  %s68 = scalar_lea.vmem %s2, %s67
  %s69 = sadd.s32 0, 0
  %s70 = smul.u32 %s69, 128
  %s71 = sadd.s32 %s70, 0
  %s72 = sld [smem:[#allocation4 + %s71]]
  %s73 = sadd.s32 0, 0
  %s74 = smul.u32 %s73, 128
  %s75 = sadd.s32 %s74, 0
  %s76 = sld [smem:[#allocation4 + %s75]]
  %s77 = smul.u32 16, %s76
  %p78 = scmp.lt.s32.totalorder %s77, 15
  %s79 = scalar_select %p78, %s77, 15
  %s80 = smul.addr %s79, 4
  %s81 = scalar_lea.vmem %s3, %s80
  %s82 = sadd.s32 0, 0
  %s83 = smul.u32 %s82, 128
  %s84 = sadd.s32 %s83, 0
  %s85 = sld [smem:[#allocation4 + %s84]]
  %s86 = smul.u32 16, %s85
  %p88 = scmp.eq.s32.totalorder 0, 0
  // Predicated region
  $region14: #{eghg_forward.6} parent=0 // pred_check
    %p89 = pneg %p88
  $region15: #{eghg_forward.6} parent=0 // pred_check_branch
    %91 = sbr.rel (%p89) target = $region17
  $region16: #{eghg_forward.6} parent=0 // pred_region
    %92 = vst [vmem:[#allocation2] sm:$0xff] 0.0
    %93 = vst [vmem:[#allocation2 + $0x8] sm:$0xff] 0.0
    %94 = vst [vmem:[#allocation2 + $0x10] sm:$0xff] 0.0
    %95 = vst [vmem:[#allocation2 + $0x18] sm:$0xff] 0.0
    %96 = vst [vmem:[#allocation2 + $0x20] sm:$0xff] 0.0
    %97 = vst [vmem:[#allocation2 + $0x28] sm:$0xff] 0.0
    %98 = vst [vmem:[#allocation2 + $0x30] sm:$0xff] 0.0
    %99 = vst [vmem:[#allocation2 + $0x38] sm:$0xff] 0.0
    %100 = vst [vmem:[#allocation2 + $0x40] sm:$0xff] 0.0
    %101 = vst [vmem:[#allocation2 + $0x48] sm:$0xff] 0.0
    %102 = vst [vmem:[#allocation2 + $0x50] sm:$0xff] 0.0
    %103 = vst [vmem:[#allocation2 + $0x58] sm:$0xff] 0.0
    %104 = vst [vmem:[#allocation2 + $0x60] sm:$0xff] 0.0
    %105 = vst [vmem:[#allocation2 + $0x68] sm:$0xff] 0.0
    %106 = vst [vmem:[#allocation2 + $0x70] sm:$0xff] 0.0
    %107 = vst [vmem:[#allocation2 + $0x78] sm:$0xff] 0.0
  $region17: #{eghg_forward.6} parent=0 // pred_fallthru
    _
  %s108 = sld [smem:[#allocation5]]
  %p109 = scmp.lt.s32.totalorder 0, %s108
  // Predicated region
  $region18: #{eghg_forward.6} parent=0 // pred_check
    %p110 = pneg %p109
  $region19: #{eghg_forward.6} parent=0 // pred_check_branch
    %112 = sbr.rel (%p110) target = $region21
  $region20: #{eghg_forward.6} parent=0 // pred_region
    %v113 = vld [vmem:[#allocation2] sm:$0xff]
    %v114 = vld [vmem:[#allocation2 + $0x8] sm:$0xff]
    %v115 = vld [vmem:[#allocation2 + $0x10] sm:$0xff]
    %v116 = vld [vmem:[#allocation2 + $0x18] sm:$0xff]
    %v117 = vld [vmem:[#allocation2 + $0x20] sm:$0xff]
    %v118 = vld [vmem:[#allocation2 + $0x28] sm:$0xff]
    %v119 = vld [vmem:[#allocation2 + $0x30] sm:$0xff]
    %v120 = vld [vmem:[#allocation2 + $0x38] sm:$0xff]
    %v121 = vld [vmem:[#allocation2 + $0x40] sm:$0xff]
    %v122 = vld [vmem:[#allocation2 + $0x48] sm:$0xff]
    %v123 = vld [vmem:[#allocation2 + $0x50] sm:$0xff]
    %v124 = vld [vmem:[#allocation2 + $0x58] sm:$0xff]
    %v125 = vld [vmem:[#allocation2 + $0x60] sm:$0xff]
    %v126 = vld [vmem:[#allocation2 + $0x68] sm:$0xff]
    %v127 = vld [vmem:[#allocation2 + $0x70] sm:$0xff]
    %v128 = vld [vmem:[#allocation2 + $0x78] sm:$0xff]
    %v129 = vld [vmem:[%s68] sm:$0xf]
    %v130 = vld [vmem:[%s68 + $0x4] sm:$0xf]
    %v131 = vld [vmem:[%s68 + $0x8] sm:$0xf]
    %v132 = vld [vmem:[%s68 + $0xc] sm:$0xf]
    %v133 = vld [vmem:[%s68 + $0x10] sm:$0xf]
    %v134 = vld [vmem:[%s68 + $0x14] sm:$0xf]
    %v135 = vld [vmem:[%s68 + $0x18] sm:$0xf]
    %v136 = vld [vmem:[%s68 + $0x1c] sm:$0xf]
    %v137 = vld [vmem:[%s68 + $0x20] sm:$0xf]
    %v138 = vld [vmem:[%s68 + $0x24] sm:$0xf]
    %v139 = vld [vmem:[%s68 + $0x28] sm:$0xf]
    %v140 = vld [vmem:[%s68 + $0x2c] sm:$0xf]
    %v141 = vld [vmem:[%s68 + $0x30] sm:$0xf]
    %v142 = vld [vmem:[%s68 + $0x34] sm:$0xf]
    %v143 = vld [vmem:[%s68 + $0x38] sm:$0xf]
    %v144 = vld [vmem:[%s68 + $0x3c] sm:$0xf]
    %v145 = vld [vmem:[%s81] sm:$0xf]
    %v146 = vld [vmem:[%s81 + $0x4] sm:$0xf]
    %v147 = vld [vmem:[%s81 + $0x8] sm:$0xf]
    %v148 = vld [vmem:[%s81 + $0xc] sm:$0xf]
    %v149 = vld [vmem:[%s81 + $0x10] sm:$0xf]
    %v150 = vld [vmem:[%s81 + $0x14] sm:$0xf]
    %v151 = vld [vmem:[%s81 + $0x18] sm:$0xf]
    %v152 = vld [vmem:[%s81 + $0x1c] sm:$0xf]
    %v153 = vld [vmem:[%s81 + $0x20] sm:$0xf]
    %v154 = vld [vmem:[%s81 + $0x24] sm:$0xf]
    %v155 = vld [vmem:[%s81 + $0x28] sm:$0xf]
    %v156 = vld [vmem:[%s81 + $0x2c] sm:$0xf]
    %v157 = vld [vmem:[%s81 + $0x30] sm:$0xf]
    %v158 = vld [vmem:[%s81 + $0x34] sm:$0xf]
    %v159 = vld [vmem:[%s81 + $0x38] sm:$0xf]
    %v160 = vld [vmem:[%s81 + $0x3c] sm:$0xf]
    %v177 = vunpack.c.l.b16 %v129
    %v178 = vunpack.c.l.b16 %v130
    %v179 = vunpack.c.l.b16 %v131
    %v180 = vunpack.c.l.b16 %v132
    %v181 = vunpack.c.l.b16 %v133
    %v182 = vunpack.c.l.b16 %v134
    %v183 = vunpack.c.l.b16 %v135
    %v184 = vunpack.c.l.b16 %v136
    %v185 = vunpack.c.l.b16 %v137
    %v186 = vunpack.c.l.b16 %v138
    %v187 = vunpack.c.l.b16 %v139
    %v188 = vunpack.c.l.b16 %v140
    %v189 = vunpack.c.l.b16 %v141
    %v190 = vunpack.c.l.b16 %v142
    %v191 = vunpack.c.l.b16 %v143
    %v192 = vunpack.c.l.b16 %v144
    %v193 = vpack.c.b16 %v178, %v177
    %v194 = vpack.c.b16 %v180, %v179
    %v195 = vpack.c.b16 %v182, %v181
    %v196 = vpack.c.b16 %v184, %v183
    %v197 = vpack.c.b16 %v186, %v185
    %v198 = vpack.c.b16 %v188, %v187
    %v199 = vpack.c.b16 %v190, %v189
    %v200 = vpack.c.b16 %v192, %v191
    %v225 = vunpack.c.l.b16 %v145
    %v226 = vunpack.c.l.b16 %v146
    %v227 = vunpack.c.l.b16 %v147
    %v228 = vunpack.c.l.b16 %v148
    %v229 = vunpack.c.l.b16 %v149
    %v230 = vunpack.c.l.b16 %v150
    %v231 = vunpack.c.l.b16 %v151
    %v232 = vunpack.c.l.b16 %v152
    %v233 = vunpack.c.l.b16 %v153
    %v234 = vunpack.c.l.b16 %v154
    %v235 = vunpack.c.l.b16 %v155
    %v236 = vunpack.c.l.b16 %v156
    %v237 = vunpack.c.l.b16 %v157
    %v238 = vunpack.c.l.b16 %v158
    %v239 = vunpack.c.l.b16 %v159
    %v240 = vunpack.c.l.b16 %v160
    %v241 = vpack.c.b16 %v226, %v225
    %v242 = vpack.c.b16 %v228, %v227
    %v243 = vpack.c.b16 %v230, %v229
    %v244 = vpack.c.b16 %v232, %v231
    %v245 = vpack.c.b16 %v234, %v233
    %v246 = vpack.c.b16 %v236, %v235
    %v247 = vpack.c.b16 %v238, %v237
    %v248 = vpack.c.b16 %v240, %v239
    %257 = vmatprep.subr.bf16.mxu0 0
    %258 = vmatpush1.bf16.msra.mxu0 %v248
    %259 = vmatprep.subr.bf16.mxu0 0
    %260 = vmatpush1.bf16.msra.mxu0 %v247
    %261 = vmatprep.subr.bf16.mxu0 0
    %262 = vmatpush1.bf16.msra.mxu0 %v246
    %263 = vmatprep.subr.bf16.mxu0 0
    %264 = vmatpush1.bf16.msra.mxu0 %v245
    %265 = vmatprep.subr.bf16.mxu0 0
    %266 = vmatpush1.bf16.msra.mxu0 %v244
    %267 = vmatprep.subr.bf16.mxu0 0
    %268 = vmatpush1.bf16.msra.mxu0 %v243
    %269 = vmatprep.subr.bf16.mxu0 0
    %270 = vmatpush1.bf16.msra.mxu0 %v242
    %271 = vmatprep.subr.bf16.mxu0 0
    %272 = vmatpush1.bf16.msra.mxu0 %v241
    %273 = vmatprep.subr.bf16.mxu0 0
    %274 = vmatpush2.bf16.msra.mxu0 0
    %275 = vmatprep.subr.bf16.mxu0 0
    %276 = vmatpush2.bf16.msra.mxu0 0
    %277 = vmatprep.subr.bf16.mxu0 0
    %278 = vmatpush2.bf16.msra.mxu0 0
    %279 = vmatprep.subr.bf16.mxu0 0
    %280 = vmatpush2.bf16.msra.mxu0 0
    %281 = vmatprep.subr.bf16.mxu0 0
    %282 = vmatpush2.bf16.msra.mxu0 0
    %283 = vmatprep.subr.bf16.mxu0 0
    %284 = vmatpush2.bf16.msra.mxu0 0
    %285 = vmatprep.subr.bf16.mxu0 0
    %286 = vmatpush2.bf16.msra.mxu0 0
    %287 = vmatprep.subr.bf16.mxu0 0
    %288 = vmatpush2.bf16.msra.mxu0 0
    %289 = vmatprep.mubr.bf16.mxu0 0
    %290 = vmatmul.mubr.bf16.gmra.mxu0 %v193
    %v291 = vpop.f32.mrf.mxu0
    %v292 = vadd.f32 0.0, %v291
    %v293 = vpop.f32.mrf.mxu0
    %v294 = vpop.f32.mrf.mxu0
    %v295 = vadd.f32 0.0, %v294
    %v296 = vpop.f32.mrf.mxu0
    %297 = vmatprep.mubr.bf16.mxu0 0
    %298 = vmatmul.mubr.bf16.gmra.mxu0 %v194
    %v299 = vpop.f32.mrf.mxu0
    %v300 = vadd.f32 0.0, %v299
    %v301 = vpop.f32.mrf.mxu0
    %v302 = vpop.f32.mrf.mxu0
    %v303 = vadd.f32 0.0, %v302
    %v304 = vpop.f32.mrf.mxu0
    %305 = vmatprep.mubr.bf16.mxu0 0
    %306 = vmatmul.mubr.bf16.gmra.mxu0 %v195
    %v307 = vpop.f32.mrf.mxu0
    %v308 = vadd.f32 0.0, %v307
    %v309 = vpop.f32.mrf.mxu0
    %v310 = vpop.f32.mrf.mxu0
    %v311 = vadd.f32 0.0, %v310
    %v312 = vpop.f32.mrf.mxu0
    %313 = vmatprep.mubr.bf16.mxu0 0
    %314 = vmatmul.mubr.bf16.gmra.mxu0 %v196
    %v315 = vpop.f32.mrf.mxu0
    %v316 = vadd.f32 0.0, %v315
    %v317 = vpop.f32.mrf.mxu0
    %v318 = vpop.f32.mrf.mxu0
    %v319 = vadd.f32 0.0, %v318
    %v320 = vpop.f32.mrf.mxu0
    %321 = vmatprep.mubr.bf16.mxu0 0
    %322 = vmatmul.mubr.bf16.gmra.mxu0 %v197
    %v323 = vpop.f32.mrf.mxu0
    %v324 = vadd.f32 0.0, %v323
    %v325 = vpop.f32.mrf.mxu0
    %v326 = vpop.f32.mrf.mxu0
    %v327 = vadd.f32 0.0, %v326
    %v328 = vpop.f32.mrf.mxu0
    %329 = vmatprep.mubr.bf16.mxu0 0
    %330 = vmatmul.mubr.bf16.gmra.mxu0 %v198
    %v331 = vpop.f32.mrf.mxu0
    %v332 = vadd.f32 0.0, %v331
    %v333 = vpop.f32.mrf.mxu0
    %v334 = vpop.f32.mrf.mxu0
    %v335 = vadd.f32 0.0, %v334
    %v336 = vpop.f32.mrf.mxu0
    %337 = vmatprep.mubr.bf16.mxu0 0
    %338 = vmatmul.mubr.bf16.gmra.mxu0 %v199
    %v339 = vpop.f32.mrf.mxu0
    %v340 = vadd.f32 0.0, %v339
    %v341 = vpop.f32.mrf.mxu0
    %v342 = vpop.f32.mrf.mxu0
    %v343 = vadd.f32 0.0, %v342
    %v344 = vpop.f32.mrf.mxu0
    %345 = vmatprep.mubr.bf16.mxu0 0
    %346 = vmatmul.mubr.bf16.gmra.mxu0 %v200
    %v347 = vpop.f32.mrf.mxu0
    %v348 = vadd.f32 0.0, %v347
    %v349 = vpop.f32.mrf.mxu0
    %v350 = vpop.f32.mrf.mxu0
    %v351 = vadd.f32 0.0, %v350
    %v352 = vpop.f32.mrf.mxu0
    %353 = vdwg.mxu0
    %v354 = vadd.f32 %v113, %v292
    %v355 = vadd.f32 %v114, %v295
    %v356 = vadd.f32 %v115, %v300
    %v357 = vadd.f32 %v116, %v303
    %v358 = vadd.f32 %v117, %v308
    %v359 = vadd.f32 %v118, %v311
    %v360 = vadd.f32 %v119, %v316
    %v361 = vadd.f32 %v120, %v319
    %v362 = vadd.f32 %v121, %v324
    %v363 = vadd.f32 %v122, %v327
    %v364 = vadd.f32 %v123, %v332
    %v365 = vadd.f32 %v124, %v335
    %v366 = vadd.f32 %v125, %v340
    %v367 = vadd.f32 %v126, %v343
    %v368 = vadd.f32 %v127, %v348
    %v369 = vadd.f32 %v128, %v351
    %370 = vst [vmem:[#allocation2] sm:$0xff] %v354
    %371 = vst [vmem:[#allocation2 + $0x8] sm:$0xff] %v355
    %372 = vst [vmem:[#allocation2 + $0x10] sm:$0xff] %v356
    %373 = vst [vmem:[#allocation2 + $0x18] sm:$0xff] %v357
    %374 = vst [vmem:[#allocation2 + $0x20] sm:$0xff] %v358
    %375 = vst [vmem:[#allocation2 + $0x28] sm:$0xff] %v359
    %376 = vst [vmem:[#allocation2 + $0x30] sm:$0xff] %v360
    %377 = vst [vmem:[#allocation2 + $0x38] sm:$0xff] %v361
    %378 = vst [vmem:[#allocation2 + $0x40] sm:$0xff] %v362
    %379 = vst [vmem:[#allocation2 + $0x48] sm:$0xff] %v363
    %380 = vst [vmem:[#allocation2 + $0x50] sm:$0xff] %v364
    %381 = vst [vmem:[#allocation2 + $0x58] sm:$0xff] %v365
    %382 = vst [vmem:[#allocation2 + $0x60] sm:$0xff] %v366
    %383 = vst [vmem:[#allocation2 + $0x68] sm:$0xff] %v367
    %384 = vst [vmem:[#allocation2 + $0x70] sm:$0xff] %v368
    %385 = vst [vmem:[#allocation2 + $0x78] sm:$0xff] %v369
  $region21: #{eghg_forward.6} parent=0 // pred_fallthru
    _
  // Predicated region
  $region22: #{eghg_forward.6} parent=0 // pred_check
    %p386 = pneg %p88
  $region23: #{eghg_forward.6} parent=0 // pred_check_branch
    %388 = sbr.rel (%p386) target = $region25
  $region24: #{eghg_forward.6} parent=0 // pred_region
    %v389 = vld [vmem:[#allocation2] sm:$0xff]
    %v390 = vld [vmem:[#allocation2 + $0x8] sm:$0xff]
    %v391 = vld [vmem:[#allocation2 + $0x10] sm:$0xff]
    %v392 = vld [vmem:[#allocation2 + $0x18] sm:$0xff]
    %v393 = vld [vmem:[#allocation2 + $0x20] sm:$0xff]
    %v394 = vld [vmem:[#allocation2 + $0x28] sm:$0xff]
    %v395 = vld [vmem:[#allocation2 + $0x30] sm:$0xff]
    %v396 = vld [vmem:[#allocation2 + $0x38] sm:$0xff]
    %v397 = vld [vmem:[#allocation2 + $0x40] sm:$0xff]
    %v398 = vld [vmem:[#allocation2 + $0x48] sm:$0xff]
    %v399 = vld [vmem:[#allocation2 + $0x50] sm:$0xff]
    %v400 = vld [vmem:[#allocation2 + $0x58] sm:$0xff]
    %v401 = vld [vmem:[#allocation2 + $0x60] sm:$0xff]
    %v402 = vld [vmem:[#allocation2 + $0x68] sm:$0xff]
    %v403 = vld [vmem:[#allocation2 + $0x70] sm:$0xff]
    %v404 = vld [vmem:[#allocation2 + $0x78] sm:$0xff]
    %v405 = vld [vmem:[%s4] sm:$0xff]
    %v406 = vld [vmem:[%s4 + $0x8] sm:$0xff]
    %v407 = vld [vmem:[%s4 + $0x10] sm:$0xff]
    %v408 = vld [vmem:[%s4 + $0x18] sm:$0xff]
    %v409 = vld [vmem:[%s4 + $0x20] sm:$0xff]
    %v410 = vld [vmem:[%s4 + $0x28] sm:$0xff]
    %v411 = vld [vmem:[%s4 + $0x30] sm:$0xff]
    %v412 = vld [vmem:[%s4 + $0x38] sm:$0xff]
    %v413 = vld [vmem:[%s4 + $0x40] sm:$0xff]
    %v414 = vld [vmem:[%s4 + $0x48] sm:$0xff]
    %v415 = vld [vmem:[%s4 + $0x50] sm:$0xff]
    %v416 = vld [vmem:[%s4 + $0x58] sm:$0xff]
    %v417 = vld [vmem:[%s4 + $0x60] sm:$0xff]
    %v418 = vld [vmem:[%s4 + $0x68] sm:$0xff]
    %v419 = vld [vmem:[%s4 + $0x70] sm:$0xff]
    %v420 = vld [vmem:[%s4 + $0x78] sm:$0xff]
    %v421 = vadd.f32 %v405, %v389
    %v422 = vadd.f32 %v406, %v390
    %v423 = vadd.f32 %v407, %v391
    %v424 = vadd.f32 %v408, %v392
    %v425 = vadd.f32 %v409, %v393
    %v426 = vadd.f32 %v410, %v394
    %v427 = vadd.f32 %v411, %v395
    %v428 = vadd.f32 %v412, %v396
    %v429 = vadd.f32 %v413, %v397
    %v430 = vadd.f32 %v414, %v398
    %v431 = vadd.f32 %v415, %v399
    %v432 = vadd.f32 %v416, %v400
    %v433 = vadd.f32 %v417, %v401
    %v434 = vadd.f32 %v418, %v402
    %v435 = vadd.f32 %v419, %v403
    %v436 = vadd.f32 %v420, %v404
    %v437 = vmul.f32 %v421, 0.25
    %v438 = vmul.f32 %v422, 0.25
    %v439 = vmul.f32 %v423, 0.25
    %v440 = vmul.f32 %v424, 0.25
    %v441 = vmul.f32 %v425, 0.25
    %v442 = vmul.f32 %v426, 0.25
    %v443 = vmul.f32 %v427, 0.25
    %v444 = vmul.f32 %v428, 0.25
    %v445 = vmul.f32 %v429, 0.25
    %v446 = vmul.f32 %v430, 0.25
    %v447 = vmul.f32 %v431, 0.25
    %v448 = vmul.f32 %v432, 0.25
    %v449 = vmul.f32 %v433, 0.25
    %v450 = vmul.f32 %v434, 0.25
    %v451 = vmul.f32 %v435, 0.25
    %v452 = vmul.f32 %v436, 0.25
    %453 = vst [vmem:[%s5] sm:$0xff] %v437
    %454 = vst [vmem:[%s5 + $0x8] sm:$0xff] %v438
    %455 = vst [vmem:[%s5 + $0x10] sm:$0xff] %v439
    %456 = vst [vmem:[%s5 + $0x18] sm:$0xff] %v440
    %457 = vst [vmem:[%s5 + $0x20] sm:$0xff] %v441
    %458 = vst [vmem:[%s5 + $0x28] sm:$0xff] %v442
    %459 = vst [vmem:[%s5 + $0x30] sm:$0xff] %v443
    %460 = vst [vmem:[%s5 + $0x38] sm:$0xff] %v444
    %461 = vst [vmem:[%s5 + $0x40] sm:$0xff] %v445
    %462 = vst [vmem:[%s5 + $0x48] sm:$0xff] %v446
    %463 = vst [vmem:[%s5 + $0x50] sm:$0xff] %v447
    %464 = vst [vmem:[%s5 + $0x58] sm:$0xff] %v448
    %465 = vst [vmem:[%s5 + $0x60] sm:$0xff] %v449
    %466 = vst [vmem:[%s5 + $0x68] sm:$0xff] %v450
    %467 = vst [vmem:[%s5 + $0x70] sm:$0xff] %v451
    %468 = vst [vmem:[%s5 + $0x78] sm:$0xff] %v452
  $region25: #{eghg_forward.6} parent=0 // pred_fallthru
    _
  // Predicated region
  $region26: #{eghg_forward.6} parent=0 // pred_check
    _
  $region27: #{eghg_forward.6} parent=0 // pred_check_branch
    %470 = sbr.rel (0) target = $region29
  $region28: #{eghg_forward.6} parent=0 // pred_region
    _
  $region29: #{eghg_forward.6} parent=0 // pred_fallthru
    _
  // Predicated region
  $region30: #{eghg_forward.6} parent=0 // pred_check
    _
  $region31: #{eghg_forward.6} parent=0 // pred_check_branch
    %472 = sbr.rel (0) target = $region33
  $region32: #{eghg_forward.6} parent=0 // pred_region
    _
  $region33: #{eghg_forward.6} parent=0 // pred_fallthru
    _

</llo_original>
